<compile_context>
chip_gen: v6e
topology: v6e:2x2x1
jax: 0.10.0
libtpu: 0.0.40
codegen_flags: <defaults>
</compile_context>

<pallas_src>
import math

import jax
import jax.numpy as jnp
from jax.experimental import pallas as pl
from jax.experimental.pallas import tpu as pltpu

# ----------------------------- static config --------------------------------
B, S, D, H, DFF, NLAYERS = 2, 8, 32, 4, 64, 2
DK = D // H
EPS = 1e-6
SCALE = 1.0 / math.sqrt(DK)
NEG_INF = -1e9

# packed matmul-weight slab, 128-lane tile-aligned sub-weights:
#   lanes [  0: 96) = w_qkv, [128:160) = w_o, [256:320) = w_1
L_QKV, L_WO, L_W1 = 0, 128, 256
W_IN_LANES = 384

# packed vector table: one 128-lane row per bias / LN vector (+ mask-bias rows)
VEC_LANES = 128
(R_BQKV, R_BO, R_LN0G, R_LN0B, R_LN1G, R_LN1B, R_B1, R_B2) = range(8)
ROWS_PER_LAYER = 8
R_FING = NLAYERS * ROWS_PER_LAYER            # 16
R_FINB = R_FING + 1                          # 17
R_BIAS = R_FINB + 1                          # 18  (H*B additive-bias rows)
VEC_ROWS = R_BIAS + H * B                    # 26


# --------------------------- kernel-side math --------------------------------
def _ln_k(x, g, b):
    # Matches the PyTorch module: unbiased std (Bessel), divide by (std + eps).
    mean = jnp.mean(x, axis=-1, keepdims=True)
    diff = x - mean
    var = jnp.sum(diff * diff, axis=-1, keepdims=True) * (1.0 / (x.shape[-1] - 1))
    inv = pl.reciprocal(jnp.sqrt(var) + EPS, approx=True)
    return g * diff * inv + b


def encoder_kernel(x_ref, w_in_ref, w2_ref, vec_ref, out_ref):
    f32, bf16 = jnp.float32, jnp.bfloat16
    R = B * S                                             # 16 rows
    HB = H * B                                            # attention batch axis

    def vrow(i, n):                                       # static ref slice
        return vec_ref[i:i + 1, 0:n]                      # (1, n)

    x = x_ref[...]                                        # (R, D) f32

    # additive attention bias (precomputed on host), broadcast once over queries
    bias = vec_ref[R_BIAS:R_BIAS + HB, 0:S]               # (HB, S), idx = h*B + b
    bias_full = jnp.broadcast_to(bias[:, None, :], (HB, S, S))

    for l in range(NLAYERS):
        base = l * ROWS_PER_LAYER
        w_qkv = w_in_ref[l, :, L_QKV:L_QKV + 3 * D]       # (D, 3D) bf16
        w_o = w_in_ref[l, :, L_WO:L_WO + D]               # (D, D)  bf16
        w_1 = w_in_ref[l, :, L_W1:L_W1 + DFF]             # (D, DFF) bf16
        w_2 = w2_ref[l]                                   # (DFF, D) bf16

        # ---- sublayer 0: pre-norm multi-head self-attention + residual ----
        xn = _ln_k(x, vrow(base + R_LN0G, D), vrow(base + R_LN0B, D))
        qkv = jnp.dot(xn.astype(bf16), w_qkv,
                      preferred_element_type=f32) + vrow(base + R_BQKV, 3 * D)

        # (R, 3D) -> (3*H*B, S, DK); leading index = g*B + b (heads batched)
        heads = pltpu.einshape(
            "rgd->grd", qkv.reshape(R, 3 * H, DK)).reshape(3 * HB, S, DK)
        qh = heads[0:HB].astype(bf16)            # 1/sqrt(dk) folded into w_q/b_q
        kh = heads[HB:2 * HB].astype(bf16)
        vh = heads[2 * HB:3 * HB].astype(bf16)

        scores = jnp.einsum("bqd,bkd->bqk", qh, kh,
                            preferred_element_type=f32) + bias_full
        m = jnp.max(scores, axis=-1, keepdims=True)
        e = jnp.exp(scores - m)
        p_attn = e * pl.reciprocal(jnp.sum(e, axis=-1, keepdims=True),
                                   approx=True)

        ctx = jnp.einsum("bqk,bkd->bqd", p_attn.astype(bf16), vh,
                         preferred_element_type=f32)      # (HB, S, DK)
        ctx = pltpu.einshape("grd->rgd", ctx.reshape(H, R, DK)).reshape(R, D)
        attn = jnp.dot(ctx.astype(bf16), w_o,
                       preferred_element_type=f32) + vrow(base + R_BO, D)
        x = x + attn                                      # dropout = identity

        # ---- sublayer 1: pre-norm position-wise feed-forward + residual ----
        xn = _ln_k(x, vrow(base + R_LN1G, D), vrow(base + R_LN1B, D))
        hid = jnp.maximum(
            jnp.dot(xn.astype(bf16), w_1,
                    preferred_element_type=f32) + vrow(base + R_B1, DFF), 0.0)
        ff = jnp.dot(hid.astype(bf16), w_2,
                     preferred_element_type=f32) + vrow(base + R_B2, D)
        x = x + ff

    # final LayerNorm of the Encoder
    y = _ln_k(x, vrow(R_FING, D), vrow(R_FINB, D))
    out_ref[...] = y.astype(out_ref.dtype)


# ------------------------------- wrapper --------------------------------------
def pack_params(params):
    # 1/sqrt(dk) folded into the Q projection (weights + bias) on the host.
    w_qkv = jnp.concatenate(
        [params["wq"] * SCALE, params["wk"], params["wv"]], axis=-1)  # (L, D, 96)

    def lane_pad(w):
        return jnp.pad(w, ((0, 0), (0, 0), (0, 128 - w.shape[-1])))

    w_in = jnp.concatenate(
        [lane_pad(w_qkv), lane_pad(params["wo"]), lane_pad(params["w1"])],
        axis=-1).astype(jnp.bfloat16)                                 # (L, D, 384)
    w2 = params["w2"].astype(jnp.bfloat16)                            # (L, DFF, D)

    def row(v):
        return jnp.pad(v, (0, VEC_LANES - v.shape[0]))

    rows = []
    for l in range(NLAYERS):
        rows += [
            row(jnp.concatenate([params["bq"][l] * SCALE,
                                 params["bk"][l], params["bv"][l]])),
            row(params["bo"][l]),
            row(params["ln0_g"][l]), row(params["ln0_b"][l]),
            row(params["ln1_g"][l]), row(params["ln1_b"][l]),
            row(params["b1"][l]), row(params["b2"][l]),
        ]
    rows += [row(params["fin_g"]), row(params["fin_b"])]
    vecs = jnp.stack(rows, axis=0).astype(jnp.float32)                # (18, 128)
    return w_in, w2, vecs


def encoder_forward(x, mask, params):
    w_in, w2, vecs = pack_params(params)

    # additive attention bias, precomputed on host; rows ordered h*B + b to
    # match the kernel's batched-head axis
    bias = jnp.where(mask.reshape(B, S) == 0, NEG_INF, 0.0).astype(jnp.float32)
    bias_hb = jnp.tile(bias, (H, 1))                                  # (H*B, S)
    bias_rows = jnp.pad(bias_hb, ((0, 0), (0, VEC_LANES - S)))        # (H*B, 128)
    vec_all = jnp.concatenate([vecs, bias_rows], axis=0)              # (26, 128)

    out = pl.pallas_call(
        encoder_kernel,
        out_shape=jax.ShapeDtypeStruct((B * S, D), jnp.float32),
        grid=(1,),
        in_specs=[
            pl.BlockSpec((B * S, D), lambda i: (0, 0)),               # x
            pl.BlockSpec((NLAYERS, D, W_IN_LANES), lambda i: (0, 0, 0)),
            pl.BlockSpec((NLAYERS, DFF, D), lambda i: (0, 0, 0)),
            pl.BlockSpec((VEC_ROWS, VEC_LANES), lambda i: (0, 0)),
        ],
        out_specs=pl.BlockSpec((B * S, D), lambda i: (0, 0)),
    )(x.reshape(B * S, D), w_in, w2, vec_all)
    return out.reshape(B, S, D)


# ---------------------------- params & reference -----------------------------
def init_params(key):
    ks = jax.random.split(key, 12)

    def w(k, shape, fan_in, scale=1.0):
        return scale * jax.random.normal(k, shape, jnp.float32) / math.sqrt(fan_in)

    return {
        "wq": w(ks[0], (NLAYERS, D, D), D),
        "wk": w(ks[1], (NLAYERS, D, D), D),
        "wv": w(ks[2], (NLAYERS, D, D), D),
        "wo": w(ks[3], (NLAYERS, D, D), D),
        "bq": w(ks[4], (NLAYERS, D), D, 0.1),
        "bk": w(ks[5], (NLAYERS, D), D, 0.1),
        "bv": w(ks[6], (NLAYERS, D), D, 0.1),
        "bo": w(ks[7], (NLAYERS, D), D, 0.1),
        "ln0_g": jnp.ones((NLAYERS, D), jnp.float32),
        "ln0_b": jnp.zeros((NLAYERS, D), jnp.float32),
        "ln1_g": jnp.ones((NLAYERS, D), jnp.float32),
        "ln1_b": jnp.zeros((NLAYERS, D), jnp.float32),
        "w1": w(ks[8], (NLAYERS, D, DFF), D),
        "b1": w(ks[9], (NLAYERS, DFF), D, 0.1),
        "w2": w(ks[10], (NLAYERS, DFF, D), DFF),
        "b2": w(ks[11], (NLAYERS, D), DFF, 0.1),
        "fin_g": jnp.ones((D,), jnp.float32),
        "fin_b": jnp.zeros((D,), jnp.float32),
    }


def _ln_ref(x, g, b):
    mean = jnp.mean(x, axis=-1, keepdims=True)
    var = jnp.sum((x - mean) ** 2, axis=-1, keepdims=True) / (x.shape[-1] - 1)
    return g * (x - mean) / (jnp.sqrt(var) + EPS) + b


def encoder_ref(x, mask, params):
    """Pure-JAX f32 reference matching the PyTorch module exactly."""
    outs = []
    for b in range(B):
        xb = x[b]                           # (S, D)
        mb = mask[b]                        # (1, S)
        for l in range(NLAYERS):
            xn = _ln_ref(xb, params["ln0_g"][l], params["ln0_b"][l])
            q = xn @ params["wq"][l] + params["bq"][l]
            k = xn @ params["wk"][l] + params["bk"][l]
            v = xn @ params["wv"][l] + params["bv"][l]
            qh = q.reshape(S, H, DK).transpose(1, 0, 2)
            kh = k.reshape(S, H, DK).transpose(1, 0, 2)
            vh = v.reshape(S, H, DK).transpose(1, 0, 2)
            sc = jnp.einsum("hqd,hkd->hqk", qh, kh) * SCALE
            sc = jnp.where(mb[None, :, :] == 0, NEG_INF, sc)
            pa = jax.nn.softmax(sc, axis=-1)
            ctx = jnp.einsum("hqk,hkd->hqd", pa, vh)
            attn = ctx.transpose(1, 0, 2).reshape(S, D) @ params["wo"][l] \
                + params["bo"][l]
            xb = xb + attn
            xn = _ln_ref(xb, params["ln1_g"][l], params["ln1_b"][l])
            hid = jax.nn.relu(xn @ params["w1"][l] + params["b1"][l])
            xb = xb + hid @ params["w2"][l] + params["b2"][l]
        outs.append(_ln_ref(xb, params["fin_g"], params["fin_b"]))
    return jnp.stack(outs, axis=0)


# ----------------------------------- main ------------------------------------
if __name__ == "__main__":
    key = jax.random.PRNGKey(0)
    kx, kp = jax.random.split(key)
    x = jax.random.normal(kx, (B, S, D), jnp.float32)
    mask = jnp.ones((B, 1, S), jnp.float32)        # all positions attended
    params = init_params(kp)

    out = jax.block_until_ready(encoder_forward(x, mask, params))
    ref = jax.block_until_ready(encoder_ref(x, mask, params))

    assert out.shape == (B, S, D)
    assert bool(jnp.all(jnp.isfinite(out)))
    assert bool(jnp.allclose(out, ref, rtol=2e-2, atol=2e-2))

    print("KERNEL_OK")
</pallas_src>

<mosaic_0001>
module attributes {stable_mosaic.version = 11 : i64} {
  func.func @encoder_kernel(%arg0: i32, %arg1: memref<16x32xf32, #tpu.memory_space<vmem>>, %arg2: memref<2x32x384xbf16, #tpu.memory_space<vmem>>, %arg3: memref<2x64x32xbf16, #tpu.memory_space<vmem>>, %arg4: memref<26x128xf32, #tpu.memory_space<vmem>>, %arg5: memref<16x32xf32, #tpu.memory_space<vmem>>) attributes {dimension_semantics = [#tpu.dimension_semantics<arbitrary>], iteration_bounds = array<i64: 1>, scalar_prefetch = 0 : i64, scratch_operands = 0 : i64, tpu.core_type = #tpu.core_type<tc>, window_params = [{pipeline_mode = #tpu.pipeline_mode<synchronous>, transform_indices = @transform_0, window_bounds = array<i64: 16, 32>}, {pipeline_mode = #tpu.pipeline_mode<synchronous>, transform_indices = @transform_1, window_bounds = array<i64: 2, 32, 384>}, {pipeline_mode = #tpu.pipeline_mode<synchronous>, transform_indices = @transform_2, window_bounds = array<i64: 2, 64, 32>}, {pipeline_mode = #tpu.pipeline_mode<synchronous>, transform_indices = @transform_3, window_bounds = array<i64: 26, 128>}, {pipeline_mode = #tpu.pipeline_mode<synchronous>, transform_indices = @transform_4, window_bounds = array<i64: 16, 32>}]} {
    %c0 = arith.constant 0 : index
    %c0_0 = arith.constant 0 : index
    %0 = vector.load %arg1[%c0, %c0_0] : memref<16x32xf32, #tpu.memory_space<vmem>>, vector<16x32xf32>
    %c18 = arith.constant 18 : index
    %c0_1 = arith.constant 0 : index
    %1 = vector.load %arg4[%c18, %c0_1] : memref<26x128xf32, #tpu.memory_space<vmem>>, vector<8x8xf32>
    %2 = vector.shape_cast %1 : vector<8x8xf32> to vector<8x1x8xf32>
    %3 = vector.shape_cast %2 : vector<8x1x8xf32> to vector<8x1x8xf32>
    %4 = vector.broadcast %3 : vector<8x1x8xf32> to vector<8x8x8xf32>
    %c0_2 = arith.constant 0 : index
    %c0_3 = arith.constant 0 : index
    %c0_4 = arith.constant 0 : index
    %5 = vector.load %arg2[%c0_2, %c0_3, %c0_4] : memref<2x32x384xbf16, #tpu.memory_space<vmem>>, vector<1x32x96xbf16>
    %6 = vector.shape_cast %5 : vector<1x32x96xbf16> to vector<32x96xbf16>
    %c0_5 = arith.constant 0 : index
    %c0_6 = arith.constant 0 : index
    %c128 = arith.constant 128 : index
    %7 = vector.load %arg2[%c0_5, %c0_6, %c128] : memref<2x32x384xbf16, #tpu.memory_space<vmem>>, vector<1x32x32xbf16>
    %8 = vector.shape_cast %7 : vector<1x32x32xbf16> to vector<32x32xbf16>
    %c0_7 = arith.constant 0 : index
    %c0_8 = arith.constant 0 : index
    %c256 = arith.constant 256 : index
    %9 = vector.load %arg2[%c0_7, %c0_8, %c256] : memref<2x32x384xbf16, #tpu.memory_space<vmem>>, vector<1x32x64xbf16>
    %10 = vector.shape_cast %9 : vector<1x32x64xbf16> to vector<32x64xbf16>
    %c0_9 = arith.constant 0 : index
    %c0_10 = arith.constant 0 : index
    %c0_11 = arith.constant 0 : index
    %11 = vector.load %arg3[%c0_9, %c0_10, %c0_11] : memref<2x64x32xbf16, #tpu.memory_space<vmem>>, vector<1x64x32xbf16>
    %12 = vector.shape_cast %11 : vector<1x64x32xbf16> to vector<64x32xbf16>
    %c2 = arith.constant 2 : index
    %c0_12 = arith.constant 0 : index
    %13 = vector.load %arg4[%c2, %c0_12] : memref<26x128xf32, #tpu.memory_space<vmem>>, vector<1x32xf32>
    %c3 = arith.constant 3 : index
    %c0_13 = arith.constant 0 : index
    %14 = vector.load %arg4[%c3, %c0_13] : memref<26x128xf32, #tpu.memory_space<vmem>>, vector<1x32xf32>
    %cst = arith.constant dense<0.000000e+00> : vector<16xf32>
    %15 = vector.multi_reduction <add>, %0, %cst [1] : vector<16x32xf32> to vector<16xf32>
    %16 = vector.shape_cast %15 : vector<16xf32> to vector<16x1xf32>
    %cst_14 = arith.constant 3.200000e+01 : f32
    %17 = vector.broadcast %cst_14 : f32 to vector<16x1xf32>
    %18 = arith.divf %16, %17 : vector<16x1xf32>
    %19 = vector.broadcast %18 : vector<16x1xf32> to vector<16x32xf32>
    %20 = arith.subf %0, %19 : vector<16x32xf32>
    %21 = arith.mulf %20, %20 : vector<16x32xf32>
    %cst_15 = arith.constant dense<0.000000e+00> : vector<16xf32>
    %22 = vector.multi_reduction <add>, %21, %cst_15 [1] : vector<16x32xf32> to vector<16xf32>
    %23 = vector.shape_cast %22 : vector<16xf32> to vector<16x1xf32>
    %cst_16 = arith.constant 0.0322580636 : f32
    %24 = vector.broadcast %cst_16 : f32 to vector<16x1xf32>
    %25 = arith.mulf %23, %24 : vector<16x1xf32>
    %26 = math.sqrt %25 : vector<16x1xf32>
    %cst_17 = arith.constant 9.99999997E-7 : f32
    %27 = vector.broadcast %cst_17 : f32 to vector<16x1xf32>
    %28 = arith.addf %26, %27 : vector<16x1xf32>
    %29 = tpu.reciprocal %28 {approx = true} : vector<16x1xf32> -> vector<16x1xf32>
    %30 = vector.broadcast %13 : vector<1x32xf32> to vector<16x32xf32>
    %31 = arith.mulf %30, %20 : vector<16x32xf32>
    %32 = vector.broadcast %29 : vector<16x1xf32> to vector<16x32xf32>
    %33 = arith.mulf %31, %32 : vector<16x32xf32>
    %34 = vector.broadcast %14 : vector<1x32xf32> to vector<16x32xf32>
    %35 = arith.addf %33, %34 : vector<16x32xf32>
    %36 = arith.truncf %35 : vector<16x32xf32> to vector<16x32xbf16>
    %cst_18 = arith.constant dense<0.000000e+00> : vector<16x96xf32>
    %37 = tpu.matmul %36, %6, %cst_18 {dimension_numbers = #tpu.dot_dimension_numbers<[1], [0], [0], [1], [0, 0, 1, 1], [], []>} : vector<16x32xbf16>, vector<32x96xbf16>, vector<16x96xf32> -> vector<16x96xf32>
    %c0_19 = arith.constant 0 : index
    %c0_20 = arith.constant 0 : index
    %38 = vector.load %arg4[%c0_19, %c0_20] : memref<26x128xf32, #tpu.memory_space<vmem>>, vector<1x96xf32>
    %39 = vector.broadcast %38 : vector<1x96xf32> to vector<16x96xf32>
    %40 = arith.addf %37, %39 : vector<16x96xf32>
    %41 = vector.shape_cast %40 : vector<16x96xf32> to vector<16x12x8xf32>
    %42 = tpu.transpose %41, [1, 0, 2] : vector<16x12x8xf32> -> vector<12x16x8xf32>
    %43 = vector.shape_cast %42 : vector<12x16x8xf32> to vector<24x8x8xf32>
    %44 = vector.extract_strided_slice %43 {offsets = [0, 0, 0], sizes = [8, 8, 8], strides = [1, 1, 1]} : vector<24x8x8xf32> to vector<8x8x8xf32>
    %45 = arith.truncf %44 : vector<8x8x8xf32> to vector<8x8x8xbf16>
    %46 = vector.extract_strided_slice %43 {offsets = [8, 0, 0], sizes = [8, 8, 8], strides = [1, 1, 1]} : vector<24x8x8xf32> to vector<8x8x8xf32>
    %47 = arith.truncf %46 : vector<8x8x8xf32> to vector<8x8x8xbf16>
    %48 = vector.extract_strided_slice %43 {offsets = [16, 0, 0], sizes = [8, 8, 8], strides = [1, 1, 1]} : vector<24x8x8xf32> to vector<8x8x8xf32>
    %49 = arith.truncf %48 : vector<8x8x8xf32> to vector<8x8x8xbf16>
    "tpu.trace_start"() <{level = 10 : i32, message = "bqd,bkd->bqk"}> : () -> ()
    %cst_21 = arith.constant dense<0.000000e+00> : vector<8x8x8xf32>
    %50 = tpu.matmul %45, %47, %cst_21 {dimension_numbers = #tpu.dot_dimension_numbers<[2], [2], [1], [1], [0, 0, 0, 1, 1, 1], [0], [0]>} : vector<8x8x8xbf16>, vector<8x8x8xbf16>, vector<8x8x8xf32> -> vector<8x8x8xf32>
    "tpu.trace_stop"() : () -> ()
    %51 = arith.addf %50, %4 : vector<8x8x8xf32>
    %cst_22 = arith.constant dense<0xFF800000> : vector<8x8xf32>
    %52 = vector.multi_reduction <maximumf>, %51, %cst_22 [2] : vector<8x8x8xf32> to vector<8x8xf32>
    %53 = vector.shape_cast %52 : vector<8x8xf32> to vector<8x8x1xf32>
    %54 = vector.broadcast %53 : vector<8x8x1xf32> to vector<8x8x8xf32>
    %55 = arith.subf %51, %54 : vector<8x8x8xf32>
    %56 = math.exp %55 : vector<8x8x8xf32>
    %cst_23 = arith.constant dense<0.000000e+00> : vector<8x8xf32>
    %57 = vector.multi_reduction <add>, %56, %cst_23 [2] : vector<8x8x8xf32> to vector<8x8xf32>
    %58 = vector.shape_cast %57 : vector<8x8xf32> to vector<8x8x1xf32>
    %59 = tpu.reciprocal %58 {approx = true} : vector<8x8x1xf32> -> vector<8x8x1xf32>
    %60 = vector.broadcast %59 : vector<8x8x1xf32> to vector<8x8x8xf32>
    %61 = arith.mulf %56, %60 : vector<8x8x8xf32>
    %62 = arith.truncf %61 : vector<8x8x8xf32> to vector<8x8x8xbf16>
    "tpu.trace_start"() <{level = 10 : i32, message = "bqk,bkd->bqd"}> : () -> ()
    %cst_24 = arith.constant dense<0.000000e+00> : vector<8x8x8xf32>
    %63 = tpu.matmul %62, %49, %cst_24 {dimension_numbers = #tpu.dot_dimension_numbers<[2], [1], [1], [2], [0, 0, 0, 1, 1, 2], [0], [0]>} : vector<8x8x8xbf16>, vector<8x8x8xbf16>, vector<8x8x8xf32> -> vector<8x8x8xf32>
    "tpu.trace_stop"() : () -> ()
    %64 = vector.shape_cast %63 : vector<8x8x8xf32> to vector<4x16x8xf32>
    %65 = tpu.transpose %64, [1, 0, 2] : vector<4x16x8xf32> -> vector<16x4x8xf32>
    %66 = vector.shape_cast %65 : vector<16x4x8xf32> to vector<16x32xf32>
    %67 = arith.truncf %66 : vector<16x32xf32> to vector<16x32xbf16>
    %cst_25 = arith.constant dense<0.000000e+00> : vector<16x32xf32>
    %68 = tpu.matmul %67, %8, %cst_25 {dimension_numbers = #tpu.dot_dimension_numbers<[1], [0], [0], [1], [0, 0, 1, 1], [], []>} : vector<16x32xbf16>, vector<32x32xbf16>, vector<16x32xf32> -> vector<16x32xf32>
    %c1 = arith.constant 1 : index
    %c0_26 = arith.constant 0 : index
    %69 = vector.load %arg4[%c1, %c0_26] : memref<26x128xf32, #tpu.memory_space<vmem>>, vector<1x32xf32>
    %70 = vector.broadcast %69 : vector<1x32xf32> to vector<16x32xf32>
    %71 = arith.addf %68, %70 : vector<16x32xf32>
    %72 = arith.addf %0, %71 : vector<16x32xf32>
    %c4 = arith.constant 4 : index
    %c0_27 = arith.constant 0 : index
    %73 = vector.load %arg4[%c4, %c0_27] : memref<26x128xf32, #tpu.memory_space<vmem>>, vector<1x32xf32>
    %c5 = arith.constant 5 : index
    %c0_28 = arith.constant 0 : index
    %74 = vector.load %arg4[%c5, %c0_28] : memref<26x128xf32, #tpu.memory_space<vmem>>, vector<1x32xf32>
    %cst_29 = arith.constant dense<0.000000e+00> : vector<16xf32>
    %75 = vector.multi_reduction <add>, %72, %cst_29 [1] : vector<16x32xf32> to vector<16xf32>
    %76 = vector.shape_cast %75 : vector<16xf32> to vector<16x1xf32>
    %cst_30 = arith.constant 3.200000e+01 : f32
    %77 = vector.broadcast %cst_30 : f32 to vector<16x1xf32>
    %78 = arith.divf %76, %77 : vector<16x1xf32>
    %79 = vector.broadcast %78 : vector<16x1xf32> to vector<16x32xf32>
    %80 = arith.subf %72, %79 : vector<16x32xf32>
    %81 = arith.mulf %80, %80 : vector<16x32xf32>
    %cst_31 = arith.constant dense<0.000000e+00> : vector<16xf32>
    %82 = vector.multi_reduction <add>, %81, %cst_31 [1] : vector<16x32xf32> to vector<16xf32>
    %83 = vector.shape_cast %82 : vector<16xf32> to vector<16x1xf32>
    %cst_32 = arith.constant 0.0322580636 : f32
    %84 = vector.broadcast %cst_32 : f32 to vector<16x1xf32>
    %85 = arith.mulf %83, %84 : vector<16x1xf32>
    %86 = math.sqrt %85 : vector<16x1xf32>
    %cst_33 = arith.constant 9.99999997E-7 : f32
    %87 = vector.broadcast %cst_33 : f32 to vector<16x1xf32>
    %88 = arith.addf %86, %87 : vector<16x1xf32>
    %89 = tpu.reciprocal %88 {approx = true} : vector<16x1xf32> -> vector<16x1xf32>
    %90 = vector.broadcast %73 : vector<1x32xf32> to vector<16x32xf32>
    %91 = arith.mulf %90, %80 : vector<16x32xf32>
    %92 = vector.broadcast %89 : vector<16x1xf32> to vector<16x32xf32>
    %93 = arith.mulf %91, %92 : vector<16x32xf32>
    %94 = vector.broadcast %74 : vector<1x32xf32> to vector<16x32xf32>
    %95 = arith.addf %93, %94 : vector<16x32xf32>
    %96 = arith.truncf %95 : vector<16x32xf32> to vector<16x32xbf16>
    %cst_34 = arith.constant dense<0.000000e+00> : vector<16x64xf32>
    %97 = tpu.matmul %96, %10, %cst_34 {dimension_numbers = #tpu.dot_dimension_numbers<[1], [0], [0], [1], [0, 0, 1, 1], [], []>} : vector<16x32xbf16>, vector<32x64xbf16>, vector<16x64xf32> -> vector<16x64xf32>
    %c6 = arith.constant 6 : index
    %c0_35 = arith.constant 0 : index
    %98 = vector.load %arg4[%c6, %c0_35] : memref<26x128xf32, #tpu.memory_space<vmem>>, vector<1x64xf32>
    %99 = vector.broadcast %98 : vector<1x64xf32> to vector<16x64xf32>
    %100 = arith.addf %97, %99 : vector<16x64xf32>
    %cst_36 = arith.constant 0.000000e+00 : f32
    %101 = vector.broadcast %cst_36 : f32 to vector<16x64xf32>
    %102 = arith.maximumf %100, %101 : vector<16x64xf32>
    %103 = arith.truncf %102 : vector<16x64xf32> to vector<16x64xbf16>
    %cst_37 = arith.constant dense<0.000000e+00> : vector<16x32xf32>
    %104 = tpu.matmul %103, %12, %cst_37 {dimension_numbers = #tpu.dot_dimension_numbers<[1], [0], [0], [1], [0, 0, 1, 1], [], []>} : vector<16x64xbf16>, vector<64x32xbf16>, vector<16x32xf32> -> vector<16x32xf32>
    %c7 = arith.constant 7 : index
    %c0_38 = arith.constant 0 : index
    %105 = vector.load %arg4[%c7, %c0_38] : memref<26x128xf32, #tpu.memory_space<vmem>>, vector<1x32xf32>
    %106 = vector.broadcast %105 : vector<1x32xf32> to vector<16x32xf32>
    %107 = arith.addf %104, %106 : vector<16x32xf32>
    %108 = arith.addf %72, %107 : vector<16x32xf32>
    %c1_39 = arith.constant 1 : index
    %c0_40 = arith.constant 0 : index
    %c0_41 = arith.constant 0 : index
    %109 = vector.load %arg2[%c1_39, %c0_40, %c0_41] : memref<2x32x384xbf16, #tpu.memory_space<vmem>>, vector<1x32x96xbf16>
    %110 = vector.shape_cast %109 : vector<1x32x96xbf16> to vector<32x96xbf16>
    %c1_42 = arith.constant 1 : index
    %c0_43 = arith.constant 0 : index
    %c128_44 = arith.constant 128 : index
    %111 = vector.load %arg2[%c1_42, %c0_43, %c128_44] : memref<2x32x384xbf16, #tpu.memory_space<vmem>>, vector<1x32x32xbf16>
    %112 = vector.shape_cast %111 : vector<1x32x32xbf16> to vector<32x32xbf16>
    %c1_45 = arith.constant 1 : index
    %c0_46 = arith.constant 0 : index
    %c256_47 = arith.constant 256 : index
    %113 = vector.load %arg2[%c1_45, %c0_46, %c256_47] : memref<2x32x384xbf16, #tpu.memory_space<vmem>>, vector<1x32x64xbf16>
    %114 = vector.shape_cast %113 : vector<1x32x64xbf16> to vector<32x64xbf16>
    %c1_48 = arith.constant 1 : index
    %c0_49 = arith.constant 0 : index
    %c0_50 = arith.constant 0 : index
    %115 = vector.load %arg3[%c1_48, %c0_49, %c0_50] : memref<2x64x32xbf16, #tpu.memory_space<vmem>>, vector<1x64x32xbf16>
    %116 = vector.shape_cast %115 : vector<1x64x32xbf16> to vector<64x32xbf16>
    %c10 = arith.constant 10 : index
    %c0_51 = arith.constant 0 : index
    %117 = vector.load %arg4[%c10, %c0_51] : memref<26x128xf32, #tpu.memory_space<vmem>>, vector<1x32xf32>
    %c11 = arith.constant 11 : index
    %c0_52 = arith.constant 0 : index
    %118 = vector.load %arg4[%c11, %c0_52] : memref<26x128xf32, #tpu.memory_space<vmem>>, vector<1x32xf32>
    %cst_53 = arith.constant dense<0.000000e+00> : vector<16xf32>
    %119 = vector.multi_reduction <add>, %108, %cst_53 [1] : vector<16x32xf32> to vector<16xf32>
    %120 = vector.shape_cast %119 : vector<16xf32> to vector<16x1xf32>
    %cst_54 = arith.constant 3.200000e+01 : f32
    %121 = vector.broadcast %cst_54 : f32 to vector<16x1xf32>
    %122 = arith.divf %120, %121 : vector<16x1xf32>
    %123 = vector.broadcast %122 : vector<16x1xf32> to vector<16x32xf32>
    %124 = arith.subf %108, %123 : vector<16x32xf32>
    %125 = arith.mulf %124, %124 : vector<16x32xf32>
    %cst_55 = arith.constant dense<0.000000e+00> : vector<16xf32>
    %126 = vector.multi_reduction <add>, %125, %cst_55 [1] : vector<16x32xf32> to vector<16xf32>
    %127 = vector.shape_cast %126 : vector<16xf32> to vector<16x1xf32>
    %cst_56 = arith.constant 0.0322580636 : f32
    %128 = vector.broadcast %cst_56 : f32 to vector<16x1xf32>
    %129 = arith.mulf %127, %128 : vector<16x1xf32>
    %130 = math.sqrt %129 : vector<16x1xf32>
    %cst_57 = arith.constant 9.99999997E-7 : f32
    %131 = vector.broadcast %cst_57 : f32 to vector<16x1xf32>
    %132 = arith.addf %130, %131 : vector<16x1xf32>
    %133 = tpu.reciprocal %132 {approx = true} : vector<16x1xf32> -> vector<16x1xf32>
    %134 = vector.broadcast %117 : vector<1x32xf32> to vector<16x32xf32>
    %135 = arith.mulf %134, %124 : vector<16x32xf32>
    %136 = vector.broadcast %133 : vector<16x1xf32> to vector<16x32xf32>
    %137 = arith.mulf %135, %136 : vector<16x32xf32>
    %138 = vector.broadcast %118 : vector<1x32xf32> to vector<16x32xf32>
    %139 = arith.addf %137, %138 : vector<16x32xf32>
    %140 = arith.truncf %139 : vector<16x32xf32> to vector<16x32xbf16>
    %cst_58 = arith.constant dense<0.000000e+00> : vector<16x96xf32>
    %141 = tpu.matmul %140, %110, %cst_58 {dimension_numbers = #tpu.dot_dimension_numbers<[1], [0], [0], [1], [0, 0, 1, 1], [], []>} : vector<16x32xbf16>, vector<32x96xbf16>, vector<16x96xf32> -> vector<16x96xf32>
    %c8 = arith.constant 8 : index
    %c0_59 = arith.constant 0 : index
    %142 = vector.load %arg4[%c8, %c0_59] : memref<26x128xf32, #tpu.memory_space<vmem>>, vector<1x96xf32>
    %143 = vector.broadcast %142 : vector<1x96xf32> to vector<16x96xf32>
    %144 = arith.addf %141, %143 : vector<16x96xf32>
    %145 = vector.shape_cast %144 : vector<16x96xf32> to vector<16x12x8xf32>
    %146 = tpu.transpose %145, [1, 0, 2] : vector<16x12x8xf32> -> vector<12x16x8xf32>
    %147 = vector.shape_cast %146 : vector<12x16x8xf32> to vector<24x8x8xf32>
    %148 = vector.extract_strided_slice %147 {offsets = [0, 0, 0], sizes = [8, 8, 8], strides = [1, 1, 1]} : vector<24x8x8xf32> to vector<8x8x8xf32>
    %149 = arith.truncf %148 : vector<8x8x8xf32> to vector<8x8x8xbf16>
    %150 = vector.extract_strided_slice %147 {offsets = [8, 0, 0], sizes = [8, 8, 8], strides = [1, 1, 1]} : vector<24x8x8xf32> to vector<8x8x8xf32>
    %151 = arith.truncf %150 : vector<8x8x8xf32> to vector<8x8x8xbf16>
    %152 = vector.extract_strided_slice %147 {offsets = [16, 0, 0], sizes = [8, 8, 8], strides = [1, 1, 1]} : vector<24x8x8xf32> to vector<8x8x8xf32>
    %153 = arith.truncf %152 : vector<8x8x8xf32> to vector<8x8x8xbf16>
    "tpu.trace_start"() <{level = 10 : i32, message = "bqd,bkd->bqk"}> : () -> ()
    %cst_60 = arith.constant dense<0.000000e+00> : vector<8x8x8xf32>
    %154 = tpu.matmul %149, %151, %cst_60 {dimension_numbers = #tpu.dot_dimension_numbers<[2], [2], [1], [1], [0, 0, 0, 1, 1, 1], [0], [0]>} : vector<8x8x8xbf16>, vector<8x8x8xbf16>, vector<8x8x8xf32> -> vector<8x8x8xf32>
    "tpu.trace_stop"() : () -> ()
    %155 = arith.addf %154, %4 : vector<8x8x8xf32>
    %cst_61 = arith.constant dense<0xFF800000> : vector<8x8xf32>
    %156 = vector.multi_reduction <maximumf>, %155, %cst_61 [2] : vector<8x8x8xf32> to vector<8x8xf32>
    %157 = vector.shape_cast %156 : vector<8x8xf32> to vector<8x8x1xf32>
    %158 = vector.broadcast %157 : vector<8x8x1xf32> to vector<8x8x8xf32>
    %159 = arith.subf %155, %158 : vector<8x8x8xf32>
    %160 = math.exp %159 : vector<8x8x8xf32>
    %cst_62 = arith.constant dense<0.000000e+00> : vector<8x8xf32>
    %161 = vector.multi_reduction <add>, %160, %cst_62 [2] : vector<8x8x8xf32> to vector<8x8xf32>
    %162 = vector.shape_cast %161 : vector<8x8xf32> to vector<8x8x1xf32>
    %163 = tpu.reciprocal %162 {approx = true} : vector<8x8x1xf32> -> vector<8x8x1xf32>
    %164 = vector.broadcast %163 : vector<8x8x1xf32> to vector<8x8x8xf32>
    %165 = arith.mulf %160, %164 : vector<8x8x8xf32>
    %166 = arith.truncf %165 : vector<8x8x8xf32> to vector<8x8x8xbf16>
    "tpu.trace_start"() <{level = 10 : i32, message = "bqk,bkd->bqd"}> : () -> ()
    %cst_63 = arith.constant dense<0.000000e+00> : vector<8x8x8xf32>
    %167 = tpu.matmul %166, %153, %cst_63 {dimension_numbers = #tpu.dot_dimension_numbers<[2], [1], [1], [2], [0, 0, 0, 1, 1, 2], [0], [0]>} : vector<8x8x8xbf16>, vector<8x8x8xbf16>, vector<8x8x8xf32> -> vector<8x8x8xf32>
    "tpu.trace_stop"() : () -> ()
    %168 = vector.shape_cast %167 : vector<8x8x8xf32> to vector<4x16x8xf32>
    %169 = tpu.transpose %168, [1, 0, 2] : vector<4x16x8xf32> -> vector<16x4x8xf32>
    %170 = vector.shape_cast %169 : vector<16x4x8xf32> to vector<16x32xf32>
    %171 = arith.truncf %170 : vector<16x32xf32> to vector<16x32xbf16>
    %cst_64 = arith.constant dense<0.000000e+00> : vector<16x32xf32>
    %172 = tpu.matmul %171, %112, %cst_64 {dimension_numbers = #tpu.dot_dimension_numbers<[1], [0], [0], [1], [0, 0, 1, 1], [], []>} : vector<16x32xbf16>, vector<32x32xbf16>, vector<16x32xf32> -> vector<16x32xf32>
    %c9 = arith.constant 9 : index
    %c0_65 = arith.constant 0 : index
    %173 = vector.load %arg4[%c9, %c0_65] : memref<26x128xf32, #tpu.memory_space<vmem>>, vector<1x32xf32>
    %174 = vector.broadcast %173 : vector<1x32xf32> to vector<16x32xf32>
    %175 = arith.addf %172, %174 : vector<16x32xf32>
    %176 = arith.addf %108, %175 : vector<16x32xf32>
    %c12 = arith.constant 12 : index
    %c0_66 = arith.constant 0 : index
    %177 = vector.load %arg4[%c12, %c0_66] : memref<26x128xf32, #tpu.memory_space<vmem>>, vector<1x32xf32>
    %c13 = arith.constant 13 : index
    %c0_67 = arith.constant 0 : index
    %178 = vector.load %arg4[%c13, %c0_67] : memref<26x128xf32, #tpu.memory_space<vmem>>, vector<1x32xf32>
    %cst_68 = arith.constant dense<0.000000e+00> : vector<16xf32>
    %179 = vector.multi_reduction <add>, %176, %cst_68 [1] : vector<16x32xf32> to vector<16xf32>
    %180 = vector.shape_cast %179 : vector<16xf32> to vector<16x1xf32>
    %cst_69 = arith.constant 3.200000e+01 : f32
    %181 = vector.broadcast %cst_69 : f32 to vector<16x1xf32>
    %182 = arith.divf %180, %181 : vector<16x1xf32>
    %183 = vector.broadcast %182 : vector<16x1xf32> to vector<16x32xf32>
    %184 = arith.subf %176, %183 : vector<16x32xf32>
    %185 = arith.mulf %184, %184 : vector<16x32xf32>
    %cst_70 = arith.constant dense<0.000000e+00> : vector<16xf32>
    %186 = vector.multi_reduction <add>, %185, %cst_70 [1] : vector<16x32xf32> to vector<16xf32>
    %187 = vector.shape_cast %186 : vector<16xf32> to vector<16x1xf32>
    %cst_71 = arith.constant 0.0322580636 : f32
    %188 = vector.broadcast %cst_71 : f32 to vector<16x1xf32>
    %189 = arith.mulf %187, %188 : vector<16x1xf32>
    %190 = math.sqrt %189 : vector<16x1xf32>
    %cst_72 = arith.constant 9.99999997E-7 : f32
    %191 = vector.broadcast %cst_72 : f32 to vector<16x1xf32>
    %192 = arith.addf %190, %191 : vector<16x1xf32>
    %193 = tpu.reciprocal %192 {approx = true} : vector<16x1xf32> -> vector<16x1xf32>
    %194 = vector.broadcast %177 : vector<1x32xf32> to vector<16x32xf32>
    %195 = arith.mulf %194, %184 : vector<16x32xf32>
    %196 = vector.broadcast %193 : vector<16x1xf32> to vector<16x32xf32>
    %197 = arith.mulf %195, %196 : vector<16x32xf32>
    %198 = vector.broadcast %178 : vector<1x32xf32> to vector<16x32xf32>
    %199 = arith.addf %197, %198 : vector<16x32xf32>
    %200 = arith.truncf %199 : vector<16x32xf32> to vector<16x32xbf16>
    %cst_73 = arith.constant dense<0.000000e+00> : vector<16x64xf32>
    %201 = tpu.matmul %200, %114, %cst_73 {dimension_numbers = #tpu.dot_dimension_numbers<[1], [0], [0], [1], [0, 0, 1, 1], [], []>} : vector<16x32xbf16>, vector<32x64xbf16>, vector<16x64xf32> -> vector<16x64xf32>
    %c14 = arith.constant 14 : index
    %c0_74 = arith.constant 0 : index
    %202 = vector.load %arg4[%c14, %c0_74] : memref<26x128xf32, #tpu.memory_space<vmem>>, vector<1x64xf32>
    %203 = vector.broadcast %202 : vector<1x64xf32> to vector<16x64xf32>
    %204 = arith.addf %201, %203 : vector<16x64xf32>
    %cst_75 = arith.constant 0.000000e+00 : f32
    %205 = vector.broadcast %cst_75 : f32 to vector<16x64xf32>
    %206 = arith.maximumf %204, %205 : vector<16x64xf32>
    %207 = arith.truncf %206 : vector<16x64xf32> to vector<16x64xbf16>
    %cst_76 = arith.constant dense<0.000000e+00> : vector<16x32xf32>
    %208 = tpu.matmul %207, %116, %cst_76 {dimension_numbers = #tpu.dot_dimension_numbers<[1], [0], [0], [1], [0, 0, 1, 1], [], []>} : vector<16x64xbf16>, vector<64x32xbf16>, vector<16x32xf32> -> vector<16x32xf32>
    %c15 = arith.constant 15 : index
    %c0_77 = arith.constant 0 : index
    %209 = vector.load %arg4[%c15, %c0_77] : memref<26x128xf32, #tpu.memory_space<vmem>>, vector<1x32xf32>
    %210 = vector.broadcast %209 : vector<1x32xf32> to vector<16x32xf32>
    %211 = arith.addf %208, %210 : vector<16x32xf32>
    %212 = arith.addf %176, %211 : vector<16x32xf32>
    %c16 = arith.constant 16 : index
    %c0_78 = arith.constant 0 : index
    %213 = vector.load %arg4[%c16, %c0_78] : memref<26x128xf32, #tpu.memory_space<vmem>>, vector<1x32xf32>
    %c17 = arith.constant 17 : index
    %c0_79 = arith.constant 0 : index
    %214 = vector.load %arg4[%c17, %c0_79] : memref<26x128xf32, #tpu.memory_space<vmem>>, vector<1x32xf32>
    %cst_80 = arith.constant dense<0.000000e+00> : vector<16xf32>
    %215 = vector.multi_reduction <add>, %212, %cst_80 [1] : vector<16x32xf32> to vector<16xf32>
    %216 = vector.shape_cast %215 : vector<16xf32> to vector<16x1xf32>
    %cst_81 = arith.constant 3.200000e+01 : f32
    %217 = vector.broadcast %cst_81 : f32 to vector<16x1xf32>
    %218 = arith.divf %216, %217 : vector<16x1xf32>
    %219 = vector.broadcast %218 : vector<16x1xf32> to vector<16x32xf32>
    %220 = arith.subf %212, %219 : vector<16x32xf32>
    %221 = arith.mulf %220, %220 : vector<16x32xf32>
    %cst_82 = arith.constant dense<0.000000e+00> : vector<16xf32>
    %222 = vector.multi_reduction <add>, %221, %cst_82 [1] : vector<16x32xf32> to vector<16xf32>
    %223 = vector.shape_cast %222 : vector<16xf32> to vector<16x1xf32>
    %cst_83 = arith.constant 0.0322580636 : f32
    %224 = vector.broadcast %cst_83 : f32 to vector<16x1xf32>
    %225 = arith.mulf %223, %224 : vector<16x1xf32>
    %226 = math.sqrt %225 : vector<16x1xf32>
    %cst_84 = arith.constant 9.99999997E-7 : f32
    %227 = vector.broadcast %cst_84 : f32 to vector<16x1xf32>
    %228 = arith.addf %226, %227 : vector<16x1xf32>
    %229 = tpu.reciprocal %228 {approx = true} : vector<16x1xf32> -> vector<16x1xf32>
    %230 = vector.broadcast %213 : vector<1x32xf32> to vector<16x32xf32>
    %231 = arith.mulf %230, %220 : vector<16x32xf32>
    %232 = vector.broadcast %229 : vector<16x1xf32> to vector<16x32xf32>
    %233 = arith.mulf %231, %232 : vector<16x32xf32>
    %234 = vector.broadcast %214 : vector<1x32xf32> to vector<16x32xf32>
    %235 = arith.addf %233, %234 : vector<16x32xf32>
    %c0_85 = arith.constant 0 : index
    %c0_86 = arith.constant 0 : index
    %236 = vector.load %arg5[%c0_85, %c0_86] : memref<16x32xf32, #tpu.memory_space<vmem>>, vector<16x32xf32>
    tpu.vector_store %arg5[%c0_85, %c0_86], %235 {strides = array<i32>} : memref<16x32xf32, #tpu.memory_space<vmem>>, vector<16x32xf32>,
    return
  }
  func.func @transform_0(%arg0: i32) -> (i32, i32) {
    %c0_i32 = arith.constant 0 : i32
    %c0_i32_0 = arith.constant 0 : i32
    %c0_i32_1 = arith.constant 0 : i32
    return %c0_i32, %c0_i32_0 : i32, i32
  }
  func.func @transform_1(%arg0: i32) -> (i32, i32, i32) {
    %c0_i32 = arith.constant 0 : i32
    %c0_i32_0 = arith.constant 0 : i32
    %c0_i32_1 = arith.constant 0 : i32
    %c0_i32_2 = arith.constant 0 : i32
    return %c0_i32, %c0_i32_0, %c0_i32_1 : i32, i32, i32
  }
  func.func @transform_2(%arg0: i32) -> (i32, i32, i32) {
    %c0_i32 = arith.constant 0 : i32
    %c0_i32_0 = arith.constant 0 : i32
    %c0_i32_1 = arith.constant 0 : i32
    %c0_i32_2 = arith.constant 0 : i32
    return %c0_i32, %c0_i32_0, %c0_i32_1 : i32, i32, i32
  }
  func.func @transform_3(%arg0: i32) -> (i32, i32) {
    %c0_i32 = arith.constant 0 : i32
    %c0_i32_0 = arith.constant 0 : i32
    %c0_i32_1 = arith.constant 0 : i32
    return %c0_i32, %c0_i32_0 : i32, i32
  }
  func.func @transform_4(%arg0: i32) -> (i32, i32) {
    %c0_i32 = arith.constant 0 : i32
    %c0_i32_0 = arith.constant 0 : i32
    %c0_i32_1 = arith.constant 0 : i32
    return %c0_i32, %c0_i32_0 : i32, i32
  }
}

</mosaic_0001>

<llo_original>
// kernel: tpu_custom_call.1
$region0: #{tpu_custom_call.1}
  #allocation0 [shape = 'u32[]', space=smem, size = 0x4, offset = 0x4, fixed_abs, tag = 'smem constant byte address 0x4 - core index']
  #allocation1 [shape = 'u32[144,128]{1,0:T(1,128)}', space=vmem, size = 0x12000, scoped, tag = 'internal scratch']
  %s0 = inlined_call_operand.hbm [shape: f32[16,32], index: 0, kind: input, shape index: {}]
  %s1 = inlined_call_operand.vmem [shape: bf16[2,32,384], index: 1, kind: input, shape index: {}]
  %s2 = inlined_call_operand.vmem [shape: bf16[2,64,32], index: 2, kind: input, shape index: {}]
  %s3 = inlined_call_operand.hbm [shape: f32[26,128], index: 3, kind: input, shape index: {}]
  %s4 = inlined_call_operand.hbm [shape: f32[16,32], index: 4, kind: output, shape index: {}]
  %s5 = sld [smem:[#allocation0]]
  $region34: #{tpu_custom_call.1} parent=0
    _
  %s7 = ssub.s32 1, %s5
  %s8 = scalar_select 0, %s7, %s5
  $region1: #{tpu_custom_call.1} parent=0
    #allocation2 [shape = 'u8[8192]{0}', space=vmem, size = 0x2000, scoped, tag = 'input window, operand 0, single buffered']
    #allocation3 [shape = 's32[1]{0}', space=sflag, size = 0x4, scoped, tag = 'scoped memory for tpu_custom_call.1']
    #allocation4 [shape = 's32[1]{0}', space=sflag, size = 0x4, scoped, tag = 'scoped memory for tpu_custom_call.1']
    #allocation5 [shape = 'u8[16384]{0}', space=vmem, size = 0x4000, scoped, tag = 'input window, operand 3, single buffered']
    #allocation6 [shape = 's32[1]{0}', space=sflag, size = 0x4, scoped, tag = 'scoped memory for tpu_custom_call.1']
    #allocation7 [shape = 'u8[8192]{0}', space=vmem, size = 0x2000, scoped, tag = 'output window, operand 0, single buffered']
    %9 = vsyncpa [#allocation3], 0
    %10 = vsyncpa [#allocation6], 0
    %11 = vsyncpa [#allocation4], 0
    // Predicated region
    $region2: #{tpu_custom_call.1} parent=1 // pred_check
      _
    $region3: #{tpu_custom_call.1} parent=1 // pred_check_branch
      %13 = sbr.rel (0) target = $region5
    $region4: #{tpu_custom_call.1} parent=1 // pred_region
      %s15 = ssub.s32 256, 256
      %16 = vsyncadd [#allocation3], %s15
      %s17 = sshll.u32 [#allocation2], 4
      %s18 = int_to_ptr.vmem [resolvable:$true] %s17
      %23 = dma.hbm_to_vmem [thread:$0]  %s0, 256, %s18, [#allocation3], 128, 128, 8
    $region5: #{tpu_custom_call.1} parent=1 // pred_fallthru
      _
    // Predicated region
    $region6: #{tpu_custom_call.1} parent=1 // pred_check
      _
    $region7: #{tpu_custom_call.1} parent=1 // pred_check_branch
      %25 = sbr.rel (0) target = $region9
    $region8: #{tpu_custom_call.1} parent=1 // pred_region
      _
    $region9: #{tpu_custom_call.1} parent=1 // pred_fallthru
      _
    // Predicated region
    $region10: #{tpu_custom_call.1} parent=1 // pred_check
      _
    $region11: #{tpu_custom_call.1} parent=1 // pred_check_branch
      %27 = sbr.rel (0) target = $region13
    $region12: #{tpu_custom_call.1} parent=1 // pred_region
      _
    $region13: #{tpu_custom_call.1} parent=1 // pred_fallthru
      _
    // Predicated region
    $region14: #{tpu_custom_call.1} parent=1 // pred_check
      _
    $region15: #{tpu_custom_call.1} parent=1 // pred_check_branch
      %29 = sbr.rel (0) target = $region17
    $region16: #{tpu_custom_call.1} parent=1 // pred_region
      %s31 = ssub.s32 512, 512
      %32 = vsyncadd [#allocation6], %s31
      %s33 = sshll.u32 [#allocation5], 4
      %s34 = int_to_ptr.vmem [resolvable:$true] %s33
      %39 = dma.hbm_to_vmem [thread:$0]  %s3, 512, %s34, [#allocation6], 128, 128, 8
    $region17: #{tpu_custom_call.1} parent=1 // pred_fallthru
      _
    // Predicated region
    $region18: #{tpu_custom_call.1} parent=1 // pred_check
      _
    $region19: #{tpu_custom_call.1} parent=1 // pred_check_branch
      %41 = sbr.rel (0) target = $region21
    $region20: #{tpu_custom_call.1} parent=1 // pred_region
      %42 = dma.done [#allocation3], 256
    $region21: #{tpu_custom_call.1} parent=1 // pred_fallthru
      _
    // Predicated region
    $region22: #{tpu_custom_call.1} parent=1 // pred_check
      _
    $region23: #{tpu_custom_call.1} parent=1 // pred_check_branch
      %44 = sbr.rel (0) target = $region25
    $region24: #{tpu_custom_call.1} parent=1 // pred_region
      %45 = dma.done [#allocation6], 512
    $region25: #{tpu_custom_call.1} parent=1 // pred_fallthru
      _
    %v47 = vld [vmem:[#allocation2] sm:$0xff]
    %v48 = vld [vmem:[#allocation2 + $0x8] sm:$0xff]
    %v49 = vld [vmem:[#allocation5 + $0x12] sm:$0xff]
    %v51 = vcombine.high %v49, %v49
    %v53 = vunpack.c.l.s4 1966171168
    %v54 = vunpack.c.0.s8 %v53
    %v55 = vlaneseq
    %v56 = vshrl.u32 %v55, 7
    %v57 = vsub.s32 %v54, %v56
    %v58 = vrot.slane %v49, %v57
    %v60 = vunpack.c.l.s4 1966171168
    %v61 = vunpack.c.0.s8 %v60
    %v62 = vlaneseq
    %v63 = vshrl.u32 %v62, 7
    %v64 = vsub.s32 %v61, %v63
    %v65 = vrot.slane %v51, %v64
    %v66 = vcombine.high %v58, %v58
    %v67 = vcombine.high %v65, %v65
    %v69 = vunpack.c.l.s4 1966171168
    %v70 = vunpack.c.0.s8 %v69
    %v71 = vlaneseq
    %v72 = vshrl.u32 %v71, 7
    %v73 = vsub.s32 %v70, %v72
    %v74 = vrot.slane %v58, %v73
    %v76 = vunpack.c.l.s4 1966171168
    %v77 = vunpack.c.0.s8 %v76
    %v78 = vlaneseq
    %v79 = vshrl.u32 %v78, 7
    %v80 = vsub.s32 %v77, %v79
    %v81 = vrot.slane %v65, %v80
    %v83 = vunpack.c.l.s4 1966171168
    %v84 = vunpack.c.0.s8 %v83
    %v85 = vlaneseq
    %v86 = vshrl.u32 %v85, 7
    %v87 = vsub.s32 %v84, %v86
    %v88 = vrot.slane %v66, %v87
    %v90 = vunpack.c.l.s4 1966171168
    %v91 = vunpack.c.0.s8 %v90
    %v92 = vlaneseq
    %v93 = vshrl.u32 %v92, 7
    %v94 = vsub.s32 %v91, %v93
    %v95 = vrot.slane %v67, %v94
    %v96 = vcombine.high %v74, %v74
    %v97 = vcombine.high %v81, %v81
    %v98 = vcombine.high %v88, %v88
    %v99 = vcombine.high %v95, %v95
    %v100 = vlaneseq
    %v101 = vshrl.u32 %v100, 7
    %v102 = vsub.s32 0, %v101
    %v103 = vrot.slane %v74, %v102
    %v104 = vlaneseq
    %v105 = vshrl.u32 %v104, 7
    %v106 = vsub.s32 0, %v105
    %v107 = vrot.slane %v88, %v106
    %v108 = vlaneseq
    %v109 = vshrl.u32 %v108, 7
    %v110 = vsub.s32 0, %v109
    %v111 = vrot.slane %v96, %v110
    %v112 = vlaneseq
    %v113 = vshrl.u32 %v112, 7
    %v114 = vsub.s32 0, %v113
    %v115 = vrot.slane %v98, %v114
    %v116 = vlaneseq
    %v117 = vshrl.u32 %v116, 7
    %v118 = vsub.s32 0, %v117
    %v119 = vrot.slane %v81, %v118
    %v120 = vlaneseq
    %v121 = vshrl.u32 %v120, 7
    %v122 = vsub.s32 0, %v121
    %v123 = vrot.slane %v95, %v122
    %v124 = vlaneseq
    %v125 = vshrl.u32 %v124, 7
    %v126 = vsub.s32 0, %v125
    %v127 = vrot.slane %v97, %v126
    %v128 = vlaneseq
    %v129 = vshrl.u32 %v128, 7
    %v130 = vsub.s32 0, %v129
    %v131 = vrot.slane %v99, %v130
    %v140 = vld [vmem:[%s1] sm:$0xf]
    %v141 = vld [vmem:[%s1 + $0xc] sm:$0xf]
    %v142 = vld [vmem:[%s1 + $0x18] sm:$0xf]
    %v143 = vld [vmem:[%s1 + $0x24] sm:$0xf]
    %v144 = vld [vmem:[%s1 + $0x4] sm:$0xf]
    %v145 = vld [vmem:[%s1 + $0x10] sm:$0xf]
    %v146 = vld [vmem:[%s1 + $0x1c] sm:$0xf]
    %v147 = vld [vmem:[%s1 + $0x28] sm:$0xf]
    %v148 = vld [vmem:[%s1 + $0x8] sm:$0xf]
    %v149 = vld [vmem:[%s1 + $0x14] sm:$0xf]
    %v150 = vld [vmem:[%s1 + $0x20] sm:$0xf]
    %v151 = vld [vmem:[%s1 + $0x2c] sm:$0xf]
    %v152 = vld [vmem:[%s2] sm:$0xf]
    %v153 = vld [vmem:[%s2 + $0x4] sm:$0xf]
    %v154 = vld [vmem:[%s2 + $0x8] sm:$0xf]
    %v155 = vld [vmem:[%s2 + $0xc] sm:$0xf]
    %v156 = vld [vmem:[%s2 + $0x10] sm:$0xf]
    %v157 = vld [vmem:[%s2 + $0x14] sm:$0xf]
    %v158 = vld [vmem:[%s2 + $0x18] sm:$0xf]
    %v159 = vld [vmem:[%s2 + $0x1c] sm:$0xf]
    %v160 = vld [vmem:[#allocation5 + $0x2] sm:$0x1]
    %v161 = vld [vmem:[#allocation5 + $0x3] sm:$0x1]
    %vm162 = vcmask 261120
    %v163 = vsel %vm162, %v47, 0.0
    %164 = vadd.xlane.f32.xlu0 %v163
    %v165 = vpop.xlane.xlu0 %164
    %v166 = vsel %vm162, %v48, 0.0
    %167 = vadd.xlane.f32.xlu0 %v166
    %v168 = vpop.xlane.xlu0 %167
    %v169 = vrcp.pop 32.0
    %v170 = vmul.f32 %v165, %v169
    %v171 = vmul.f32 %v168, %v169
    %v172 = vsub.f32 %v47, %v170
    %v173 = vsub.f32 %v48, %v171
    %v174 = vmul.f32 %v172, %v172
    %v175 = vmul.f32 %v173, %v173
    %v176 = vsel %vm162, %v174, 0.0
    %177 = vadd.xlane.f32.xlu0 %v176
    %v178 = vpop.xlane.xlu0 %177
    %v179 = vsel %vm162, %v175, 0.0
    %180 = vadd.xlane.f32.xlu0 %v179
    %v181 = vpop.xlane.xlu0 %180
    %v182 = vmul.f32 %v178, 0.032258064
    %v183 = vmul.f32 %v181, 0.032258064
    %v184 = vrsqrt.pop %v182
    %v185 = vmul.f32 %v182, %v184
    %vm186 = vcmp.eq.f32.partialorder %v182, inf
    %v187 = vsel %vm186, %v182, %v185
    %vm188 = vcmp.eq.f32.partialorder %v182, 0.0
    %v189 = vand.u32 %v182, 2147483648
    %v190 = vsel %vm188, %v189, %v187
    %v191 = vrsqrt.pop %v183
    %v192 = vmul.f32 %v183, %v191
    %vm193 = vcmp.eq.f32.partialorder %v183, inf
    %v194 = vsel %vm193, %v183, %v192
    %vm195 = vcmp.eq.f32.partialorder %v183, 0.0
    %v196 = vand.u32 %v183, 2147483648
    %v197 = vsel %vm195, %v196, %v194
    %v198 = vadd.f32 %v190, 1e-06
    %v199 = vadd.f32 %v197, 1e-06
    %v200 = vrcp.pop %v198
    %v201 = vrcp.pop %v199
    %v202 = vlaneseq
    %v203 = vshrl.u32 %v202, 7
    %v204 = vsub.s32 0, %v203
    %v205 = vrot.slane %v160, %v204
    %v206 = vmul.f32 %v205, %v172
    %v207 = vmul.f32 %v205, %v173
    %v208 = vmul.f32 %v206, %v200
    %v209 = vmul.f32 %v207, %v201
    %v210 = vlaneseq
    %v211 = vshrl.u32 %v210, 7
    %v212 = vsub.s32 0, %v211
    %v213 = vrot.slane %v161, %v212
    %v214 = vadd.f32 %v208, %v213
    %v215 = vadd.f32 %v209, %v213
    %v216 = vpack.c.bf16 %v215, %v214
    %v217 = vld [vmem:[#allocation5] sm:$0x1]
    %v218 = vlaneseq
    %v219 = vshrl.u32 %v218, 7
    %v220 = vsub.s32 0, %v219
    %v221 = vrot.slane %v217, %v220
    %v226 = vunpack.c.l.b16 %v140
    %v227 = vunpack.c.l.b16 %v141
    %v228 = vunpack.c.l.b16 %v142
    %v229 = vunpack.c.l.b16 %v143
    %v230 = vpack.c.b16 %v227, %v226
    %v231 = vpack.c.b16 %v229, %v228
    %v235 = vsel %vm162, %v216, 0
    %237 = vmatprep.subr.bf16.mxu0 0
    %238 = vmatpush1.bf16.msra.mxu0 0
    %239 = vmatprep.subr.bf16.mxu0 0
    %240 = vmatpush1.bf16.msra.mxu0 0
    %241 = vmatprep.subr.bf16.mxu0 0
    %242 = vmatpush1.bf16.msra.mxu0 0
    %243 = vmatprep.subr.bf16.mxu0 0
    %244 = vmatpush1.bf16.msra.mxu0 0
    %245 = vmatprep.subr.bf16.mxu0 0
    %246 = vmatpush1.bf16.msra.mxu0 0
    %247 = vmatprep.subr.bf16.mxu0 0
    %248 = vmatpush1.bf16.msra.mxu0 0
    %249 = vmatprep.subr.bf16.mxu0 0
    %250 = vmatpush1.bf16.msra.mxu0 %v231
    %251 = vmatprep.subr.bf16.mxu0 0
    %252 = vmatpush1.bf16.msra.mxu0 %v230
    %253 = vmatprep.subr.bf16.mxu0 0
    %254 = vmatpush2.bf16.msra.mxu0 0
    %255 = vmatprep.subr.bf16.mxu0 0
    %256 = vmatpush2.bf16.msra.mxu0 0
    %257 = vmatprep.subr.bf16.mxu0 0
    %258 = vmatpush2.bf16.msra.mxu0 0
    %259 = vmatprep.subr.bf16.mxu0 0
    %260 = vmatpush2.bf16.msra.mxu0 0
    %261 = vmatprep.subr.bf16.mxu0 0
    %262 = vmatpush2.bf16.msra.mxu0 0
    %263 = vmatprep.subr.bf16.mxu0 0
    %264 = vmatpush2.bf16.msra.mxu0 0
    %265 = vmatprep.subr.bf16.mxu0 0
    %266 = vmatpush2.bf16.msra.mxu0 0
    %267 = vmatprep.subr.bf16.mxu0 0
    %268 = vmatpush2.bf16.msra.mxu0 0
    %269 = vmatprep.mubr.bf16.mxu0 0
    %270 = vmatmul.mubr.bf16.gmra.mxu0 %v235
    %v271 = vpop.f32.mrf.mxu0
    %v272 = vadd.f32 %v221, %v271
    %v273 = vpop.f32.mrf.mxu0
    %v274 = vpop.f32.mrf.mxu0
    %v275 = vadd.f32 %v221, %v274
    %v276 = vpop.f32.mrf.mxu0
    %277 = vdwg.mxu0
    %280 = vrot.lane.b32.xlu0 %v272, 120
    %v281 = vpop.permute.xlu0 %280
    %282 = vrot.lane.b32.xlu0 %v275, 120
    %v283 = vpop.permute.xlu0 %282
    %286 = vrot.lane.b32.xlu0 %v272, 112
    %v287 = vpop.permute.xlu0 %286
    %288 = vrot.lane.b32.xlu0 %v275, 112
    %v289 = vpop.permute.xlu0 %288
    %292 = vrot.lane.b32.xlu0 %v272, 104
    %v293 = vpop.permute.xlu0 %292
    %294 = vrot.lane.b32.xlu0 %v275, 104
    %v295 = vpop.permute.xlu0 %294
    %298 = vrot.lane.b32.xlu0 %v272, 96
    %v299 = vpop.permute.xlu0 %298
    %300 = vrot.lane.b32.xlu0 %v275, 96
    %v301 = vpop.permute.xlu0 %300
    %304 = vrot.lane.b32.xlu0 %v272, 88
    %v305 = vpop.permute.xlu0 %304
    %306 = vrot.lane.b32.xlu0 %v275, 88
    %v307 = vpop.permute.xlu0 %306
    %310 = vrot.lane.b32.xlu0 %v272, 80
    %v311 = vpop.permute.xlu0 %310
    %312 = vrot.lane.b32.xlu0 %v275, 80
    %v313 = vpop.permute.xlu0 %312
    %316 = vrot.lane.b32.xlu0 %v272, 72
    %v317 = vpop.permute.xlu0 %316
    %318 = vrot.lane.b32.xlu0 %v275, 72
    %v319 = vpop.permute.xlu0 %318
    %322 = vrot.lane.b32.xlu0 %v272, 64
    %v323 = vpop.permute.xlu0 %322
    %324 = vrot.lane.b32.xlu0 %v275, 64
    %v325 = vpop.permute.xlu0 %324
    %328 = vrot.lane.b32.xlu0 %v272, 56
    %v329 = vpop.permute.xlu0 %328
    %330 = vrot.lane.b32.xlu0 %v275, 56
    %v331 = vpop.permute.xlu0 %330
    %334 = vrot.lane.b32.xlu0 %v272, 48
    %v335 = vpop.permute.xlu0 %334
    %336 = vrot.lane.b32.xlu0 %v275, 48
    %v337 = vpop.permute.xlu0 %336
    %340 = vrot.lane.b32.xlu0 %v272, 40
    %v341 = vpop.permute.xlu0 %340
    %342 = vrot.lane.b32.xlu0 %v275, 40
    %v343 = vpop.permute.xlu0 %342
    %v346 = vcombine.low %v272, %v287
    %v347 = vcombine.high %v272, %v287
    %v349 = vunpack.c.l.s4 1983009808
    %v350 = vunpack.c.0.s8 %v349
    %v351 = vlaneseq
    %v352 = vshrl.u32 %v351, 7
    %v353 = vsub.s32 %v350, %v352
    %v354 = vrot.slane %v346, %v353
    %v356 = vunpack.c.l.s4 1983009808
    %v357 = vunpack.c.0.s8 %v356
    %v358 = vlaneseq
    %v359 = vshrl.u32 %v358, 7
    %v360 = vsub.s32 %v357, %v359
    %v361 = vrot.slane %v347, %v360
    %v362 = vcombine.low %v281, %v293
    %v363 = vcombine.high %v281, %v293
    %v365 = vunpack.c.l.s4 1983009808
    %v366 = vunpack.c.0.s8 %v365
    %v367 = vlaneseq
    %v368 = vshrl.u32 %v367, 7
    %v369 = vsub.s32 %v366, %v368
    %v370 = vrot.slane %v362, %v369
    %v372 = vunpack.c.l.s4 1983009808
    %v373 = vunpack.c.0.s8 %v372
    %v374 = vlaneseq
    %v375 = vshrl.u32 %v374, 7
    %v376 = vsub.s32 %v373, %v375
    %v377 = vrot.slane %v363, %v376
    %v378 = vcombine.low %v299, %v311
    %v379 = vcombine.high %v299, %v311
    %v381 = vunpack.c.l.s4 1983009808
    %v382 = vunpack.c.0.s8 %v381
    %v383 = vlaneseq
    %v384 = vshrl.u32 %v383, 7
    %v385 = vsub.s32 %v382, %v384
    %v386 = vrot.slane %v378, %v385
    %v388 = vunpack.c.l.s4 1983009808
    %v389 = vunpack.c.0.s8 %v388
    %v390 = vlaneseq
    %v391 = vshrl.u32 %v390, 7
    %v392 = vsub.s32 %v389, %v391
    %v393 = vrot.slane %v379, %v392
    %v394 = vcombine.low %v305, %v317
    %v395 = vcombine.high %v305, %v317
    %v397 = vunpack.c.l.s4 1983009808
    %v398 = vunpack.c.0.s8 %v397
    %v399 = vlaneseq
    %v400 = vshrl.u32 %v399, 7
    %v401 = vsub.s32 %v398, %v400
    %v402 = vrot.slane %v394, %v401
    %v404 = vunpack.c.l.s4 1983009808
    %v405 = vunpack.c.0.s8 %v404
    %v406 = vlaneseq
    %v407 = vshrl.u32 %v406, 7
    %v408 = vsub.s32 %v405, %v407
    %v409 = vrot.slane %v395, %v408
    %v410 = vcombine.low %v354, %v370
    %v411 = vcombine.high %v354, %v370
    %v413 = vunpack.c.l.s4 1934713408
    %v414 = vunpack.c.0.s8 %v413
    %v415 = vlaneseq
    %v416 = vshrl.u32 %v415, 7
    %v417 = vsub.s32 %v414, %v416
    %v418 = vrot.slane %v410, %v417
    %v420 = vunpack.c.l.s4 1934713408
    %v421 = vunpack.c.0.s8 %v420
    %v422 = vlaneseq
    %v423 = vshrl.u32 %v422, 7
    %v424 = vsub.s32 %v421, %v423
    %v425 = vrot.slane %v411, %v424
    %v426 = vcombine.low %v361, %v377
    %v427 = vcombine.high %v361, %v377
    %v429 = vunpack.c.l.s4 1934713408
    %v430 = vunpack.c.0.s8 %v429
    %v431 = vlaneseq
    %v432 = vshrl.u32 %v431, 7
    %v433 = vsub.s32 %v430, %v432
    %v434 = vrot.slane %v426, %v433
    %v436 = vunpack.c.l.s4 1934713408
    %v437 = vunpack.c.0.s8 %v436
    %v438 = vlaneseq
    %v439 = vshrl.u32 %v438, 7
    %v440 = vsub.s32 %v437, %v439
    %v441 = vrot.slane %v427, %v440
    %v442 = vcombine.low %v386, %v402
    %v443 = vcombine.high %v386, %v402
    %v445 = vunpack.c.l.s4 1934713408
    %v446 = vunpack.c.0.s8 %v445
    %v447 = vlaneseq
    %v448 = vshrl.u32 %v447, 7
    %v449 = vsub.s32 %v446, %v448
    %v450 = vrot.slane %v442, %v449
    %v452 = vunpack.c.l.s4 1934713408
    %v453 = vunpack.c.0.s8 %v452
    %v454 = vlaneseq
    %v455 = vshrl.u32 %v454, 7
    %v456 = vsub.s32 %v453, %v455
    %v457 = vrot.slane %v443, %v456
    %v458 = vcombine.low %v393, %v409
    %v459 = vcombine.high %v393, %v409
    %v461 = vunpack.c.l.s4 1934713408
    %v462 = vunpack.c.0.s8 %v461
    %v463 = vlaneseq
    %v464 = vshrl.u32 %v463, 7
    %v465 = vsub.s32 %v462, %v464
    %v466 = vrot.slane %v458, %v465
    %v468 = vunpack.c.l.s4 1934713408
    %v469 = vunpack.c.0.s8 %v468
    %v470 = vlaneseq
    %v471 = vshrl.u32 %v470, 7
    %v472 = vsub.s32 %v469, %v471
    %v473 = vrot.slane %v459, %v472
    %v474 = vcombine.low %v418, %v450
    %v475 = vcombine.high %v418, %v450
    %v476 = vcombine.low %v425, %v457
    %v477 = vcombine.high %v425, %v457
    %v478 = vcombine.low %v434, %v466
    %v479 = vcombine.high %v434, %v466
    %v480 = vcombine.low %v441, %v473
    %v481 = vcombine.high %v441, %v473
    %v482 = vcombine.low %v323, %v335
    %v483 = vcombine.high %v323, %v335
    %v485 = vunpack.c.l.s4 1983009808
    %v486 = vunpack.c.0.s8 %v485
    %v487 = vlaneseq
    %v488 = vshrl.u32 %v487, 7
    %v489 = vsub.s32 %v486, %v488
    %v490 = vrot.slane %v482, %v489
    %v492 = vunpack.c.l.s4 1983009808
    %v493 = vunpack.c.0.s8 %v492
    %v494 = vlaneseq
    %v495 = vshrl.u32 %v494, 7
    %v496 = vsub.s32 %v493, %v495
    %v497 = vrot.slane %v483, %v496
    %v498 = vcombine.low %v329, %v341
    %v499 = vcombine.high %v329, %v341
    %v501 = vunpack.c.l.s4 1983009808
    %v502 = vunpack.c.0.s8 %v501
    %v503 = vlaneseq
    %v504 = vshrl.u32 %v503, 7
    %v505 = vsub.s32 %v502, %v504
    %v506 = vrot.slane %v498, %v505
    %v508 = vunpack.c.l.s4 1983009808
    %v509 = vunpack.c.0.s8 %v508
    %v510 = vlaneseq
    %v511 = vshrl.u32 %v510, 7
    %v512 = vsub.s32 %v509, %v511
    %v513 = vrot.slane %v499, %v512
    %v514 = vcombine.low %v490, %v506
    %v515 = vcombine.high %v490, %v506
    %v517 = vunpack.c.l.s4 1934713408
    %v518 = vunpack.c.0.s8 %v517
    %v519 = vlaneseq
    %v520 = vshrl.u32 %v519, 7
    %v521 = vsub.s32 %v518, %v520
    %v522 = vrot.slane %v514, %v521
    %v524 = vunpack.c.l.s4 1934713408
    %v525 = vunpack.c.0.s8 %v524
    %v526 = vlaneseq
    %v527 = vshrl.u32 %v526, 7
    %v528 = vsub.s32 %v525, %v527
    %v529 = vrot.slane %v515, %v528
    %v530 = vcombine.low %v497, %v513
    %v531 = vcombine.high %v497, %v513
    %v533 = vunpack.c.l.s4 1934713408
    %v534 = vunpack.c.0.s8 %v533
    %v535 = vlaneseq
    %v536 = vshrl.u32 %v535, 7
    %v537 = vsub.s32 %v534, %v536
    %v538 = vrot.slane %v530, %v537
    %v540 = vunpack.c.l.s4 1934713408
    %v541 = vunpack.c.0.s8 %v540
    %v542 = vlaneseq
    %v543 = vshrl.u32 %v542, 7
    %v544 = vsub.s32 %v541, %v543
    %v545 = vrot.slane %v531, %v544
    %v546 = vcombine.high %v522, 0.0
    %v547 = vcombine.high %v529, 0.0
    %v548 = vcombine.high %v538, 0.0
    %v549 = vcombine.high %v545, 0.0
    %v550 = vcombine.low %v275, %v289
    %v551 = vcombine.high %v275, %v289
    %v553 = vunpack.c.l.s4 1983009808
    %v554 = vunpack.c.0.s8 %v553
    %v555 = vlaneseq
    %v556 = vshrl.u32 %v555, 7
    %v557 = vsub.s32 %v554, %v556
    %v558 = vrot.slane %v550, %v557
    %v560 = vunpack.c.l.s4 1983009808
    %v561 = vunpack.c.0.s8 %v560
    %v562 = vlaneseq
    %v563 = vshrl.u32 %v562, 7
    %v564 = vsub.s32 %v561, %v563
    %v565 = vrot.slane %v551, %v564
    %v566 = vcombine.low %v283, %v295
    %v567 = vcombine.high %v283, %v295
    %v569 = vunpack.c.l.s4 1983009808
    %v570 = vunpack.c.0.s8 %v569
    %v571 = vlaneseq
    %v572 = vshrl.u32 %v571, 7
    %v573 = vsub.s32 %v570, %v572
    %v574 = vrot.slane %v566, %v573
    %v576 = vunpack.c.l.s4 1983009808
    %v577 = vunpack.c.0.s8 %v576
    %v578 = vlaneseq
    %v579 = vshrl.u32 %v578, 7
    %v580 = vsub.s32 %v577, %v579
    %v581 = vrot.slane %v567, %v580
    %v582 = vcombine.low %v301, %v313
    %v583 = vcombine.high %v301, %v313
    %v585 = vunpack.c.l.s4 1983009808
    %v586 = vunpack.c.0.s8 %v585
    %v587 = vlaneseq
    %v588 = vshrl.u32 %v587, 7
    %v589 = vsub.s32 %v586, %v588
    %v590 = vrot.slane %v582, %v589
    %v592 = vunpack.c.l.s4 1983009808
    %v593 = vunpack.c.0.s8 %v592
    %v594 = vlaneseq
    %v595 = vshrl.u32 %v594, 7
    %v596 = vsub.s32 %v593, %v595
    %v597 = vrot.slane %v583, %v596
    %v598 = vcombine.low %v307, %v319
    %v599 = vcombine.high %v307, %v319
    %v601 = vunpack.c.l.s4 1983009808
    %v602 = vunpack.c.0.s8 %v601
    %v603 = vlaneseq
    %v604 = vshrl.u32 %v603, 7
    %v605 = vsub.s32 %v602, %v604
    %v606 = vrot.slane %v598, %v605
    %v608 = vunpack.c.l.s4 1983009808
    %v609 = vunpack.c.0.s8 %v608
    %v610 = vlaneseq
    %v611 = vshrl.u32 %v610, 7
    %v612 = vsub.s32 %v609, %v611
    %v613 = vrot.slane %v599, %v612
    %v614 = vcombine.low %v558, %v574
    %v615 = vcombine.high %v558, %v574
    %v617 = vunpack.c.l.s4 1934713408
    %v618 = vunpack.c.0.s8 %v617
    %v619 = vlaneseq
    %v620 = vshrl.u32 %v619, 7
    %v621 = vsub.s32 %v618, %v620
    %v622 = vrot.slane %v614, %v621
    %v624 = vunpack.c.l.s4 1934713408
    %v625 = vunpack.c.0.s8 %v624
    %v626 = vlaneseq
    %v627 = vshrl.u32 %v626, 7
    %v628 = vsub.s32 %v625, %v627
    %v629 = vrot.slane %v615, %v628
    %v630 = vcombine.low %v565, %v581
    %v631 = vcombine.high %v565, %v581
    %v633 = vunpack.c.l.s4 1934713408
    %v634 = vunpack.c.0.s8 %v633
    %v635 = vlaneseq
    %v636 = vshrl.u32 %v635, 7
    %v637 = vsub.s32 %v634, %v636
    %v638 = vrot.slane %v630, %v637
    %v640 = vunpack.c.l.s4 1934713408
    %v641 = vunpack.c.0.s8 %v640
    %v642 = vlaneseq
    %v643 = vshrl.u32 %v642, 7
    %v644 = vsub.s32 %v641, %v643
    %v645 = vrot.slane %v631, %v644
    %v646 = vcombine.low %v590, %v606
    %v647 = vcombine.high %v590, %v606
    %v649 = vunpack.c.l.s4 1934713408
    %v650 = vunpack.c.0.s8 %v649
    %v651 = vlaneseq
    %v652 = vshrl.u32 %v651, 7
    %v653 = vsub.s32 %v650, %v652
    %v654 = vrot.slane %v646, %v653
    %v656 = vunpack.c.l.s4 1934713408
    %v657 = vunpack.c.0.s8 %v656
    %v658 = vlaneseq
    %v659 = vshrl.u32 %v658, 7
    %v660 = vsub.s32 %v657, %v659
    %v661 = vrot.slane %v647, %v660
    %v662 = vcombine.low %v597, %v613
    %v663 = vcombine.high %v597, %v613
    %v665 = vunpack.c.l.s4 1934713408
    %v666 = vunpack.c.0.s8 %v665
    %v667 = vlaneseq
    %v668 = vshrl.u32 %v667, 7
    %v669 = vsub.s32 %v666, %v668
    %v670 = vrot.slane %v662, %v669
    %v672 = vunpack.c.l.s4 1934713408
    %v673 = vunpack.c.0.s8 %v672
    %v674 = vlaneseq
    %v675 = vshrl.u32 %v674, 7
    %v676 = vsub.s32 %v673, %v675
    %v677 = vrot.slane %v663, %v676
    %v678 = vcombine.low %v622, %v654
    %v679 = vcombine.high %v622, %v654
    %v680 = vcombine.low %v629, %v661
    %v681 = vcombine.high %v629, %v661
    %v682 = vcombine.low %v638, %v670
    %v683 = vcombine.high %v638, %v670
    %v684 = vcombine.low %v645, %v677
    %v685 = vcombine.high %v645, %v677
    %v686 = vcombine.low %v325, %v337
    %v687 = vcombine.high %v325, %v337
    %v689 = vunpack.c.l.s4 1983009808
    %v690 = vunpack.c.0.s8 %v689
    %v691 = vlaneseq
    %v692 = vshrl.u32 %v691, 7
    %v693 = vsub.s32 %v690, %v692
    %v694 = vrot.slane %v686, %v693
    %v696 = vunpack.c.l.s4 1983009808
    %v697 = vunpack.c.0.s8 %v696
    %v698 = vlaneseq
    %v699 = vshrl.u32 %v698, 7
    %v700 = vsub.s32 %v697, %v699
    %v701 = vrot.slane %v687, %v700
    %v702 = vcombine.low %v331, %v343
    %v703 = vcombine.high %v331, %v343
    %v705 = vunpack.c.l.s4 1983009808
    %v706 = vunpack.c.0.s8 %v705
    %v707 = vlaneseq
    %v708 = vshrl.u32 %v707, 7
    %v709 = vsub.s32 %v706, %v708
    %v710 = vrot.slane %v702, %v709
    %v712 = vunpack.c.l.s4 1983009808
    %v713 = vunpack.c.0.s8 %v712
    %v714 = vlaneseq
    %v715 = vshrl.u32 %v714, 7
    %v716 = vsub.s32 %v713, %v715
    %v717 = vrot.slane %v703, %v716
    %v718 = vcombine.low %v694, %v710
    %v719 = vcombine.high %v694, %v710
    %v721 = vunpack.c.l.s4 1934713408
    %v722 = vunpack.c.0.s8 %v721
    %v723 = vlaneseq
    %v724 = vshrl.u32 %v723, 7
    %v725 = vsub.s32 %v722, %v724
    %v726 = vrot.slane %v718, %v725
    %v728 = vunpack.c.l.s4 1934713408
    %v729 = vunpack.c.0.s8 %v728
    %v730 = vlaneseq
    %v731 = vshrl.u32 %v730, 7
    %v732 = vsub.s32 %v729, %v731
    %v733 = vrot.slane %v719, %v732
    %v734 = vcombine.low %v701, %v717
    %v735 = vcombine.high %v701, %v717
    %v737 = vunpack.c.l.s4 1934713408
    %v738 = vunpack.c.0.s8 %v737
    %v739 = vlaneseq
    %v740 = vshrl.u32 %v739, 7
    %v741 = vsub.s32 %v738, %v740
    %v742 = vrot.slane %v734, %v741
    %v744 = vunpack.c.l.s4 1934713408
    %v745 = vunpack.c.0.s8 %v744
    %v746 = vlaneseq
    %v747 = vshrl.u32 %v746, 7
    %v748 = vsub.s32 %v745, %v747
    %v749 = vrot.slane %v735, %v748
    %v750 = vcombine.high %v726, 0.0
    %v751 = vcombine.high %v733, 0.0
    %v752 = vcombine.high %v742, 0.0
    %v753 = vcombine.high %v749, 0.0
    %v754 = vcombine.low %v474, %v476
    %v755 = vcombine.high %v474, %v476
    %v757 = vunpack.c.l.s4 1983009808
    %v758 = vunpack.c.0.s8 %v757
    %v759 = vlaneseq
    %v760 = vshrl.u32 %v759, 7
    %v761 = vsub.s32 %v758, %v760
    %v762 = vrot.slane %v754, %v761
    %v764 = vunpack.c.l.s4 1983009808
    %v765 = vunpack.c.0.s8 %v764
    %v766 = vlaneseq
    %v767 = vshrl.u32 %v766, 7
    %v768 = vsub.s32 %v765, %v767
    %v769 = vrot.slane %v755, %v768
    %v770 = vcombine.low %v475, %v477
    %v771 = vcombine.high %v475, %v477
    %v773 = vunpack.c.l.s4 1983009808
    %v774 = vunpack.c.0.s8 %v773
    %v775 = vlaneseq
    %v776 = vshrl.u32 %v775, 7
    %v777 = vsub.s32 %v774, %v776
    %v778 = vrot.slane %v770, %v777
    %v780 = vunpack.c.l.s4 1983009808
    %v781 = vunpack.c.0.s8 %v780
    %v782 = vlaneseq
    %v783 = vshrl.u32 %v782, 7
    %v784 = vsub.s32 %v781, %v783
    %v785 = vrot.slane %v771, %v784
    %v786 = vcombine.low %v478, %v480
    %v787 = vcombine.high %v478, %v480
    %v789 = vunpack.c.l.s4 1983009808
    %v790 = vunpack.c.0.s8 %v789
    %v791 = vlaneseq
    %v792 = vshrl.u32 %v791, 7
    %v793 = vsub.s32 %v790, %v792
    %v794 = vrot.slane %v786, %v793
    %v796 = vunpack.c.l.s4 1983009808
    %v797 = vunpack.c.0.s8 %v796
    %v798 = vlaneseq
    %v799 = vshrl.u32 %v798, 7
    %v800 = vsub.s32 %v797, %v799
    %v801 = vrot.slane %v787, %v800
    %v802 = vcombine.low %v479, %v481
    %v803 = vcombine.high %v479, %v481
    %v805 = vunpack.c.l.s4 1983009808
    %v806 = vunpack.c.0.s8 %v805
    %v807 = vlaneseq
    %v808 = vshrl.u32 %v807, 7
    %v809 = vsub.s32 %v806, %v808
    %v810 = vrot.slane %v802, %v809
    %v812 = vunpack.c.l.s4 1983009808
    %v813 = vunpack.c.0.s8 %v812
    %v814 = vlaneseq
    %v815 = vshrl.u32 %v814, 7
    %v816 = vsub.s32 %v813, %v815
    %v817 = vrot.slane %v803, %v816
    %v818 = vcombine.low %v762, %v778
    %v819 = vcombine.high %v762, %v778
    %v821 = vunpack.c.l.s4 1934713408
    %v822 = vunpack.c.0.s8 %v821
    %v823 = vlaneseq
    %v824 = vshrl.u32 %v823, 7
    %v825 = vsub.s32 %v822, %v824
    %v826 = vrot.slane %v818, %v825
    %v828 = vunpack.c.l.s4 1934713408
    %v829 = vunpack.c.0.s8 %v828
    %v830 = vlaneseq
    %v831 = vshrl.u32 %v830, 7
    %v832 = vsub.s32 %v829, %v831
    %v833 = vrot.slane %v819, %v832
    %v834 = vcombine.low %v769, %v785
    %v835 = vcombine.high %v769, %v785
    %v837 = vunpack.c.l.s4 1934713408
    %v838 = vunpack.c.0.s8 %v837
    %v839 = vlaneseq
    %v840 = vshrl.u32 %v839, 7
    %v841 = vsub.s32 %v838, %v840
    %v842 = vrot.slane %v834, %v841
    %v844 = vunpack.c.l.s4 1934713408
    %v845 = vunpack.c.0.s8 %v844
    %v846 = vlaneseq
    %v847 = vshrl.u32 %v846, 7
    %v848 = vsub.s32 %v845, %v847
    %v849 = vrot.slane %v835, %v848
    %v850 = vcombine.low %v794, %v810
    %v851 = vcombine.high %v794, %v810
    %v853 = vunpack.c.l.s4 1934713408
    %v854 = vunpack.c.0.s8 %v853
    %v855 = vlaneseq
    %v856 = vshrl.u32 %v855, 7
    %v857 = vsub.s32 %v854, %v856
    %v858 = vrot.slane %v850, %v857
    %v860 = vunpack.c.l.s4 1934713408
    %v861 = vunpack.c.0.s8 %v860
    %v862 = vlaneseq
    %v863 = vshrl.u32 %v862, 7
    %v864 = vsub.s32 %v861, %v863
    %v865 = vrot.slane %v851, %v864
    %v866 = vcombine.low %v801, %v817
    %v867 = vcombine.high %v801, %v817
    %v869 = vunpack.c.l.s4 1934713408
    %v870 = vunpack.c.0.s8 %v869
    %v871 = vlaneseq
    %v872 = vshrl.u32 %v871, 7
    %v873 = vsub.s32 %v870, %v872
    %v874 = vrot.slane %v866, %v873
    %v876 = vunpack.c.l.s4 1934713408
    %v877 = vunpack.c.0.s8 %v876
    %v878 = vlaneseq
    %v879 = vshrl.u32 %v878, 7
    %v880 = vsub.s32 %v877, %v879
    %v881 = vrot.slane %v867, %v880
    %v882 = vcombine.low %v826, %v858
    %v883 = vcombine.high %v826, %v858
    %v884 = vcombine.low %v833, %v865
    %v885 = vcombine.high %v833, %v865
    %v886 = vcombine.low %v842, %v874
    %v887 = vcombine.high %v842, %v874
    %v888 = vcombine.low %v849, %v881
    %v889 = vcombine.high %v849, %v881
    %v890 = vcombine.low %v678, %v680
    %v891 = vcombine.high %v678, %v680
    %v893 = vunpack.c.l.s4 1983009808
    %v894 = vunpack.c.0.s8 %v893
    %v895 = vlaneseq
    %v896 = vshrl.u32 %v895, 7
    %v897 = vsub.s32 %v894, %v896
    %v898 = vrot.slane %v890, %v897
    %v900 = vunpack.c.l.s4 1983009808
    %v901 = vunpack.c.0.s8 %v900
    %v902 = vlaneseq
    %v903 = vshrl.u32 %v902, 7
    %v904 = vsub.s32 %v901, %v903
    %v905 = vrot.slane %v891, %v904
    %v906 = vcombine.low %v679, %v681
    %v907 = vcombine.high %v679, %v681
    %v909 = vunpack.c.l.s4 1983009808
    %v910 = vunpack.c.0.s8 %v909
    %v911 = vlaneseq
    %v912 = vshrl.u32 %v911, 7
    %v913 = vsub.s32 %v910, %v912
    %v914 = vrot.slane %v906, %v913
    %v916 = vunpack.c.l.s4 1983009808
    %v917 = vunpack.c.0.s8 %v916
    %v918 = vlaneseq
    %v919 = vshrl.u32 %v918, 7
    %v920 = vsub.s32 %v917, %v919
    %v921 = vrot.slane %v907, %v920
    %v922 = vcombine.low %v682, %v684
    %v923 = vcombine.high %v682, %v684
    %v925 = vunpack.c.l.s4 1983009808
    %v926 = vunpack.c.0.s8 %v925
    %v927 = vlaneseq
    %v928 = vshrl.u32 %v927, 7
    %v929 = vsub.s32 %v926, %v928
    %v930 = vrot.slane %v922, %v929
    %v932 = vunpack.c.l.s4 1983009808
    %v933 = vunpack.c.0.s8 %v932
    %v934 = vlaneseq
    %v935 = vshrl.u32 %v934, 7
    %v936 = vsub.s32 %v933, %v935
    %v937 = vrot.slane %v923, %v936
    %v938 = vcombine.low %v683, %v685
    %v939 = vcombine.high %v683, %v685
    %v941 = vunpack.c.l.s4 1983009808
    %v942 = vunpack.c.0.s8 %v941
    %v943 = vlaneseq
    %v944 = vshrl.u32 %v943, 7
    %v945 = vsub.s32 %v942, %v944
    %v946 = vrot.slane %v938, %v945
    %v948 = vunpack.c.l.s4 1983009808
    %v949 = vunpack.c.0.s8 %v948
    %v950 = vlaneseq
    %v951 = vshrl.u32 %v950, 7
    %v952 = vsub.s32 %v949, %v951
    %v953 = vrot.slane %v939, %v952
    %v954 = vcombine.low %v898, %v914
    %v955 = vcombine.high %v898, %v914
    %v957 = vunpack.c.l.s4 1934713408
    %v958 = vunpack.c.0.s8 %v957
    %v959 = vlaneseq
    %v960 = vshrl.u32 %v959, 7
    %v961 = vsub.s32 %v958, %v960
    %v962 = vrot.slane %v954, %v961
    %v964 = vunpack.c.l.s4 1934713408
    %v965 = vunpack.c.0.s8 %v964
    %v966 = vlaneseq
    %v967 = vshrl.u32 %v966, 7
    %v968 = vsub.s32 %v965, %v967
    %v969 = vrot.slane %v955, %v968
    %v970 = vcombine.low %v905, %v921
    %v971 = vcombine.high %v905, %v921
    %v973 = vunpack.c.l.s4 1934713408
    %v974 = vunpack.c.0.s8 %v973
    %v975 = vlaneseq
    %v976 = vshrl.u32 %v975, 7
    %v977 = vsub.s32 %v974, %v976
    %v978 = vrot.slane %v970, %v977
    %v980 = vunpack.c.l.s4 1934713408
    %v981 = vunpack.c.0.s8 %v980
    %v982 = vlaneseq
    %v983 = vshrl.u32 %v982, 7
    %v984 = vsub.s32 %v981, %v983
    %v985 = vrot.slane %v971, %v984
    %v986 = vcombine.low %v930, %v946
    %v987 = vcombine.high %v930, %v946
    %v989 = vunpack.c.l.s4 1934713408
    %v990 = vunpack.c.0.s8 %v989
    %v991 = vlaneseq
    %v992 = vshrl.u32 %v991, 7
    %v993 = vsub.s32 %v990, %v992
    %v994 = vrot.slane %v986, %v993
    %v996 = vunpack.c.l.s4 1934713408
    %v997 = vunpack.c.0.s8 %v996
    %v998 = vlaneseq
    %v999 = vshrl.u32 %v998, 7
    %v1000 = vsub.s32 %v997, %v999
    %v1001 = vrot.slane %v987, %v1000
    %v1002 = vcombine.low %v937, %v953
    %v1003 = vcombine.high %v937, %v953
    %v1005 = vunpack.c.l.s4 1934713408
    %v1006 = vunpack.c.0.s8 %v1005
    %v1007 = vlaneseq
    %v1008 = vshrl.u32 %v1007, 7
    %v1009 = vsub.s32 %v1006, %v1008
    %v1010 = vrot.slane %v1002, %v1009
    %v1012 = vunpack.c.l.s4 1934713408
    %v1013 = vunpack.c.0.s8 %v1012
    %v1014 = vlaneseq
    %v1015 = vshrl.u32 %v1014, 7
    %v1016 = vsub.s32 %v1013, %v1015
    %v1017 = vrot.slane %v1003, %v1016
    %v1018 = vcombine.low %v962, %v994
    %v1019 = vcombine.high %v962, %v994
    %v1020 = vcombine.low %v969, %v1001
    %v1021 = vcombine.high %v969, %v1001
    %v1022 = vcombine.low %v978, %v1010
    %v1023 = vcombine.high %v978, %v1010
    %v1024 = vcombine.low %v985, %v1017
    %v1025 = vcombine.high %v985, %v1017
    %v1026 = vcombine.low %v522, %v529
    %v1028 = vunpack.c.l.s4 1983009808
    %v1029 = vunpack.c.0.s8 %v1028
    %v1030 = vlaneseq
    %v1031 = vshrl.u32 %v1030, 7
    %v1032 = vsub.s32 %v1029, %v1031
    %v1033 = vrot.slane %v1026, %v1032
    %v1034 = vcombine.low %v546, %v547
    %v1036 = vunpack.c.l.s4 1983009808
    %v1037 = vunpack.c.0.s8 %v1036
    %v1038 = vlaneseq
    %v1039 = vshrl.u32 %v1038, 7
    %v1040 = vsub.s32 %v1037, %v1039
    %v1041 = vrot.slane %v1034, %v1040
    %v1042 = vcombine.low %v538, %v545
    %v1044 = vunpack.c.l.s4 1983009808
    %v1045 = vunpack.c.0.s8 %v1044
    %v1046 = vlaneseq
    %v1047 = vshrl.u32 %v1046, 7
    %v1048 = vsub.s32 %v1045, %v1047
    %v1049 = vrot.slane %v1042, %v1048
    %v1050 = vcombine.low %v548, %v549
    %v1052 = vunpack.c.l.s4 1983009808
    %v1053 = vunpack.c.0.s8 %v1052
    %v1054 = vlaneseq
    %v1055 = vshrl.u32 %v1054, 7
    %v1056 = vsub.s32 %v1053, %v1055
    %v1057 = vrot.slane %v1050, %v1056
    %v1058 = vcombine.low %v1033, %v1041
    %v1059 = vcombine.high %v1033, %v1041
    %v1061 = vunpack.c.l.s4 1934713408
    %v1062 = vunpack.c.0.s8 %v1061
    %v1063 = vlaneseq
    %v1064 = vshrl.u32 %v1063, 7
    %v1065 = vsub.s32 %v1062, %v1064
    %v1066 = vrot.slane %v1058, %v1065
    %v1068 = vunpack.c.l.s4 1934713408
    %v1069 = vunpack.c.0.s8 %v1068
    %v1070 = vlaneseq
    %v1071 = vshrl.u32 %v1070, 7
    %v1072 = vsub.s32 %v1069, %v1071
    %v1073 = vrot.slane %v1059, %v1072
    %v1074 = vcombine.low %v1049, %v1057
    %v1075 = vcombine.high %v1049, %v1057
    %v1077 = vunpack.c.l.s4 1934713408
    %v1078 = vunpack.c.0.s8 %v1077
    %v1079 = vlaneseq
    %v1080 = vshrl.u32 %v1079, 7
    %v1081 = vsub.s32 %v1078, %v1080
    %v1082 = vrot.slane %v1074, %v1081
    %v1084 = vunpack.c.l.s4 1934713408
    %v1085 = vunpack.c.0.s8 %v1084
    %v1086 = vlaneseq
    %v1087 = vshrl.u32 %v1086, 7
    %v1088 = vsub.s32 %v1085, %v1087
    %v1089 = vrot.slane %v1075, %v1088
    %v1090 = vcombine.low %v1066, %v1082
    %v1091 = vcombine.high %v1066, %v1082
    %v1092 = vcombine.low %v1073, %v1089
    %v1093 = vcombine.high %v1073, %v1089
    %v1094 = vcombine.low %v726, %v733
    %v1096 = vunpack.c.l.s4 1983009808
    %v1097 = vunpack.c.0.s8 %v1096
    %v1098 = vlaneseq
    %v1099 = vshrl.u32 %v1098, 7
    %v1100 = vsub.s32 %v1097, %v1099
    %v1101 = vrot.slane %v1094, %v1100
    %v1102 = vcombine.low %v750, %v751
    %v1104 = vunpack.c.l.s4 1983009808
    %v1105 = vunpack.c.0.s8 %v1104
    %v1106 = vlaneseq
    %v1107 = vshrl.u32 %v1106, 7
    %v1108 = vsub.s32 %v1105, %v1107
    %v1109 = vrot.slane %v1102, %v1108
    %v1110 = vcombine.low %v742, %v749
    %v1112 = vunpack.c.l.s4 1983009808
    %v1113 = vunpack.c.0.s8 %v1112
    %v1114 = vlaneseq
    %v1115 = vshrl.u32 %v1114, 7
    %v1116 = vsub.s32 %v1113, %v1115
    %v1117 = vrot.slane %v1110, %v1116
    %v1118 = vcombine.low %v752, %v753
    %v1120 = vunpack.c.l.s4 1983009808
    %v1121 = vunpack.c.0.s8 %v1120
    %v1122 = vlaneseq
    %v1123 = vshrl.u32 %v1122, 7
    %v1124 = vsub.s32 %v1121, %v1123
    %v1125 = vrot.slane %v1118, %v1124
    %v1126 = vcombine.low %v1101, %v1109
    %v1127 = vcombine.high %v1101, %v1109
    %v1129 = vunpack.c.l.s4 1934713408
    %v1130 = vunpack.c.0.s8 %v1129
    %v1131 = vlaneseq
    %v1132 = vshrl.u32 %v1131, 7
    %v1133 = vsub.s32 %v1130, %v1132
    %v1134 = vrot.slane %v1126, %v1133
    %v1136 = vunpack.c.l.s4 1934713408
    %v1137 = vunpack.c.0.s8 %v1136
    %v1138 = vlaneseq
    %v1139 = vshrl.u32 %v1138, 7
    %v1140 = vsub.s32 %v1137, %v1139
    %v1141 = vrot.slane %v1127, %v1140
    %v1142 = vcombine.low %v1117, %v1125
    %v1143 = vcombine.high %v1117, %v1125
    %v1145 = vunpack.c.l.s4 1934713408
    %v1146 = vunpack.c.0.s8 %v1145
    %v1147 = vlaneseq
    %v1148 = vshrl.u32 %v1147, 7
    %v1149 = vsub.s32 %v1146, %v1148
    %v1150 = vrot.slane %v1142, %v1149
    %v1152 = vunpack.c.l.s4 1934713408
    %v1153 = vunpack.c.0.s8 %v1152
    %v1154 = vlaneseq
    %v1155 = vshrl.u32 %v1154, 7
    %v1156 = vsub.s32 %v1153, %v1155
    %v1157 = vrot.slane %v1143, %v1156
    %v1158 = vcombine.low %v1134, %v1150
    %v1159 = vcombine.high %v1134, %v1150
    %v1160 = vcombine.low %v1141, %v1157
    %v1161 = vcombine.high %v1141, %v1157
    %v1162 = vpack.c.bf16 %v882, %v882
    %v1163 = vpack.c.bf16 %v1018, %v1018
    %v1164 = vpack.c.bf16 %v883, %v883
    %v1165 = vpack.c.bf16 %v1019, %v1019
    %v1166 = vpack.c.bf16 %v884, %v884
    %v1167 = vpack.c.bf16 %v1020, %v1020
    %v1168 = vpack.c.bf16 %v885, %v885
    %v1169 = vpack.c.bf16 %v1021, %v1021
    %v1170 = vpack.c.bf16 %v886, %v886
    %v1171 = vpack.c.bf16 %v1022, %v1022
    %v1172 = vpack.c.bf16 %v887, %v887
    %v1173 = vpack.c.bf16 %v1023, %v1023
    %v1174 = vpack.c.bf16 %v888, %v888
    %v1175 = vpack.c.bf16 %v1024, %v1024
    %v1176 = vpack.c.bf16 %v889, %v889
    %v1177 = vpack.c.bf16 %v1025, %v1025
    %v1178 = vpack.c.bf16 %v1090, %v1090
    %v1179 = vpack.c.bf16 %v1158, %v1158
    %v1180 = vpack.c.bf16 %v1091, %v1091
    %v1181 = vpack.c.bf16 %v1159, %v1159
    %v1182 = vpack.c.bf16 %v1092, %v1092
    %v1183 = vpack.c.bf16 %v1160, %v1160
    %v1184 = vpack.c.bf16 %v1093, %v1093
    %v1185 = vpack.c.bf16 %v1161, %v1161
    %vm1186 = vcmask 64512
    %v1188 = vsel %vm1186, %v1162, 0
    %v1191 = vsel %vm1186, %v1170, 0
    %1193 = vmatprep.subr.bf16.mxu0 0
    %1194 = vmatpush1.bf16.xpose.msra.mxu0 0
    %1195 = vmatprep.subr.bf16.mxu0 0
    %1196 = vmatpush1.bf16.xpose.msra.mxu0 0
    %1197 = vmatprep.subr.bf16.mxu0 0
    %1198 = vmatpush1.bf16.xpose.msra.mxu0 0
    %1199 = vmatprep.subr.bf16.mxu0 0
    %1200 = vmatpush1.bf16.xpose.msra.mxu0 0
    %1201 = vmatprep.subr.bf16.mxu0 0
    %1202 = vmatpush1.bf16.xpose.msra.mxu0 0
    %1203 = vmatprep.subr.bf16.mxu0 0
    %1204 = vmatpush1.bf16.xpose.msra.mxu0 0
    %1205 = vmatprep.subr.bf16.mxu0 0
    %1206 = vmatpush1.bf16.xpose.msra.mxu0 0
    %1207 = vmatprep.subr.bf16.mxu0 0
    %1208 = vmatpush1.bf16.xpose.msra.mxu0 %v1191
    %1209 = vmatprep.subr.bf16.mxu0 0
    %1210 = vmatpush2.bf16.xpose.msra.mxu0 0
    %1211 = vmatprep.subr.bf16.mxu0 0
    %1212 = vmatpush2.bf16.xpose.msra.mxu0 0
    %1213 = vmatprep.subr.bf16.mxu0 0
    %1214 = vmatpush2.bf16.xpose.msra.mxu0 0
    %1215 = vmatprep.subr.bf16.mxu0 0
    %1216 = vmatpush2.bf16.xpose.msra.mxu0 0
    %1217 = vmatprep.subr.bf16.mxu0 0
    %1218 = vmatpush2.bf16.xpose.msra.mxu0 0
    %1219 = vmatprep.subr.bf16.mxu0 0
    %1220 = vmatpush2.bf16.xpose.msra.mxu0 0
    %1221 = vmatprep.subr.bf16.mxu0 0
    %1222 = vmatpush2.bf16.xpose.msra.mxu0 0
    %1223 = vmatprep.subr.bf16.mxu0 0
    %1224 = vmatpush2.bf16.xpose.msra.mxu0 0
    %1225 = vmatprep.mubr.bf16.mxu0 0
    %1226 = vmatmul.mubr.bf16.gmra.mxu0 %v1188
    %v1227 = vpop.f32.mrf.mxu0
    %v1228 = vadd.f32 %v103, %v1227
    %v1229 = vpop.f32.mrf.mxu0
    %v1230 = vpop.f32.mrf.mxu0
    %v1231 = vpop.f32.mrf.mxu0
    %1232 = vdwg.mxu0
    %v1234 = vsel %vm1186, %v1163, 0
    %v1237 = vsel %vm1186, %v1171, 0
    %1239 = vmatprep.subr.bf16.mxu0 0
    %1240 = vmatpush1.bf16.xpose.msra.mxu0 0
    %1241 = vmatprep.subr.bf16.mxu0 0
    %1242 = vmatpush1.bf16.xpose.msra.mxu0 0
    %1243 = vmatprep.subr.bf16.mxu0 0
    %1244 = vmatpush1.bf16.xpose.msra.mxu0 0
    %1245 = vmatprep.subr.bf16.mxu0 0
    %1246 = vmatpush1.bf16.xpose.msra.mxu0 0
    %1247 = vmatprep.subr.bf16.mxu0 0
    %1248 = vmatpush1.bf16.xpose.msra.mxu0 0
    %1249 = vmatprep.subr.bf16.mxu0 0
    %1250 = vmatpush1.bf16.xpose.msra.mxu0 0
    %1251 = vmatprep.subr.bf16.mxu0 0
    %1252 = vmatpush1.bf16.xpose.msra.mxu0 0
    %1253 = vmatprep.subr.bf16.mxu0 0
    %1254 = vmatpush1.bf16.xpose.msra.mxu0 %v1237
    %1255 = vmatprep.subr.bf16.mxu0 0
    %1256 = vmatpush2.bf16.xpose.msra.mxu0 0
    %1257 = vmatprep.subr.bf16.mxu0 0
    %1258 = vmatpush2.bf16.xpose.msra.mxu0 0
    %1259 = vmatprep.subr.bf16.mxu0 0
    %1260 = vmatpush2.bf16.xpose.msra.mxu0 0
    %1261 = vmatprep.subr.bf16.mxu0 0
    %1262 = vmatpush2.bf16.xpose.msra.mxu0 0
    %1263 = vmatprep.subr.bf16.mxu0 0
    %1264 = vmatpush2.bf16.xpose.msra.mxu0 0
    %1265 = vmatprep.subr.bf16.mxu0 0
    %1266 = vmatpush2.bf16.xpose.msra.mxu0 0
    %1267 = vmatprep.subr.bf16.mxu0 0
    %1268 = vmatpush2.bf16.xpose.msra.mxu0 0
    %1269 = vmatprep.subr.bf16.mxu0 0
    %1270 = vmatpush2.bf16.xpose.msra.mxu0 0
    %1271 = vmatprep.mubr.bf16.mxu0 0
    %1272 = vmatmul.mubr.bf16.gmra.mxu0 %v1234
    %v1273 = vpop.f32.mrf.mxu0
    %v1274 = vadd.f32 %v107, %v1273
    %v1275 = vpop.f32.mrf.mxu0
    %v1276 = vpop.f32.mrf.mxu0
    %v1277 = vpop.f32.mrf.mxu0
    %1278 = vdwg.mxu0
    %v1280 = vsel %vm1186, %v1164, 0
    %v1283 = vsel %vm1186, %v1172, 0
    %1285 = vmatprep.subr.bf16.mxu0 0
    %1286 = vmatpush1.bf16.xpose.msra.mxu0 0
    %1287 = vmatprep.subr.bf16.mxu0 0
    %1288 = vmatpush1.bf16.xpose.msra.mxu0 0
    %1289 = vmatprep.subr.bf16.mxu0 0
    %1290 = vmatpush1.bf16.xpose.msra.mxu0 0
    %1291 = vmatprep.subr.bf16.mxu0 0
    %1292 = vmatpush1.bf16.xpose.msra.mxu0 0
    %1293 = vmatprep.subr.bf16.mxu0 0
    %1294 = vmatpush1.bf16.xpose.msra.mxu0 0
    %1295 = vmatprep.subr.bf16.mxu0 0
    %1296 = vmatpush1.bf16.xpose.msra.mxu0 0
    %1297 = vmatprep.subr.bf16.mxu0 0
    %1298 = vmatpush1.bf16.xpose.msra.mxu0 0
    %1299 = vmatprep.subr.bf16.mxu0 0
    %1300 = vmatpush1.bf16.xpose.msra.mxu0 %v1283
    %1301 = vmatprep.subr.bf16.mxu0 0
    %1302 = vmatpush2.bf16.xpose.msra.mxu0 0
    %1303 = vmatprep.subr.bf16.mxu0 0
    %1304 = vmatpush2.bf16.xpose.msra.mxu0 0
    %1305 = vmatprep.subr.bf16.mxu0 0
    %1306 = vmatpush2.bf16.xpose.msra.mxu0 0
    %1307 = vmatprep.subr.bf16.mxu0 0
    %1308 = vmatpush2.bf16.xpose.msra.mxu0 0
    %1309 = vmatprep.subr.bf16.mxu0 0
    %1310 = vmatpush2.bf16.xpose.msra.mxu0 0
    %1311 = vmatprep.subr.bf16.mxu0 0
    %1312 = vmatpush2.bf16.xpose.msra.mxu0 0
    %1313 = vmatprep.subr.bf16.mxu0 0
    %1314 = vmatpush2.bf16.xpose.msra.mxu0 0
    %1315 = vmatprep.subr.bf16.mxu0 0
    %1316 = vmatpush2.bf16.xpose.msra.mxu0 0
    %1317 = vmatprep.mubr.bf16.mxu0 0
    %1318 = vmatmul.mubr.bf16.gmra.mxu0 %v1280
    %v1319 = vpop.f32.mrf.mxu0
    %v1320 = vadd.f32 %v111, %v1319
    %v1321 = vpop.f32.mrf.mxu0
    %v1322 = vpop.f32.mrf.mxu0
    %v1323 = vpop.f32.mrf.mxu0
    %1324 = vdwg.mxu0
    %v1326 = vsel %vm1186, %v1165, 0
    %v1329 = vsel %vm1186, %v1173, 0
    %1331 = vmatprep.subr.bf16.mxu0 0
    %1332 = vmatpush1.bf16.xpose.msra.mxu0 0
    %1333 = vmatprep.subr.bf16.mxu0 0
    %1334 = vmatpush1.bf16.xpose.msra.mxu0 0
    %1335 = vmatprep.subr.bf16.mxu0 0
    %1336 = vmatpush1.bf16.xpose.msra.mxu0 0
    %1337 = vmatprep.subr.bf16.mxu0 0
    %1338 = vmatpush1.bf16.xpose.msra.mxu0 0
    %1339 = vmatprep.subr.bf16.mxu0 0
    %1340 = vmatpush1.bf16.xpose.msra.mxu0 0
    %1341 = vmatprep.subr.bf16.mxu0 0
    %1342 = vmatpush1.bf16.xpose.msra.mxu0 0
    %1343 = vmatprep.subr.bf16.mxu0 0
    %1344 = vmatpush1.bf16.xpose.msra.mxu0 0
    %1345 = vmatprep.subr.bf16.mxu0 0
    %1346 = vmatpush1.bf16.xpose.msra.mxu0 %v1329
    %1347 = vmatprep.subr.bf16.mxu0 0
    %1348 = vmatpush2.bf16.xpose.msra.mxu0 0
    %1349 = vmatprep.subr.bf16.mxu0 0
    %1350 = vmatpush2.bf16.xpose.msra.mxu0 0
    %1351 = vmatprep.subr.bf16.mxu0 0
    %1352 = vmatpush2.bf16.xpose.msra.mxu0 0
    %1353 = vmatprep.subr.bf16.mxu0 0
    %1354 = vmatpush2.bf16.xpose.msra.mxu0 0
    %1355 = vmatprep.subr.bf16.mxu0 0
    %1356 = vmatpush2.bf16.xpose.msra.mxu0 0
    %1357 = vmatprep.subr.bf16.mxu0 0
    %1358 = vmatpush2.bf16.xpose.msra.mxu0 0
    %1359 = vmatprep.subr.bf16.mxu0 0
    %1360 = vmatpush2.bf16.xpose.msra.mxu0 0
    %1361 = vmatprep.subr.bf16.mxu0 0
    %1362 = vmatpush2.bf16.xpose.msra.mxu0 0
    %1363 = vmatprep.mubr.bf16.mxu0 0
    %1364 = vmatmul.mubr.bf16.gmra.mxu0 %v1326
    %v1365 = vpop.f32.mrf.mxu0
    %v1366 = vadd.f32 %v115, %v1365
    %v1367 = vpop.f32.mrf.mxu0
    %v1368 = vpop.f32.mrf.mxu0
    %v1369 = vpop.f32.mrf.mxu0
    %1370 = vdwg.mxu0
    %v1372 = vsel %vm1186, %v1166, 0
    %v1375 = vsel %vm1186, %v1174, 0
    %1377 = vmatprep.subr.bf16.mxu0 0
    %1378 = vmatpush1.bf16.xpose.msra.mxu0 0
    %1379 = vmatprep.subr.bf16.mxu0 0
    %1380 = vmatpush1.bf16.xpose.msra.mxu0 0
    %1381 = vmatprep.subr.bf16.mxu0 0
    %1382 = vmatpush1.bf16.xpose.msra.mxu0 0
    %1383 = vmatprep.subr.bf16.mxu0 0
    %1384 = vmatpush1.bf16.xpose.msra.mxu0 0
    %1385 = vmatprep.subr.bf16.mxu0 0
    %1386 = vmatpush1.bf16.xpose.msra.mxu0 0
    %1387 = vmatprep.subr.bf16.mxu0 0
    %1388 = vmatpush1.bf16.xpose.msra.mxu0 0
    %1389 = vmatprep.subr.bf16.mxu0 0
    %1390 = vmatpush1.bf16.xpose.msra.mxu0 0
    %1391 = vmatprep.subr.bf16.mxu0 0
    %1392 = vmatpush1.bf16.xpose.msra.mxu0 %v1375
    %1393 = vmatprep.subr.bf16.mxu0 0
    %1394 = vmatpush2.bf16.xpose.msra.mxu0 0
    %1395 = vmatprep.subr.bf16.mxu0 0
    %1396 = vmatpush2.bf16.xpose.msra.mxu0 0
    %1397 = vmatprep.subr.bf16.mxu0 0
    %1398 = vmatpush2.bf16.xpose.msra.mxu0 0
    %1399 = vmatprep.subr.bf16.mxu0 0
    %1400 = vmatpush2.bf16.xpose.msra.mxu0 0
    %1401 = vmatprep.subr.bf16.mxu0 0
    %1402 = vmatpush2.bf16.xpose.msra.mxu0 0
    %1403 = vmatprep.subr.bf16.mxu0 0
    %1404 = vmatpush2.bf16.xpose.msra.mxu0 0
    %1405 = vmatprep.subr.bf16.mxu0 0
    %1406 = vmatpush2.bf16.xpose.msra.mxu0 0
    %1407 = vmatprep.subr.bf16.mxu0 0
    %1408 = vmatpush2.bf16.xpose.msra.mxu0 0
    %1409 = vmatprep.mubr.bf16.mxu0 0
    %1410 = vmatmul.mubr.bf16.gmra.mxu0 %v1372
    %v1411 = vpop.f32.mrf.mxu0
    %v1412 = vadd.f32 %v119, %v1411
    %v1413 = vpop.f32.mrf.mxu0
    %v1414 = vpop.f32.mrf.mxu0
    %v1415 = vpop.f32.mrf.mxu0
    %1416 = vdwg.mxu0
    %v1418 = vsel %vm1186, %v1167, 0
    %v1421 = vsel %vm1186, %v1175, 0
    %1423 = vmatprep.subr.bf16.mxu0 0
    %1424 = vmatpush1.bf16.xpose.msra.mxu0 0
    %1425 = vmatprep.subr.bf16.mxu0 0
    %1426 = vmatpush1.bf16.xpose.msra.mxu0 0
    %1427 = vmatprep.subr.bf16.mxu0 0
    %1428 = vmatpush1.bf16.xpose.msra.mxu0 0
    %1429 = vmatprep.subr.bf16.mxu0 0
    %1430 = vmatpush1.bf16.xpose.msra.mxu0 0
    %1431 = vmatprep.subr.bf16.mxu0 0
    %1432 = vmatpush1.bf16.xpose.msra.mxu0 0
    %1433 = vmatprep.subr.bf16.mxu0 0
    %1434 = vmatpush1.bf16.xpose.msra.mxu0 0
    %1435 = vmatprep.subr.bf16.mxu0 0
    %1436 = vmatpush1.bf16.xpose.msra.mxu0 0
    %1437 = vmatprep.subr.bf16.mxu0 0
    %1438 = vmatpush1.bf16.xpose.msra.mxu0 %v1421
    %1439 = vmatprep.subr.bf16.mxu0 0
    %1440 = vmatpush2.bf16.xpose.msra.mxu0 0
    %1441 = vmatprep.subr.bf16.mxu0 0
    %1442 = vmatpush2.bf16.xpose.msra.mxu0 0
    %1443 = vmatprep.subr.bf16.mxu0 0
    %1444 = vmatpush2.bf16.xpose.msra.mxu0 0
    %1445 = vmatprep.subr.bf16.mxu0 0
    %1446 = vmatpush2.bf16.xpose.msra.mxu0 0
    %1447 = vmatprep.subr.bf16.mxu0 0
    %1448 = vmatpush2.bf16.xpose.msra.mxu0 0
    %1449 = vmatprep.subr.bf16.mxu0 0
    %1450 = vmatpush2.bf16.xpose.msra.mxu0 0
    %1451 = vmatprep.subr.bf16.mxu0 0
    %1452 = vmatpush2.bf16.xpose.msra.mxu0 0
    %1453 = vmatprep.subr.bf16.mxu0 0
    %1454 = vmatpush2.bf16.xpose.msra.mxu0 0
    %1455 = vmatprep.mubr.bf16.mxu0 0
    %1456 = vmatmul.mubr.bf16.gmra.mxu0 %v1418
    %v1457 = vpop.f32.mrf.mxu0
    %v1458 = vadd.f32 %v123, %v1457
    %v1459 = vpop.f32.mrf.mxu0
    %v1460 = vpop.f32.mrf.mxu0
    %v1461 = vpop.f32.mrf.mxu0
    %1462 = vdwg.mxu0
    %v1464 = vsel %vm1186, %v1168, 0
    %v1467 = vsel %vm1186, %v1176, 0
    %1469 = vmatprep.subr.bf16.mxu0 0
    %1470 = vmatpush1.bf16.xpose.msra.mxu0 0
    %1471 = vmatprep.subr.bf16.mxu0 0
    %1472 = vmatpush1.bf16.xpose.msra.mxu0 0
    %1473 = vmatprep.subr.bf16.mxu0 0
    %1474 = vmatpush1.bf16.xpose.msra.mxu0 0
    %1475 = vmatprep.subr.bf16.mxu0 0
    %1476 = vmatpush1.bf16.xpose.msra.mxu0 0
    %1477 = vmatprep.subr.bf16.mxu0 0
    %1478 = vmatpush1.bf16.xpose.msra.mxu0 0
    %1479 = vmatprep.subr.bf16.mxu0 0
    %1480 = vmatpush1.bf16.xpose.msra.mxu0 0
    %1481 = vmatprep.subr.bf16.mxu0 0
    %1482 = vmatpush1.bf16.xpose.msra.mxu0 0
    %1483 = vmatprep.subr.bf16.mxu0 0
    %1484 = vmatpush1.bf16.xpose.msra.mxu0 %v1467
    %1485 = vmatprep.subr.bf16.mxu0 0
    %1486 = vmatpush2.bf16.xpose.msra.mxu0 0
    %1487 = vmatprep.subr.bf16.mxu0 0
    %1488 = vmatpush2.bf16.xpose.msra.mxu0 0
    %1489 = vmatprep.subr.bf16.mxu0 0
    %1490 = vmatpush2.bf16.xpose.msra.mxu0 0
    %1491 = vmatprep.subr.bf16.mxu0 0
    %1492 = vmatpush2.bf16.xpose.msra.mxu0 0
    %1493 = vmatprep.subr.bf16.mxu0 0
    %1494 = vmatpush2.bf16.xpose.msra.mxu0 0
    %1495 = vmatprep.subr.bf16.mxu0 0
    %1496 = vmatpush2.bf16.xpose.msra.mxu0 0
    %1497 = vmatprep.subr.bf16.mxu0 0
    %1498 = vmatpush2.bf16.xpose.msra.mxu0 0
    %1499 = vmatprep.subr.bf16.mxu0 0
    %1500 = vmatpush2.bf16.xpose.msra.mxu0 0
    %1501 = vmatprep.mubr.bf16.mxu0 0
    %1502 = vmatmul.mubr.bf16.gmra.mxu0 %v1464
    %v1503 = vpop.f32.mrf.mxu0
    %v1504 = vadd.f32 %v127, %v1503
    %v1505 = vpop.f32.mrf.mxu0
    %v1506 = vpop.f32.mrf.mxu0
    %v1507 = vpop.f32.mrf.mxu0
    %1508 = vdwg.mxu0
    %v1510 = vsel %vm1186, %v1169, 0
    %v1513 = vsel %vm1186, %v1177, 0
    %1515 = vmatprep.subr.bf16.mxu0 0
    %1516 = vmatpush1.bf16.xpose.msra.mxu0 0
    %1517 = vmatprep.subr.bf16.mxu0 0
    %1518 = vmatpush1.bf16.xpose.msra.mxu0 0
    %1519 = vmatprep.subr.bf16.mxu0 0
    %1520 = vmatpush1.bf16.xpose.msra.mxu0 0
    %1521 = vmatprep.subr.bf16.mxu0 0
    %1522 = vmatpush1.bf16.xpose.msra.mxu0 0
    %1523 = vmatprep.subr.bf16.mxu0 0
    %1524 = vmatpush1.bf16.xpose.msra.mxu0 0
    %1525 = vmatprep.subr.bf16.mxu0 0
    %1526 = vmatpush1.bf16.xpose.msra.mxu0 0
    %1527 = vmatprep.subr.bf16.mxu0 0
    %1528 = vmatpush1.bf16.xpose.msra.mxu0 0
    %1529 = vmatprep.subr.bf16.mxu0 0
    %1530 = vmatpush1.bf16.xpose.msra.mxu0 %v1513
    %1531 = vmatprep.subr.bf16.mxu0 0
    %1532 = vmatpush2.bf16.xpose.msra.mxu0 0
    %1533 = vmatprep.subr.bf16.mxu0 0
    %1534 = vmatpush2.bf16.xpose.msra.mxu0 0
    %1535 = vmatprep.subr.bf16.mxu0 0
    %1536 = vmatpush2.bf16.xpose.msra.mxu0 0
    %1537 = vmatprep.subr.bf16.mxu0 0
    %1538 = vmatpush2.bf16.xpose.msra.mxu0 0
    %1539 = vmatprep.subr.bf16.mxu0 0
    %1540 = vmatpush2.bf16.xpose.msra.mxu0 0
    %1541 = vmatprep.subr.bf16.mxu0 0
    %1542 = vmatpush2.bf16.xpose.msra.mxu0 0
    %1543 = vmatprep.subr.bf16.mxu0 0
    %1544 = vmatpush2.bf16.xpose.msra.mxu0 0
    %1545 = vmatprep.subr.bf16.mxu0 0
    %1546 = vmatpush2.bf16.xpose.msra.mxu0 0
    %1547 = vmatprep.mubr.bf16.mxu0 0
    %1548 = vmatmul.mubr.bf16.gmra.mxu0 %v1510
    %v1549 = vpop.f32.mrf.mxu0
    %v1550 = vadd.f32 %v131, %v1549
    %v1551 = vpop.f32.mrf.mxu0
    %v1552 = vpop.f32.mrf.mxu0
    %v1553 = vpop.f32.mrf.mxu0
    %1554 = vdwg.mxu0
    %v1555 = vsel %vm1186, %v1228, -inf
    %1556 = vmax.xlane.f32.xlu0 %v1555
    %v1557 = vpop.xlane.xlu0 %1556
    %v1558 = vsel %vm1186, %v1274, -inf
    %1559 = vmax.xlane.f32.xlu0 %v1558
    %v1560 = vpop.xlane.xlu0 %1559
    %v1561 = vsel %vm1186, %v1320, -inf
    %1562 = vmax.xlane.f32.xlu0 %v1561
    %v1563 = vpop.xlane.xlu0 %1562
    %v1564 = vsel %vm1186, %v1366, -inf
    %1565 = vmax.xlane.f32.xlu0 %v1564
    %v1566 = vpop.xlane.xlu0 %1565
    %v1567 = vsel %vm1186, %v1412, -inf
    %1568 = vmax.xlane.f32.xlu0 %v1567
    %v1569 = vpop.xlane.xlu0 %1568
    %v1570 = vsel %vm1186, %v1458, -inf
    %1571 = vmax.xlane.f32.xlu0 %v1570
    %v1572 = vpop.xlane.xlu0 %1571
    %v1573 = vsel %vm1186, %v1504, -inf
    %1574 = vmax.xlane.f32.xlu0 %v1573
    %v1575 = vpop.xlane.xlu0 %1574
    %v1576 = vsel %vm1186, %v1550, -inf
    %1577 = vmax.xlane.f32.xlu0 %v1576
    %v1578 = vpop.xlane.xlu0 %1577
    %v1579 = vsub.f32 %v1228, %v1557
    %v1580 = vsub.f32 %v1274, %v1560
    %v1581 = vsub.f32 %v1320, %v1563
    %v1582 = vsub.f32 %v1366, %v1566
    %v1583 = vsub.f32 %v1412, %v1569
    %v1584 = vsub.f32 %v1458, %v1572
    %v1585 = vsub.f32 %v1504, %v1575
    %v1586 = vsub.f32 %v1550, %v1578
    %v1587 = vmul.f32 %v1579, 1.442695
    %v1588 = vpow.pop %v1587
    %v1589 = vmul.f32 %v1580, 1.442695
    %v1590 = vpow.pop %v1589
    %v1591 = vmul.f32 %v1581, 1.442695
    %v1592 = vpow.pop %v1591
    %v1593 = vmul.f32 %v1582, 1.442695
    %v1594 = vpow.pop %v1593
    %v1595 = vmul.f32 %v1583, 1.442695
    %v1596 = vpow.pop %v1595
    %v1597 = vmul.f32 %v1584, 1.442695
    %v1598 = vpow.pop %v1597
    %v1599 = vmul.f32 %v1585, 1.442695
    %v1600 = vpow.pop %v1599
    %v1601 = vmul.f32 %v1586, 1.442695
    %v1602 = vpow.pop %v1601
    %v1603 = vsel %vm1186, %v1588, 0.0
    %1604 = vadd.xlane.f32.xlu0 %v1603
    %v1605 = vpop.xlane.xlu0 %1604
    %v1606 = vsel %vm1186, %v1590, 0.0
    %1607 = vadd.xlane.f32.xlu0 %v1606
    %v1608 = vpop.xlane.xlu0 %1607
    %v1609 = vsel %vm1186, %v1592, 0.0
    %1610 = vadd.xlane.f32.xlu0 %v1609
    %v1611 = vpop.xlane.xlu0 %1610
    %v1612 = vsel %vm1186, %v1594, 0.0
    %1613 = vadd.xlane.f32.xlu0 %v1612
    %v1614 = vpop.xlane.xlu0 %1613
    %v1615 = vsel %vm1186, %v1596, 0.0
    %1616 = vadd.xlane.f32.xlu0 %v1615
    %v1617 = vpop.xlane.xlu0 %1616
    %v1618 = vsel %vm1186, %v1598, 0.0
    %1619 = vadd.xlane.f32.xlu0 %v1618
    %v1620 = vpop.xlane.xlu0 %1619
    %v1621 = vsel %vm1186, %v1600, 0.0
    %1622 = vadd.xlane.f32.xlu0 %v1621
    %v1623 = vpop.xlane.xlu0 %1622
    %v1624 = vsel %vm1186, %v1602, 0.0
    %1625 = vadd.xlane.f32.xlu0 %v1624
    %v1626 = vpop.xlane.xlu0 %1625
    %v1627 = vrcp.pop %v1605
    %v1628 = vrcp.pop %v1608
    %v1629 = vrcp.pop %v1611
    %v1630 = vrcp.pop %v1614
    %v1631 = vrcp.pop %v1617
    %v1632 = vrcp.pop %v1620
    %v1633 = vrcp.pop %v1623
    %v1634 = vrcp.pop %v1626
    %v1635 = vmul.f32 %v1588, %v1627
    %v1636 = vmul.f32 %v1590, %v1628
    %v1637 = vmul.f32 %v1592, %v1629
    %v1638 = vmul.f32 %v1594, %v1630
    %v1639 = vmul.f32 %v1596, %v1631
    %v1640 = vmul.f32 %v1598, %v1632
    %v1641 = vmul.f32 %v1600, %v1633
    %v1642 = vmul.f32 %v1602, %v1634
    %v1643 = vpack.c.bf16 %v1635, %v1635
    %v1644 = vpack.c.bf16 %v1636, %v1636
    %v1645 = vpack.c.bf16 %v1637, %v1637
    %v1646 = vpack.c.bf16 %v1638, %v1638
    %v1647 = vpack.c.bf16 %v1639, %v1639
    %v1648 = vpack.c.bf16 %v1640, %v1640
    %v1649 = vpack.c.bf16 %v1641, %v1641
    %v1650 = vpack.c.bf16 %v1642, %v1642
    %v1652 = vsel %vm1186, %v1643, 0
    %vm1654 = vcmask 1043456
    %v1656 = vsel %vm1654, %v1178, 0
    %1658 = vmatprep.subr.bf16.mxu0 0
    %1659 = vmatpush1.bf16.msra.mxu0 0
    %1660 = vmatprep.subr.bf16.mxu0 0
    %1661 = vmatpush1.bf16.msra.mxu0 0
    %1662 = vmatprep.subr.bf16.mxu0 0
    %1663 = vmatpush1.bf16.msra.mxu0 0
    %1664 = vmatprep.subr.bf16.mxu0 0
    %1665 = vmatpush1.bf16.msra.mxu0 0
    %1666 = vmatprep.subr.bf16.mxu0 0
    %1667 = vmatpush1.bf16.msra.mxu0 0
    %1668 = vmatprep.subr.bf16.mxu0 0
    %1669 = vmatpush1.bf16.msra.mxu0 0
    %1670 = vmatprep.subr.bf16.mxu0 0
    %1671 = vmatpush1.bf16.msra.mxu0 0
    %1672 = vmatprep.subr.bf16.mxu0 0
    %1673 = vmatpush1.bf16.msra.mxu0 %v1656
    %1674 = vmatprep.subr.bf16.mxu0 0
    %1675 = vmatpush2.bf16.msra.mxu0 0
    %1676 = vmatprep.subr.bf16.mxu0 0
    %1677 = vmatpush2.bf16.msra.mxu0 0
    %1678 = vmatprep.subr.bf16.mxu0 0
    %1679 = vmatpush2.bf16.msra.mxu0 0
    %1680 = vmatprep.subr.bf16.mxu0 0
    %1681 = vmatpush2.bf16.msra.mxu0 0
    %1682 = vmatprep.subr.bf16.mxu0 0
    %1683 = vmatpush2.bf16.msra.mxu0 0
    %1684 = vmatprep.subr.bf16.mxu0 0
    %1685 = vmatpush2.bf16.msra.mxu0 0
    %1686 = vmatprep.subr.bf16.mxu0 0
    %1687 = vmatpush2.bf16.msra.mxu0 0
    %1688 = vmatprep.subr.bf16.mxu0 0
    %1689 = vmatpush2.bf16.msra.mxu0 0
    %1690 = vmatprep.mubr.bf16.mxu0 0
    %1691 = vmatmul.mubr.bf16.gmra.mxu0 %v1652
    %v1692 = vpop.f32.mrf.mxu0
    %v1693 = vadd.f32 0.0, %v1692
    %v1694 = vpop.f32.mrf.mxu0
    %v1695 = vpop.f32.mrf.mxu0
    %v1696 = vpop.f32.mrf.mxu0
    %1697 = vdwg.mxu0
    %v1699 = vsel %vm1186, %v1644, 0
    %v1702 = vsel %vm1654, %v1179, 0
    %1704 = vmatprep.subr.bf16.mxu0 0
    %1705 = vmatpush1.bf16.msra.mxu0 0
    %1706 = vmatprep.subr.bf16.mxu0 0
    %1707 = vmatpush1.bf16.msra.mxu0 0
    %1708 = vmatprep.subr.bf16.mxu0 0
    %1709 = vmatpush1.bf16.msra.mxu0 0
    %1710 = vmatprep.subr.bf16.mxu0 0
    %1711 = vmatpush1.bf16.msra.mxu0 0
    %1712 = vmatprep.subr.bf16.mxu0 0
    %1713 = vmatpush1.bf16.msra.mxu0 0
    %1714 = vmatprep.subr.bf16.mxu0 0
    %1715 = vmatpush1.bf16.msra.mxu0 0
    %1716 = vmatprep.subr.bf16.mxu0 0
    %1717 = vmatpush1.bf16.msra.mxu0 0
    %1718 = vmatprep.subr.bf16.mxu0 0
    %1719 = vmatpush1.bf16.msra.mxu0 %v1702
    %1720 = vmatprep.subr.bf16.mxu0 0
    %1721 = vmatpush2.bf16.msra.mxu0 0
    %1722 = vmatprep.subr.bf16.mxu0 0
    %1723 = vmatpush2.bf16.msra.mxu0 0
    %1724 = vmatprep.subr.bf16.mxu0 0
    %1725 = vmatpush2.bf16.msra.mxu0 0
    %1726 = vmatprep.subr.bf16.mxu0 0
    %1727 = vmatpush2.bf16.msra.mxu0 0
    %1728 = vmatprep.subr.bf16.mxu0 0
    %1729 = vmatpush2.bf16.msra.mxu0 0
    %1730 = vmatprep.subr.bf16.mxu0 0
    %1731 = vmatpush2.bf16.msra.mxu0 0
    %1732 = vmatprep.subr.bf16.mxu0 0
    %1733 = vmatpush2.bf16.msra.mxu0 0
    %1734 = vmatprep.subr.bf16.mxu0 0
    %1735 = vmatpush2.bf16.msra.mxu0 0
    %1736 = vmatprep.mubr.bf16.mxu0 0
    %1737 = vmatmul.mubr.bf16.gmra.mxu0 %v1699
    %v1738 = vpop.f32.mrf.mxu0
    %v1739 = vadd.f32 0.0, %v1738
    %v1740 = vpop.f32.mrf.mxu0
    %v1741 = vpop.f32.mrf.mxu0
    %v1742 = vpop.f32.mrf.mxu0
    %1743 = vdwg.mxu0
    %v1745 = vsel %vm1186, %v1645, 0
    %v1748 = vsel %vm1654, %v1180, 0
    %1750 = vmatprep.subr.bf16.mxu0 0
    %1751 = vmatpush1.bf16.msra.mxu0 0
    %1752 = vmatprep.subr.bf16.mxu0 0
    %1753 = vmatpush1.bf16.msra.mxu0 0
    %1754 = vmatprep.subr.bf16.mxu0 0
    %1755 = vmatpush1.bf16.msra.mxu0 0
    %1756 = vmatprep.subr.bf16.mxu0 0
    %1757 = vmatpush1.bf16.msra.mxu0 0
    %1758 = vmatprep.subr.bf16.mxu0 0
    %1759 = vmatpush1.bf16.msra.mxu0 0
    %1760 = vmatprep.subr.bf16.mxu0 0
    %1761 = vmatpush1.bf16.msra.mxu0 0
    %1762 = vmatprep.subr.bf16.mxu0 0
    %1763 = vmatpush1.bf16.msra.mxu0 0
    %1764 = vmatprep.subr.bf16.mxu0 0
    %1765 = vmatpush1.bf16.msra.mxu0 %v1748
    %1766 = vmatprep.subr.bf16.mxu0 0
    %1767 = vmatpush2.bf16.msra.mxu0 0
    %1768 = vmatprep.subr.bf16.mxu0 0
    %1769 = vmatpush2.bf16.msra.mxu0 0
    %1770 = vmatprep.subr.bf16.mxu0 0
    %1771 = vmatpush2.bf16.msra.mxu0 0
    %1772 = vmatprep.subr.bf16.mxu0 0
    %1773 = vmatpush2.bf16.msra.mxu0 0
    %1774 = vmatprep.subr.bf16.mxu0 0
    %1775 = vmatpush2.bf16.msra.mxu0 0
    %1776 = vmatprep.subr.bf16.mxu0 0
    %1777 = vmatpush2.bf16.msra.mxu0 0
    %1778 = vmatprep.subr.bf16.mxu0 0
    %1779 = vmatpush2.bf16.msra.mxu0 0
    %1780 = vmatprep.subr.bf16.mxu0 0
    %1781 = vmatpush2.bf16.msra.mxu0 0
    %1782 = vmatprep.mubr.bf16.mxu0 0
    %1783 = vmatmul.mubr.bf16.gmra.mxu0 %v1745
    %v1784 = vpop.f32.mrf.mxu0
    %v1785 = vadd.f32 0.0, %v1784
    %v1786 = vpop.f32.mrf.mxu0
    %v1787 = vpop.f32.mrf.mxu0
    %v1788 = vpop.f32.mrf.mxu0
    %1789 = vdwg.mxu0
    %v1791 = vsel %vm1186, %v1646, 0
    %v1794 = vsel %vm1654, %v1181, 0
    %1796 = vmatprep.subr.bf16.mxu0 0
    %1797 = vmatpush1.bf16.msra.mxu0 0
    %1798 = vmatprep.subr.bf16.mxu0 0
    %1799 = vmatpush1.bf16.msra.mxu0 0
    %1800 = vmatprep.subr.bf16.mxu0 0
    %1801 = vmatpush1.bf16.msra.mxu0 0
    %1802 = vmatprep.subr.bf16.mxu0 0
    %1803 = vmatpush1.bf16.msra.mxu0 0
    %1804 = vmatprep.subr.bf16.mxu0 0
    %1805 = vmatpush1.bf16.msra.mxu0 0
    %1806 = vmatprep.subr.bf16.mxu0 0
    %1807 = vmatpush1.bf16.msra.mxu0 0
    %1808 = vmatprep.subr.bf16.mxu0 0
    %1809 = vmatpush1.bf16.msra.mxu0 0
    %1810 = vmatprep.subr.bf16.mxu0 0
    %1811 = vmatpush1.bf16.msra.mxu0 %v1794
    %1812 = vmatprep.subr.bf16.mxu0 0
    %1813 = vmatpush2.bf16.msra.mxu0 0
    %1814 = vmatprep.subr.bf16.mxu0 0
    %1815 = vmatpush2.bf16.msra.mxu0 0
    %1816 = vmatprep.subr.bf16.mxu0 0
    %1817 = vmatpush2.bf16.msra.mxu0 0
    %1818 = vmatprep.subr.bf16.mxu0 0
    %1819 = vmatpush2.bf16.msra.mxu0 0
    %1820 = vmatprep.subr.bf16.mxu0 0
    %1821 = vmatpush2.bf16.msra.mxu0 0
    %1822 = vmatprep.subr.bf16.mxu0 0
    %1823 = vmatpush2.bf16.msra.mxu0 0
    %1824 = vmatprep.subr.bf16.mxu0 0
    %1825 = vmatpush2.bf16.msra.mxu0 0
    %1826 = vmatprep.subr.bf16.mxu0 0
    %1827 = vmatpush2.bf16.msra.mxu0 0
    %1828 = vmatprep.mubr.bf16.mxu0 0
    %1829 = vmatmul.mubr.bf16.gmra.mxu0 %v1791
    %v1830 = vpop.f32.mrf.mxu0
    %v1831 = vadd.f32 0.0, %v1830
    %v1832 = vpop.f32.mrf.mxu0
    %v1833 = vpop.f32.mrf.mxu0
    %v1834 = vpop.f32.mrf.mxu0
    %1835 = vdwg.mxu0
    %v1837 = vsel %vm1186, %v1647, 0
    %v1840 = vsel %vm1654, %v1182, 0
    %1842 = vmatprep.subr.bf16.mxu0 0
    %1843 = vmatpush1.bf16.msra.mxu0 0
    %1844 = vmatprep.subr.bf16.mxu0 0
    %1845 = vmatpush1.bf16.msra.mxu0 0
    %1846 = vmatprep.subr.bf16.mxu0 0
    %1847 = vmatpush1.bf16.msra.mxu0 0
    %1848 = vmatprep.subr.bf16.mxu0 0
    %1849 = vmatpush1.bf16.msra.mxu0 0
    %1850 = vmatprep.subr.bf16.mxu0 0
    %1851 = vmatpush1.bf16.msra.mxu0 0
    %1852 = vmatprep.subr.bf16.mxu0 0
    %1853 = vmatpush1.bf16.msra.mxu0 0
    %1854 = vmatprep.subr.bf16.mxu0 0
    %1855 = vmatpush1.bf16.msra.mxu0 0
    %1856 = vmatprep.subr.bf16.mxu0 0
    %1857 = vmatpush1.bf16.msra.mxu0 %v1840
    %1858 = vmatprep.subr.bf16.mxu0 0
    %1859 = vmatpush2.bf16.msra.mxu0 0
    %1860 = vmatprep.subr.bf16.mxu0 0
    %1861 = vmatpush2.bf16.msra.mxu0 0
    %1862 = vmatprep.subr.bf16.mxu0 0
    %1863 = vmatpush2.bf16.msra.mxu0 0
    %1864 = vmatprep.subr.bf16.mxu0 0
    %1865 = vmatpush2.bf16.msra.mxu0 0
    %1866 = vmatprep.subr.bf16.mxu0 0
    %1867 = vmatpush2.bf16.msra.mxu0 0
    %1868 = vmatprep.subr.bf16.mxu0 0
    %1869 = vmatpush2.bf16.msra.mxu0 0
    %1870 = vmatprep.subr.bf16.mxu0 0
    %1871 = vmatpush2.bf16.msra.mxu0 0
    %1872 = vmatprep.subr.bf16.mxu0 0
    %1873 = vmatpush2.bf16.msra.mxu0 0
    %1874 = vmatprep.mubr.bf16.mxu0 0
    %1875 = vmatmul.mubr.bf16.gmra.mxu0 %v1837
    %v1876 = vpop.f32.mrf.mxu0
    %v1877 = vadd.f32 0.0, %v1876
    %v1878 = vpop.f32.mrf.mxu0
    %v1879 = vpop.f32.mrf.mxu0
    %v1880 = vpop.f32.mrf.mxu0
    %1881 = vdwg.mxu0
    %v1883 = vsel %vm1186, %v1648, 0
    %v1886 = vsel %vm1654, %v1183, 0
    %1888 = vmatprep.subr.bf16.mxu0 0
    %1889 = vmatpush1.bf16.msra.mxu0 0
    %1890 = vmatprep.subr.bf16.mxu0 0
    %1891 = vmatpush1.bf16.msra.mxu0 0
    %1892 = vmatprep.subr.bf16.mxu0 0
    %1893 = vmatpush1.bf16.msra.mxu0 0
    %1894 = vmatprep.subr.bf16.mxu0 0
    %1895 = vmatpush1.bf16.msra.mxu0 0
    %1896 = vmatprep.subr.bf16.mxu0 0
    %1897 = vmatpush1.bf16.msra.mxu0 0
    %1898 = vmatprep.subr.bf16.mxu0 0
    %1899 = vmatpush1.bf16.msra.mxu0 0
    %1900 = vmatprep.subr.bf16.mxu0 0
    %1901 = vmatpush1.bf16.msra.mxu0 0
    %1902 = vmatprep.subr.bf16.mxu0 0
    %1903 = vmatpush1.bf16.msra.mxu0 %v1886
    %1904 = vmatprep.subr.bf16.mxu0 0
    %1905 = vmatpush2.bf16.msra.mxu0 0
    %1906 = vmatprep.subr.bf16.mxu0 0
    %1907 = vmatpush2.bf16.msra.mxu0 0
    %1908 = vmatprep.subr.bf16.mxu0 0
    %1909 = vmatpush2.bf16.msra.mxu0 0
    %1910 = vmatprep.subr.bf16.mxu0 0
    %1911 = vmatpush2.bf16.msra.mxu0 0
    %1912 = vmatprep.subr.bf16.mxu0 0
    %1913 = vmatpush2.bf16.msra.mxu0 0
    %1914 = vmatprep.subr.bf16.mxu0 0
    %1915 = vmatpush2.bf16.msra.mxu0 0
    %1916 = vmatprep.subr.bf16.mxu0 0
    %1917 = vmatpush2.bf16.msra.mxu0 0
    %1918 = vmatprep.subr.bf16.mxu0 0
    %1919 = vmatpush2.bf16.msra.mxu0 0
    %1920 = vmatprep.mubr.bf16.mxu0 0
    %1921 = vmatmul.mubr.bf16.gmra.mxu0 %v1883
    %v1922 = vpop.f32.mrf.mxu0
    %v1923 = vadd.f32 0.0, %v1922
    %v1924 = vpop.f32.mrf.mxu0
    %v1925 = vpop.f32.mrf.mxu0
    %v1926 = vpop.f32.mrf.mxu0
    %1927 = vdwg.mxu0
    %v1929 = vsel %vm1186, %v1649, 0
    %v1932 = vsel %vm1654, %v1184, 0
    %1934 = vmatprep.subr.bf16.mxu0 0
    %1935 = vmatpush1.bf16.msra.mxu0 0
    %1936 = vmatprep.subr.bf16.mxu0 0
    %1937 = vmatpush1.bf16.msra.mxu0 0
    %1938 = vmatprep.subr.bf16.mxu0 0
    %1939 = vmatpush1.bf16.msra.mxu0 0
    %1940 = vmatprep.subr.bf16.mxu0 0
    %1941 = vmatpush1.bf16.msra.mxu0 0
    %1942 = vmatprep.subr.bf16.mxu0 0
    %1943 = vmatpush1.bf16.msra.mxu0 0
    %1944 = vmatprep.subr.bf16.mxu0 0
    %1945 = vmatpush1.bf16.msra.mxu0 0
    %1946 = vmatprep.subr.bf16.mxu0 0
    %1947 = vmatpush1.bf16.msra.mxu0 0
    %1948 = vmatprep.subr.bf16.mxu0 0
    %1949 = vmatpush1.bf16.msra.mxu0 %v1932
    %1950 = vmatprep.subr.bf16.mxu0 0
    %1951 = vmatpush2.bf16.msra.mxu0 0
    %1952 = vmatprep.subr.bf16.mxu0 0
    %1953 = vmatpush2.bf16.msra.mxu0 0
    %1954 = vmatprep.subr.bf16.mxu0 0
    %1955 = vmatpush2.bf16.msra.mxu0 0
    %1956 = vmatprep.subr.bf16.mxu0 0
    %1957 = vmatpush2.bf16.msra.mxu0 0
    %1958 = vmatprep.subr.bf16.mxu0 0
    %1959 = vmatpush2.bf16.msra.mxu0 0
    %1960 = vmatprep.subr.bf16.mxu0 0
    %1961 = vmatpush2.bf16.msra.mxu0 0
    %1962 = vmatprep.subr.bf16.mxu0 0
    %1963 = vmatpush2.bf16.msra.mxu0 0
    %1964 = vmatprep.subr.bf16.mxu0 0
    %1965 = vmatpush2.bf16.msra.mxu0 0
    %1966 = vmatprep.mubr.bf16.mxu0 0
    %1967 = vmatmul.mubr.bf16.gmra.mxu0 %v1929
    %v1968 = vpop.f32.mrf.mxu0
    %v1969 = vadd.f32 0.0, %v1968
    %v1970 = vpop.f32.mrf.mxu0
    %v1971 = vpop.f32.mrf.mxu0
    %v1972 = vpop.f32.mrf.mxu0
    %1973 = vdwg.mxu0
    %v1975 = vsel %vm1186, %v1650, 0
    %v1978 = vsel %vm1654, %v1185, 0
    %1980 = vmatprep.subr.bf16.mxu0 0
    %1981 = vmatpush1.bf16.msra.mxu0 0
    %1982 = vmatprep.subr.bf16.mxu0 0
    %1983 = vmatpush1.bf16.msra.mxu0 0
    %1984 = vmatprep.subr.bf16.mxu0 0
    %1985 = vmatpush1.bf16.msra.mxu0 0
    %1986 = vmatprep.subr.bf16.mxu0 0
    %1987 = vmatpush1.bf16.msra.mxu0 0
    %1988 = vmatprep.subr.bf16.mxu0 0
    %1989 = vmatpush1.bf16.msra.mxu0 0
    %1990 = vmatprep.subr.bf16.mxu0 0
    %1991 = vmatpush1.bf16.msra.mxu0 0
    %1992 = vmatprep.subr.bf16.mxu0 0
    %1993 = vmatpush1.bf16.msra.mxu0 0
    %1994 = vmatprep.subr.bf16.mxu0 0
    %1995 = vmatpush1.bf16.msra.mxu0 %v1978
    %1996 = vmatprep.subr.bf16.mxu0 0
    %1997 = vmatpush2.bf16.msra.mxu0 0
    %1998 = vmatprep.subr.bf16.mxu0 0
    %1999 = vmatpush2.bf16.msra.mxu0 0
    %2000 = vmatprep.subr.bf16.mxu0 0
    %2001 = vmatpush2.bf16.msra.mxu0 0
    %2002 = vmatprep.subr.bf16.mxu0 0
    %2003 = vmatpush2.bf16.msra.mxu0 0
    %2004 = vmatprep.subr.bf16.mxu0 0
    %2005 = vmatpush2.bf16.msra.mxu0 0
    %2006 = vmatprep.subr.bf16.mxu0 0
    %2007 = vmatpush2.bf16.msra.mxu0 0
    %2008 = vmatprep.subr.bf16.mxu0 0
    %2009 = vmatpush2.bf16.msra.mxu0 0
    %2010 = vmatprep.subr.bf16.mxu0 0
    %2011 = vmatpush2.bf16.msra.mxu0 0
    %2012 = vmatprep.mubr.bf16.mxu0 0
    %2013 = vmatmul.mubr.bf16.gmra.mxu0 %v1975
    %v2014 = vpop.f32.mrf.mxu0
    %v2015 = vadd.f32 0.0, %v2014
    %v2016 = vpop.f32.mrf.mxu0
    %v2017 = vpop.f32.mrf.mxu0
    %v2018 = vpop.f32.mrf.mxu0
    %2019 = vdwg.mxu0
    %v2020 = vcombine.low %v1693, %v1877
    %v2021 = vcombine.high %v1693, %v1877
    %v2023 = vunpack.c.l.s4 1983009808
    %v2024 = vunpack.c.0.s8 %v2023
    %v2025 = vlaneseq
    %v2026 = vshrl.u32 %v2025, 7
    %v2027 = vsub.s32 %v2024, %v2026
    %v2028 = vrot.slane %v2020, %v2027
    %v2030 = vunpack.c.l.s4 1983009808
    %v2031 = vunpack.c.0.s8 %v2030
    %v2032 = vlaneseq
    %v2033 = vshrl.u32 %v2032, 7
    %v2034 = vsub.s32 %v2031, %v2033
    %v2035 = vrot.slane %v2021, %v2034
    %v2036 = vcombine.low %v1785, %v1969
    %v2037 = vcombine.high %v1785, %v1969
    %v2039 = vunpack.c.l.s4 1983009808
    %v2040 = vunpack.c.0.s8 %v2039
    %v2041 = vlaneseq
    %v2042 = vshrl.u32 %v2041, 7
    %v2043 = vsub.s32 %v2040, %v2042
    %v2044 = vrot.slane %v2036, %v2043
    %v2046 = vunpack.c.l.s4 1983009808
    %v2047 = vunpack.c.0.s8 %v2046
    %v2048 = vlaneseq
    %v2049 = vshrl.u32 %v2048, 7
    %v2050 = vsub.s32 %v2047, %v2049
    %v2051 = vrot.slane %v2037, %v2050
    %v2052 = vcombine.low %v2028, %v2044
    %v2053 = vcombine.high %v2028, %v2044
    %v2055 = vunpack.c.l.s4 1934713408
    %v2056 = vunpack.c.0.s8 %v2055
    %v2057 = vlaneseq
    %v2058 = vshrl.u32 %v2057, 7
    %v2059 = vsub.s32 %v2056, %v2058
    %v2060 = vrot.slane %v2052, %v2059
    %v2062 = vunpack.c.l.s4 1934713408
    %v2063 = vunpack.c.0.s8 %v2062
    %v2064 = vlaneseq
    %v2065 = vshrl.u32 %v2064, 7
    %v2066 = vsub.s32 %v2063, %v2065
    %v2067 = vrot.slane %v2053, %v2066
    %v2068 = vcombine.low %v2035, %v2051
    %v2069 = vcombine.high %v2035, %v2051
    %v2071 = vunpack.c.l.s4 1934713408
    %v2072 = vunpack.c.0.s8 %v2071
    %v2073 = vlaneseq
    %v2074 = vshrl.u32 %v2073, 7
    %v2075 = vsub.s32 %v2072, %v2074
    %v2076 = vrot.slane %v2068, %v2075
    %v2078 = vunpack.c.l.s4 1934713408
    %v2079 = vunpack.c.0.s8 %v2078
    %v2080 = vlaneseq
    %v2081 = vshrl.u32 %v2080, 7
    %v2082 = vsub.s32 %v2079, %v2081
    %v2083 = vrot.slane %v2069, %v2082
    %v2084 = vcombine.high %v2060, 0.0
    %v2085 = vcombine.high %v2067, 0.0
    %v2086 = vcombine.high %v2076, 0.0
    %v2087 = vcombine.high %v2083, 0.0
    %v2088 = vcombine.low %v1739, %v1923
    %v2089 = vcombine.high %v1739, %v1923
    %v2091 = vunpack.c.l.s4 1983009808
    %v2092 = vunpack.c.0.s8 %v2091
    %v2093 = vlaneseq
    %v2094 = vshrl.u32 %v2093, 7
    %v2095 = vsub.s32 %v2092, %v2094
    %v2096 = vrot.slane %v2088, %v2095
    %v2098 = vunpack.c.l.s4 1983009808
    %v2099 = vunpack.c.0.s8 %v2098
    %v2100 = vlaneseq
    %v2101 = vshrl.u32 %v2100, 7
    %v2102 = vsub.s32 %v2099, %v2101
    %v2103 = vrot.slane %v2089, %v2102
    %v2104 = vcombine.low %v1831, %v2015
    %v2105 = vcombine.high %v1831, %v2015
    %v2107 = vunpack.c.l.s4 1983009808
    %v2108 = vunpack.c.0.s8 %v2107
    %v2109 = vlaneseq
    %v2110 = vshrl.u32 %v2109, 7
    %v2111 = vsub.s32 %v2108, %v2110
    %v2112 = vrot.slane %v2104, %v2111
    %v2114 = vunpack.c.l.s4 1983009808
    %v2115 = vunpack.c.0.s8 %v2114
    %v2116 = vlaneseq
    %v2117 = vshrl.u32 %v2116, 7
    %v2118 = vsub.s32 %v2115, %v2117
    %v2119 = vrot.slane %v2105, %v2118
    %v2120 = vcombine.low %v2096, %v2112
    %v2121 = vcombine.high %v2096, %v2112
    %v2123 = vunpack.c.l.s4 1934713408
    %v2124 = vunpack.c.0.s8 %v2123
    %v2125 = vlaneseq
    %v2126 = vshrl.u32 %v2125, 7
    %v2127 = vsub.s32 %v2124, %v2126
    %v2128 = vrot.slane %v2120, %v2127
    %v2130 = vunpack.c.l.s4 1934713408
    %v2131 = vunpack.c.0.s8 %v2130
    %v2132 = vlaneseq
    %v2133 = vshrl.u32 %v2132, 7
    %v2134 = vsub.s32 %v2131, %v2133
    %v2135 = vrot.slane %v2121, %v2134
    %v2136 = vcombine.low %v2103, %v2119
    %v2137 = vcombine.high %v2103, %v2119
    %v2139 = vunpack.c.l.s4 1934713408
    %v2140 = vunpack.c.0.s8 %v2139
    %v2141 = vlaneseq
    %v2142 = vshrl.u32 %v2141, 7
    %v2143 = vsub.s32 %v2140, %v2142
    %v2144 = vrot.slane %v2136, %v2143
    %v2146 = vunpack.c.l.s4 1934713408
    %v2147 = vunpack.c.0.s8 %v2146
    %v2148 = vlaneseq
    %v2149 = vshrl.u32 %v2148, 7
    %v2150 = vsub.s32 %v2147, %v2149
    %v2151 = vrot.slane %v2137, %v2150
    %v2152 = vcombine.high %v2128, 0.0
    %v2153 = vcombine.high %v2135, 0.0
    %v2154 = vcombine.high %v2144, 0.0
    %v2155 = vcombine.high %v2151, 0.0
    %v2156 = vcombine.low %v2060, %v2067
    %v2158 = vunpack.c.l.s4 1983009808
    %v2159 = vunpack.c.0.s8 %v2158
    %v2160 = vlaneseq
    %v2161 = vshrl.u32 %v2160, 7
    %v2162 = vsub.s32 %v2159, %v2161
    %v2163 = vrot.slane %v2156, %v2162
    %v2164 = vcombine.low %v2084, %v2085
    %v2166 = vunpack.c.l.s4 1983009808
    %v2167 = vunpack.c.0.s8 %v2166
    %v2168 = vlaneseq
    %v2169 = vshrl.u32 %v2168, 7
    %v2170 = vsub.s32 %v2167, %v2169
    %v2171 = vrot.slane %v2164, %v2170
    %v2172 = vcombine.low %v2076, %v2083
    %v2174 = vunpack.c.l.s4 1983009808
    %v2175 = vunpack.c.0.s8 %v2174
    %v2176 = vlaneseq
    %v2177 = vshrl.u32 %v2176, 7
    %v2178 = vsub.s32 %v2175, %v2177
    %v2179 = vrot.slane %v2172, %v2178
    %v2180 = vcombine.low %v2086, %v2087
    %v2182 = vunpack.c.l.s4 1983009808
    %v2183 = vunpack.c.0.s8 %v2182
    %v2184 = vlaneseq
    %v2185 = vshrl.u32 %v2184, 7
    %v2186 = vsub.s32 %v2183, %v2185
    %v2187 = vrot.slane %v2180, %v2186
    %v2188 = vcombine.low %v2163, %v2171
    %v2189 = vcombine.high %v2163, %v2171
    %v2191 = vunpack.c.l.s4 1934713408
    %v2192 = vunpack.c.0.s8 %v2191
    %v2193 = vlaneseq
    %v2194 = vshrl.u32 %v2193, 7
    %v2195 = vsub.s32 %v2192, %v2194
    %v2196 = vrot.slane %v2188, %v2195
    %v2198 = vunpack.c.l.s4 1934713408
    %v2199 = vunpack.c.0.s8 %v2198
    %v2200 = vlaneseq
    %v2201 = vshrl.u32 %v2200, 7
    %v2202 = vsub.s32 %v2199, %v2201
    %v2203 = vrot.slane %v2189, %v2202
    %v2204 = vcombine.low %v2179, %v2187
    %v2205 = vcombine.high %v2179, %v2187
    %v2207 = vunpack.c.l.s4 1934713408
    %v2208 = vunpack.c.0.s8 %v2207
    %v2209 = vlaneseq
    %v2210 = vshrl.u32 %v2209, 7
    %v2211 = vsub.s32 %v2208, %v2210
    %v2212 = vrot.slane %v2204, %v2211
    %v2214 = vunpack.c.l.s4 1934713408
    %v2215 = vunpack.c.0.s8 %v2214
    %v2216 = vlaneseq
    %v2217 = vshrl.u32 %v2216, 7
    %v2218 = vsub.s32 %v2215, %v2217
    %v2219 = vrot.slane %v2205, %v2218
    %v2220 = vcombine.low %v2196, %v2212
    %v2221 = vcombine.high %v2196, %v2212
    %v2222 = vcombine.low %v2203, %v2219
    %v2223 = vcombine.high %v2203, %v2219
    %v2224 = vcombine.low %v2128, %v2135
    %v2226 = vunpack.c.l.s4 1983009808
    %v2227 = vunpack.c.0.s8 %v2226
    %v2228 = vlaneseq
    %v2229 = vshrl.u32 %v2228, 7
    %v2230 = vsub.s32 %v2227, %v2229
    %v2231 = vrot.slane %v2224, %v2230
    %v2232 = vcombine.low %v2152, %v2153
    %v2234 = vunpack.c.l.s4 1983009808
    %v2235 = vunpack.c.0.s8 %v2234
    %v2236 = vlaneseq
    %v2237 = vshrl.u32 %v2236, 7
    %v2238 = vsub.s32 %v2235, %v2237
    %v2239 = vrot.slane %v2232, %v2238
    %v2240 = vcombine.low %v2144, %v2151
    %v2242 = vunpack.c.l.s4 1983009808
    %v2243 = vunpack.c.0.s8 %v2242
    %v2244 = vlaneseq
    %v2245 = vshrl.u32 %v2244, 7
    %v2246 = vsub.s32 %v2243, %v2245
    %v2247 = vrot.slane %v2240, %v2246
    %v2248 = vcombine.low %v2154, %v2155
    %v2250 = vunpack.c.l.s4 1983009808
    %v2251 = vunpack.c.0.s8 %v2250
    %v2252 = vlaneseq
    %v2253 = vshrl.u32 %v2252, 7
    %v2254 = vsub.s32 %v2251, %v2253
    %v2255 = vrot.slane %v2248, %v2254
    %v2256 = vcombine.low %v2231, %v2239
    %v2257 = vcombine.high %v2231, %v2239
    %v2259 = vunpack.c.l.s4 1934713408
    %v2260 = vunpack.c.0.s8 %v2259
    %v2261 = vlaneseq
    %v2262 = vshrl.u32 %v2261, 7
    %v2263 = vsub.s32 %v2260, %v2262
    %v2264 = vrot.slane %v2256, %v2263
    %v2266 = vunpack.c.l.s4 1934713408
    %v2267 = vunpack.c.0.s8 %v2266
    %v2268 = vlaneseq
    %v2269 = vshrl.u32 %v2268, 7
    %v2270 = vsub.s32 %v2267, %v2269
    %v2271 = vrot.slane %v2257, %v2270
    %v2272 = vcombine.low %v2247, %v2255
    %v2273 = vcombine.high %v2247, %v2255
    %v2275 = vunpack.c.l.s4 1934713408
    %v2276 = vunpack.c.0.s8 %v2275
    %v2277 = vlaneseq
    %v2278 = vshrl.u32 %v2277, 7
    %v2279 = vsub.s32 %v2276, %v2278
    %v2280 = vrot.slane %v2272, %v2279
    %v2282 = vunpack.c.l.s4 1934713408
    %v2283 = vunpack.c.0.s8 %v2282
    %v2284 = vlaneseq
    %v2285 = vshrl.u32 %v2284, 7
    %v2286 = vsub.s32 %v2283, %v2285
    %v2287 = vrot.slane %v2273, %v2286
    %v2288 = vcombine.low %v2264, %v2280
    %v2289 = vcombine.high %v2264, %v2280
    %v2290 = vcombine.low %v2271, %v2287
    %v2291 = vcombine.high %v2271, %v2287
    %2294 = vrot.lane.b32.xlu0 %v2221, 8
    %v2295 = vpop.permute.xlu0 %2294
    %2296 = vrot.lane.b32.xlu0 %v2289, 8
    %v2297 = vpop.permute.xlu0 %2296
    %2302 = vrot.lane.b32.xlu0 %v2222, 16
    %v2303 = vpop.permute.xlu0 %2302
    %2304 = vrot.lane.b32.xlu0 %v2290, 16
    %v2305 = vpop.permute.xlu0 %2304
    %2310 = vrot.lane.b32.xlu0 %v2223, 24
    %v2311 = vpop.permute.xlu0 %2310
    %2312 = vrot.lane.b32.xlu0 %v2291, 24
    %v2313 = vpop.permute.xlu0 %2312
    %v2316 = vsel %vm1186, %v2220, %v2295
    %v2317 = vsel %vm1186, %v2288, %v2297
    %vm2318 = vcmask 130048
    %v2319 = vsel %vm2318, %v2316, %v2303
    %v2320 = vsel %vm2318, %v2317, %v2305
    %vm2321 = vcmask 195584
    %v2322 = vsel %vm2321, %v2319, %v2311
    %v2323 = vsel %vm2321, %v2320, %v2313
    %v2324 = vpack.c.bf16 %v2323, %v2322
    %v2325 = vld [vmem:[#allocation5 + $0x1] sm:$0x1]
    %v2326 = vlaneseq
    %v2327 = vshrl.u32 %v2326, 7
    %v2328 = vsub.s32 0, %v2327
    %v2329 = vrot.slane %v2325, %v2328
    %v2334 = vunpack.c.l.b16 %v144
    %v2335 = vunpack.c.l.b16 %v145
    %v2336 = vunpack.c.l.b16 %v146
    %v2337 = vunpack.c.l.b16 %v147
    %v2338 = vpack.c.b16 %v2335, %v2334
    %v2339 = vpack.c.b16 %v2337, %v2336
    %v2343 = vsel %vm162, %v2324, 0
    %2345 = vmatprep.subr.bf16.mxu0 0
    %2346 = vmatpush1.bf16.msra.mxu0 0
    %2347 = vmatprep.subr.bf16.mxu0 0
    %2348 = vmatpush1.bf16.msra.mxu0 0
    %2349 = vmatprep.subr.bf16.mxu0 0
    %2350 = vmatpush1.bf16.msra.mxu0 0
    %2351 = vmatprep.subr.bf16.mxu0 0
    %2352 = vmatpush1.bf16.msra.mxu0 0
    %2353 = vmatprep.subr.bf16.mxu0 0
    %2354 = vmatpush1.bf16.msra.mxu0 0
    %2355 = vmatprep.subr.bf16.mxu0 0
    %2356 = vmatpush1.bf16.msra.mxu0 0
    %2357 = vmatprep.subr.bf16.mxu0 0
    %2358 = vmatpush1.bf16.msra.mxu0 %v2339
    %2359 = vmatprep.subr.bf16.mxu0 0
    %2360 = vmatpush1.bf16.msra.mxu0 %v2338
    %2361 = vmatprep.subr.bf16.mxu0 0
    %2362 = vmatpush2.bf16.msra.mxu0 0
    %2363 = vmatprep.subr.bf16.mxu0 0
    %2364 = vmatpush2.bf16.msra.mxu0 0
    %2365 = vmatprep.subr.bf16.mxu0 0
    %2366 = vmatpush2.bf16.msra.mxu0 0
    %2367 = vmatprep.subr.bf16.mxu0 0
    %2368 = vmatpush2.bf16.msra.mxu0 0
    %2369 = vmatprep.subr.bf16.mxu0 0
    %2370 = vmatpush2.bf16.msra.mxu0 0
    %2371 = vmatprep.subr.bf16.mxu0 0
    %2372 = vmatpush2.bf16.msra.mxu0 0
    %2373 = vmatprep.subr.bf16.mxu0 0
    %2374 = vmatpush2.bf16.msra.mxu0 0
    %2375 = vmatprep.subr.bf16.mxu0 0
    %2376 = vmatpush2.bf16.msra.mxu0 0
    %2377 = vmatprep.mubr.bf16.mxu0 0
    %2378 = vmatmul.mubr.bf16.gmra.mxu0 %v2343
    %v2379 = vpop.f32.mrf.mxu0
    %v2380 = vadd.f32 %v2329, %v2379
    %v2381 = vpop.f32.mrf.mxu0
    %v2382 = vpop.f32.mrf.mxu0
    %v2383 = vadd.f32 %v2329, %v2382
    %v2384 = vpop.f32.mrf.mxu0
    %2385 = vdwg.mxu0
    %v2386 = vadd.f32 %v47, %v2380
    %v2387 = vadd.f32 %v48, %v2383
    %v2388 = vld [vmem:[#allocation5 + $0x4] sm:$0x1]
    %v2389 = vld [vmem:[#allocation5 + $0x5] sm:$0x1]
    %v2390 = vsel %vm162, %v2386, 0.0
    %2391 = vadd.xlane.f32.xlu0 %v2390
    %v2392 = vpop.xlane.xlu0 %2391
    %v2393 = vsel %vm162, %v2387, 0.0
    %2394 = vadd.xlane.f32.xlu0 %v2393
    %v2395 = vpop.xlane.xlu0 %2394
    %v2396 = vmul.f32 %v2392, %v169
    %v2397 = vmul.f32 %v2395, %v169
    %v2398 = vsub.f32 %v2386, %v2396
    %v2399 = vsub.f32 %v2387, %v2397
    %v2400 = vmul.f32 %v2398, %v2398
    %v2401 = vmul.f32 %v2399, %v2399
    %v2402 = vsel %vm162, %v2400, 0.0
    %2403 = vadd.xlane.f32.xlu0 %v2402
    %v2404 = vpop.xlane.xlu0 %2403
    %v2405 = vsel %vm162, %v2401, 0.0
    %2406 = vadd.xlane.f32.xlu0 %v2405
    %v2407 = vpop.xlane.xlu0 %2406
    %v2408 = vmul.f32 %v2404, 0.032258064
    %v2409 = vmul.f32 %v2407, 0.032258064
    %v2410 = vrsqrt.pop %v2408
    %v2411 = vmul.f32 %v2408, %v2410
    %vm2412 = vcmp.eq.f32.partialorder %v2408, inf
    %v2413 = vsel %vm2412, %v2408, %v2411
    %vm2414 = vcmp.eq.f32.partialorder %v2408, 0.0
    %v2415 = vand.u32 %v2408, 2147483648
    %v2416 = vsel %vm2414, %v2415, %v2413
    %v2417 = vrsqrt.pop %v2409
    %v2418 = vmul.f32 %v2409, %v2417
    %vm2419 = vcmp.eq.f32.partialorder %v2409, inf
    %v2420 = vsel %vm2419, %v2409, %v2418
    %vm2421 = vcmp.eq.f32.partialorder %v2409, 0.0
    %v2422 = vand.u32 %v2409, 2147483648
    %v2423 = vsel %vm2421, %v2422, %v2420
    %v2424 = vadd.f32 %v2416, 1e-06
    %v2425 = vadd.f32 %v2423, 1e-06
    %v2426 = vrcp.pop %v2424
    %v2427 = vrcp.pop %v2425
    %v2428 = vlaneseq
    %v2429 = vshrl.u32 %v2428, 7
    %v2430 = vsub.s32 0, %v2429
    %v2431 = vrot.slane %v2388, %v2430
    %v2432 = vmul.f32 %v2431, %v2398
    %v2433 = vmul.f32 %v2431, %v2399
    %v2434 = vmul.f32 %v2432, %v2426
    %v2435 = vmul.f32 %v2433, %v2427
    %v2436 = vlaneseq
    %v2437 = vshrl.u32 %v2436, 7
    %v2438 = vsub.s32 0, %v2437
    %v2439 = vrot.slane %v2389, %v2438
    %v2440 = vadd.f32 %v2434, %v2439
    %v2441 = vadd.f32 %v2435, %v2439
    %v2442 = vpack.c.bf16 %v2441, %v2440
    %v2443 = vld [vmem:[#allocation5 + $0x6] sm:$0x1]
    %v2444 = vlaneseq
    %v2445 = vshrl.u32 %v2444, 7
    %v2446 = vsub.s32 0, %v2445
    %v2447 = vrot.slane %v2443, %v2446
    %v2452 = vunpack.c.l.b16 %v148
    %v2453 = vunpack.c.l.b16 %v149
    %v2454 = vunpack.c.l.b16 %v150
    %v2455 = vunpack.c.l.b16 %v151
    %v2456 = vpack.c.b16 %v2453, %v2452
    %v2457 = vpack.c.b16 %v2455, %v2454
    %v2461 = vsel %vm162, %v2442, 0
    %2463 = vmatprep.subr.bf16.mxu0 0
    %2464 = vmatpush1.bf16.msra.mxu0 0
    %2465 = vmatprep.subr.bf16.mxu0 0
    %2466 = vmatpush1.bf16.msra.mxu0 0
    %2467 = vmatprep.subr.bf16.mxu0 0
    %2468 = vmatpush1.bf16.msra.mxu0 0
    %2469 = vmatprep.subr.bf16.mxu0 0
    %2470 = vmatpush1.bf16.msra.mxu0 0
    %2471 = vmatprep.subr.bf16.mxu0 0
    %2472 = vmatpush1.bf16.msra.mxu0 0
    %2473 = vmatprep.subr.bf16.mxu0 0
    %2474 = vmatpush1.bf16.msra.mxu0 0
    %2475 = vmatprep.subr.bf16.mxu0 0
    %2476 = vmatpush1.bf16.msra.mxu0 %v2457
    %2477 = vmatprep.subr.bf16.mxu0 0
    %2478 = vmatpush1.bf16.msra.mxu0 %v2456
    %2479 = vmatprep.subr.bf16.mxu0 0
    %2480 = vmatpush2.bf16.msra.mxu0 0
    %2481 = vmatprep.subr.bf16.mxu0 0
    %2482 = vmatpush2.bf16.msra.mxu0 0
    %2483 = vmatprep.subr.bf16.mxu0 0
    %2484 = vmatpush2.bf16.msra.mxu0 0
    %2485 = vmatprep.subr.bf16.mxu0 0
    %2486 = vmatpush2.bf16.msra.mxu0 0
    %2487 = vmatprep.subr.bf16.mxu0 0
    %2488 = vmatpush2.bf16.msra.mxu0 0
    %2489 = vmatprep.subr.bf16.mxu0 0
    %2490 = vmatpush2.bf16.msra.mxu0 0
    %2491 = vmatprep.subr.bf16.mxu0 0
    %2492 = vmatpush2.bf16.msra.mxu0 0
    %2493 = vmatprep.subr.bf16.mxu0 0
    %2494 = vmatpush2.bf16.msra.mxu0 0
    %2495 = vmatprep.mubr.bf16.mxu0 0
    %2496 = vmatmul.mubr.bf16.gmra.mxu0 %v2461
    %v2497 = vpop.f32.mrf.mxu0
    %v2498 = vadd.f32 %v2447, %v2497
    %v2499 = vpop.f32.mrf.mxu0
    %v2500 = vpop.f32.mrf.mxu0
    %v2501 = vadd.f32 %v2447, %v2500
    %v2502 = vpop.f32.mrf.mxu0
    %2503 = vdwg.mxu0
    %v2504 = vmax.f32 %v2498, 0.0
    %v2505 = vmax.f32 %v2501, 0.0
    %v2506 = vpack.c.bf16 %v2505, %v2504
    %v2507 = vld [vmem:[#allocation5 + $0x7] sm:$0x1]
    %v2508 = vlaneseq
    %v2509 = vshrl.u32 %v2508, 7
    %v2510 = vsub.s32 0, %v2509
    %v2511 = vrot.slane %v2507, %v2510
    %v2520 = vunpack.c.l.b16 %v152
    %v2521 = vunpack.c.l.b16 %v153
    %v2522 = vunpack.c.l.b16 %v154
    %v2523 = vunpack.c.l.b16 %v155
    %v2524 = vunpack.c.l.b16 %v156
    %v2525 = vunpack.c.l.b16 %v157
    %v2526 = vunpack.c.l.b16 %v158
    %v2527 = vunpack.c.l.b16 %v159
    %v2528 = vpack.c.b16 %v2521, %v2520
    %v2529 = vpack.c.b16 %v2523, %v2522
    %v2530 = vpack.c.b16 %v2525, %v2524
    %v2531 = vpack.c.b16 %v2527, %v2526
    %vm2536 = vcmask 523264
    %v2538 = vsel %vm2536, %v2506, 0
    %2540 = vmatprep.subr.bf16.mxu0 0
    %2541 = vmatpush1.bf16.msra.mxu0 0
    %2542 = vmatprep.subr.bf16.mxu0 0
    %2543 = vmatpush1.bf16.msra.mxu0 0
    %2544 = vmatprep.subr.bf16.mxu0 0
    %2545 = vmatpush1.bf16.msra.mxu0 0
    %2546 = vmatprep.subr.bf16.mxu0 0
    %2547 = vmatpush1.bf16.msra.mxu0 0
    %2548 = vmatprep.subr.bf16.mxu0 0
    %2549 = vmatpush1.bf16.msra.mxu0 %v2531
    %2550 = vmatprep.subr.bf16.mxu0 0
    %2551 = vmatpush1.bf16.msra.mxu0 %v2530
    %2552 = vmatprep.subr.bf16.mxu0 0
    %2553 = vmatpush1.bf16.msra.mxu0 %v2529
    %2554 = vmatprep.subr.bf16.mxu0 0
    %2555 = vmatpush1.bf16.msra.mxu0 %v2528
    %2556 = vmatprep.subr.bf16.mxu0 0
    %2557 = vmatpush2.bf16.msra.mxu0 0
    %2558 = vmatprep.subr.bf16.mxu0 0
    %2559 = vmatpush2.bf16.msra.mxu0 0
    %2560 = vmatprep.subr.bf16.mxu0 0
    %2561 = vmatpush2.bf16.msra.mxu0 0
    %2562 = vmatprep.subr.bf16.mxu0 0
    %2563 = vmatpush2.bf16.msra.mxu0 0
    %2564 = vmatprep.subr.bf16.mxu0 0
    %2565 = vmatpush2.bf16.msra.mxu0 0
    %2566 = vmatprep.subr.bf16.mxu0 0
    %2567 = vmatpush2.bf16.msra.mxu0 0
    %2568 = vmatprep.subr.bf16.mxu0 0
    %2569 = vmatpush2.bf16.msra.mxu0 0
    %2570 = vmatprep.subr.bf16.mxu0 0
    %2571 = vmatpush2.bf16.msra.mxu0 0
    %2572 = vmatprep.mubr.bf16.mxu0 0
    %2573 = vmatmul.mubr.bf16.gmra.mxu0 %v2538
    %v2574 = vpop.f32.mrf.mxu0
    %v2575 = vadd.f32 %v2511, %v2574
    %v2576 = vpop.f32.mrf.mxu0
    %v2577 = vpop.f32.mrf.mxu0
    %v2578 = vadd.f32 %v2511, %v2577
    %v2579 = vpop.f32.mrf.mxu0
    %2580 = vdwg.mxu0
    %v2581 = vadd.f32 %v2386, %v2575
    %v2582 = vadd.f32 %v2387, %v2578
    %s2583 = scalar_lea.vmem %s1, 48
    %v2584 = vld [vmem:[%s2583] sm:$0xf]
    %v2585 = vld [vmem:[%s2583 + $0xc] sm:$0xf]
    %v2586 = vld [vmem:[%s2583 + $0x18] sm:$0xf]
    %v2587 = vld [vmem:[%s2583 + $0x24] sm:$0xf]
    %v2588 = vld [vmem:[%s2583 + $0x4] sm:$0xf]
    %v2589 = vld [vmem:[%s2583 + $0x10] sm:$0xf]
    %v2590 = vld [vmem:[%s2583 + $0x1c] sm:$0xf]
    %v2591 = vld [vmem:[%s2583 + $0x28] sm:$0xf]
    %v2592 = vld [vmem:[%s2583 + $0x8] sm:$0xf]
    %v2593 = vld [vmem:[%s2583 + $0x14] sm:$0xf]
    %v2594 = vld [vmem:[%s2583 + $0x20] sm:$0xf]
    %v2595 = vld [vmem:[%s2583 + $0x2c] sm:$0xf]
    %s2596 = scalar_lea.vmem %s2, 32
    %v2597 = vld [vmem:[%s2596] sm:$0xf]
    %v2598 = vld [vmem:[%s2596 + $0x4] sm:$0xf]
    %v2599 = vld [vmem:[%s2596 + $0x8] sm:$0xf]
    %v2600 = vld [vmem:[%s2596 + $0xc] sm:$0xf]
    %v2601 = vld [vmem:[%s2596 + $0x10] sm:$0xf]
    %v2602 = vld [vmem:[%s2596 + $0x14] sm:$0xf]
    %v2603 = vld [vmem:[%s2596 + $0x18] sm:$0xf]
    %v2604 = vld [vmem:[%s2596 + $0x1c] sm:$0xf]
    %v2605 = vld [vmem:[#allocation5 + $0xa] sm:$0x1]
    %v2606 = vld [vmem:[#allocation5 + $0xb] sm:$0x1]
    %v2607 = vsel %vm162, %v2581, 0.0
    %2608 = vadd.xlane.f32.xlu0 %v2607
    %v2609 = vpop.xlane.xlu0 %2608
    %v2610 = vsel %vm162, %v2582, 0.0
    %2611 = vadd.xlane.f32.xlu0 %v2610
    %v2612 = vpop.xlane.xlu0 %2611
    %v2613 = vmul.f32 %v2609, %v169
    %v2614 = vmul.f32 %v2612, %v169
    %v2615 = vsub.f32 %v2581, %v2613
    %v2616 = vsub.f32 %v2582, %v2614
    %v2617 = vmul.f32 %v2615, %v2615
    %v2618 = vmul.f32 %v2616, %v2616
    %v2619 = vsel %vm162, %v2617, 0.0
    %2620 = vadd.xlane.f32.xlu0 %v2619
    %v2621 = vpop.xlane.xlu0 %2620
    %v2622 = vsel %vm162, %v2618, 0.0
    %2623 = vadd.xlane.f32.xlu0 %v2622
    %v2624 = vpop.xlane.xlu0 %2623
    %v2625 = vmul.f32 %v2621, 0.032258064
    %v2626 = vmul.f32 %v2624, 0.032258064
    %v2627 = vrsqrt.pop %v2625
    %v2628 = vmul.f32 %v2625, %v2627
    %vm2629 = vcmp.eq.f32.partialorder %v2625, inf
    %v2630 = vsel %vm2629, %v2625, %v2628
    %vm2631 = vcmp.eq.f32.partialorder %v2625, 0.0
    %v2632 = vand.u32 %v2625, 2147483648
    %v2633 = vsel %vm2631, %v2632, %v2630
    %v2634 = vrsqrt.pop %v2626
    %v2635 = vmul.f32 %v2626, %v2634
    %vm2636 = vcmp.eq.f32.partialorder %v2626, inf
    %v2637 = vsel %vm2636, %v2626, %v2635
    %vm2638 = vcmp.eq.f32.partialorder %v2626, 0.0
    %v2639 = vand.u32 %v2626, 2147483648
    %v2640 = vsel %vm2638, %v2639, %v2637
    %v2641 = vadd.f32 %v2633, 1e-06
    %v2642 = vadd.f32 %v2640, 1e-06
    %v2643 = vrcp.pop %v2641
    %v2644 = vrcp.pop %v2642
    %v2645 = vlaneseq
    %v2646 = vshrl.u32 %v2645, 7
    %v2647 = vsub.s32 0, %v2646
    %v2648 = vrot.slane %v2605, %v2647
    %v2649 = vmul.f32 %v2648, %v2615
    %v2650 = vmul.f32 %v2648, %v2616
    %v2651 = vmul.f32 %v2649, %v2643
    %v2652 = vmul.f32 %v2650, %v2644
    %v2653 = vlaneseq
    %v2654 = vshrl.u32 %v2653, 7
    %v2655 = vsub.s32 0, %v2654
    %v2656 = vrot.slane %v2606, %v2655
    %v2657 = vadd.f32 %v2651, %v2656
    %v2658 = vadd.f32 %v2652, %v2656
    %v2659 = vpack.c.bf16 %v2658, %v2657
    %v2660 = vld [vmem:[#allocation5 + $0x8] sm:$0x1]
    %v2661 = vlaneseq
    %v2662 = vshrl.u32 %v2661, 7
    %v2663 = vsub.s32 0, %v2662
    %v2664 = vrot.slane %v2660, %v2663
    %v2669 = vunpack.c.l.b16 %v2584
    %v2670 = vunpack.c.l.b16 %v2585
    %v2671 = vunpack.c.l.b16 %v2586
    %v2672 = vunpack.c.l.b16 %v2587
    %v2673 = vpack.c.b16 %v2670, %v2669
    %v2674 = vpack.c.b16 %v2672, %v2671
    %v2678 = vsel %vm162, %v2659, 0
    %2680 = vmatprep.subr.bf16.mxu0 0
    %2681 = vmatpush1.bf16.msra.mxu0 0
    %2682 = vmatprep.subr.bf16.mxu0 0
    %2683 = vmatpush1.bf16.msra.mxu0 0
    %2684 = vmatprep.subr.bf16.mxu0 0
    %2685 = vmatpush1.bf16.msra.mxu0 0
    %2686 = vmatprep.subr.bf16.mxu0 0
    %2687 = vmatpush1.bf16.msra.mxu0 0
    %2688 = vmatprep.subr.bf16.mxu0 0
    %2689 = vmatpush1.bf16.msra.mxu0 0
    %2690 = vmatprep.subr.bf16.mxu0 0
    %2691 = vmatpush1.bf16.msra.mxu0 0
    %2692 = vmatprep.subr.bf16.mxu0 0
    %2693 = vmatpush1.bf16.msra.mxu0 %v2674
    %2694 = vmatprep.subr.bf16.mxu0 0
    %2695 = vmatpush1.bf16.msra.mxu0 %v2673
    %2696 = vmatprep.subr.bf16.mxu0 0
    %2697 = vmatpush2.bf16.msra.mxu0 0
    %2698 = vmatprep.subr.bf16.mxu0 0
    %2699 = vmatpush2.bf16.msra.mxu0 0
    %2700 = vmatprep.subr.bf16.mxu0 0
    %2701 = vmatpush2.bf16.msra.mxu0 0
    %2702 = vmatprep.subr.bf16.mxu0 0
    %2703 = vmatpush2.bf16.msra.mxu0 0
    %2704 = vmatprep.subr.bf16.mxu0 0
    %2705 = vmatpush2.bf16.msra.mxu0 0
    %2706 = vmatprep.subr.bf16.mxu0 0
    %2707 = vmatpush2.bf16.msra.mxu0 0
    %2708 = vmatprep.subr.bf16.mxu0 0
    %2709 = vmatpush2.bf16.msra.mxu0 0
    %2710 = vmatprep.subr.bf16.mxu0 0
    %2711 = vmatpush2.bf16.msra.mxu0 0
    %2712 = vmatprep.mubr.bf16.mxu0 0
    %2713 = vmatmul.mubr.bf16.gmra.mxu0 %v2678
    %v2714 = vpop.f32.mrf.mxu0
    %v2715 = vadd.f32 %v2664, %v2714
    %v2716 = vpop.f32.mrf.mxu0
    %v2717 = vpop.f32.mrf.mxu0
    %v2718 = vadd.f32 %v2664, %v2717
    %v2719 = vpop.f32.mrf.mxu0
    %2720 = vdwg.mxu0
    %2723 = vrot.lane.b32.xlu0 %v2715, 120
    %v2724 = vpop.permute.xlu0 %2723
    %2725 = vrot.lane.b32.xlu0 %v2718, 120
    %v2726 = vpop.permute.xlu0 %2725
    %2729 = vrot.lane.b32.xlu0 %v2715, 112
    %v2730 = vpop.permute.xlu0 %2729
    %2731 = vrot.lane.b32.xlu0 %v2718, 112
    %v2732 = vpop.permute.xlu0 %2731
    %2735 = vrot.lane.b32.xlu0 %v2715, 104
    %v2736 = vpop.permute.xlu0 %2735
    %2737 = vrot.lane.b32.xlu0 %v2718, 104
    %v2738 = vpop.permute.xlu0 %2737
    %2741 = vrot.lane.b32.xlu0 %v2715, 96
    %v2742 = vpop.permute.xlu0 %2741
    %2743 = vrot.lane.b32.xlu0 %v2718, 96
    %v2744 = vpop.permute.xlu0 %2743
    %2747 = vrot.lane.b32.xlu0 %v2715, 88
    %v2748 = vpop.permute.xlu0 %2747
    %2749 = vrot.lane.b32.xlu0 %v2718, 88
    %v2750 = vpop.permute.xlu0 %2749
    %2753 = vrot.lane.b32.xlu0 %v2715, 80
    %v2754 = vpop.permute.xlu0 %2753
    %2755 = vrot.lane.b32.xlu0 %v2718, 80
    %v2756 = vpop.permute.xlu0 %2755
    %2759 = vrot.lane.b32.xlu0 %v2715, 72
    %v2760 = vpop.permute.xlu0 %2759
    %2761 = vrot.lane.b32.xlu0 %v2718, 72
    %v2762 = vpop.permute.xlu0 %2761
    %2765 = vrot.lane.b32.xlu0 %v2715, 64
    %v2766 = vpop.permute.xlu0 %2765
    %2767 = vrot.lane.b32.xlu0 %v2718, 64
    %v2768 = vpop.permute.xlu0 %2767
    %2771 = vrot.lane.b32.xlu0 %v2715, 56
    %v2772 = vpop.permute.xlu0 %2771
    %2773 = vrot.lane.b32.xlu0 %v2718, 56
    %v2774 = vpop.permute.xlu0 %2773
    %2777 = vrot.lane.b32.xlu0 %v2715, 48
    %v2778 = vpop.permute.xlu0 %2777
    %2779 = vrot.lane.b32.xlu0 %v2718, 48
    %v2780 = vpop.permute.xlu0 %2779
    %2783 = vrot.lane.b32.xlu0 %v2715, 40
    %v2784 = vpop.permute.xlu0 %2783
    %2785 = vrot.lane.b32.xlu0 %v2718, 40
    %v2786 = vpop.permute.xlu0 %2785
    %v2789 = vcombine.low %v2715, %v2730
    %v2790 = vcombine.high %v2715, %v2730
    %v2792 = vunpack.c.l.s4 1983009808
    %v2793 = vunpack.c.0.s8 %v2792
    %v2794 = vlaneseq
    %v2795 = vshrl.u32 %v2794, 7
    %v2796 = vsub.s32 %v2793, %v2795
    %v2797 = vrot.slane %v2789, %v2796
    %v2799 = vunpack.c.l.s4 1983009808
    %v2800 = vunpack.c.0.s8 %v2799
    %v2801 = vlaneseq
    %v2802 = vshrl.u32 %v2801, 7
    %v2803 = vsub.s32 %v2800, %v2802
    %v2804 = vrot.slane %v2790, %v2803
    %v2805 = vcombine.low %v2724, %v2736
    %v2806 = vcombine.high %v2724, %v2736
    %v2808 = vunpack.c.l.s4 1983009808
    %v2809 = vunpack.c.0.s8 %v2808
    %v2810 = vlaneseq
    %v2811 = vshrl.u32 %v2810, 7
    %v2812 = vsub.s32 %v2809, %v2811
    %v2813 = vrot.slane %v2805, %v2812
    %v2815 = vunpack.c.l.s4 1983009808
    %v2816 = vunpack.c.0.s8 %v2815
    %v2817 = vlaneseq
    %v2818 = vshrl.u32 %v2817, 7
    %v2819 = vsub.s32 %v2816, %v2818
    %v2820 = vrot.slane %v2806, %v2819
    %v2821 = vcombine.low %v2742, %v2754
    %v2822 = vcombine.high %v2742, %v2754
    %v2824 = vunpack.c.l.s4 1983009808
    %v2825 = vunpack.c.0.s8 %v2824
    %v2826 = vlaneseq
    %v2827 = vshrl.u32 %v2826, 7
    %v2828 = vsub.s32 %v2825, %v2827
    %v2829 = vrot.slane %v2821, %v2828
    %v2831 = vunpack.c.l.s4 1983009808
    %v2832 = vunpack.c.0.s8 %v2831
    %v2833 = vlaneseq
    %v2834 = vshrl.u32 %v2833, 7
    %v2835 = vsub.s32 %v2832, %v2834
    %v2836 = vrot.slane %v2822, %v2835
    %v2837 = vcombine.low %v2748, %v2760
    %v2838 = vcombine.high %v2748, %v2760
    %v2840 = vunpack.c.l.s4 1983009808
    %v2841 = vunpack.c.0.s8 %v2840
    %v2842 = vlaneseq
    %v2843 = vshrl.u32 %v2842, 7
    %v2844 = vsub.s32 %v2841, %v2843
    %v2845 = vrot.slane %v2837, %v2844
    %v2847 = vunpack.c.l.s4 1983009808
    %v2848 = vunpack.c.0.s8 %v2847
    %v2849 = vlaneseq
    %v2850 = vshrl.u32 %v2849, 7
    %v2851 = vsub.s32 %v2848, %v2850
    %v2852 = vrot.slane %v2838, %v2851
    %v2853 = vcombine.low %v2797, %v2813
    %v2854 = vcombine.high %v2797, %v2813
    %v2856 = vunpack.c.l.s4 1934713408
    %v2857 = vunpack.c.0.s8 %v2856
    %v2858 = vlaneseq
    %v2859 = vshrl.u32 %v2858, 7
    %v2860 = vsub.s32 %v2857, %v2859
    %v2861 = vrot.slane %v2853, %v2860
    %v2863 = vunpack.c.l.s4 1934713408
    %v2864 = vunpack.c.0.s8 %v2863
    %v2865 = vlaneseq
    %v2866 = vshrl.u32 %v2865, 7
    %v2867 = vsub.s32 %v2864, %v2866
    %v2868 = vrot.slane %v2854, %v2867
    %v2869 = vcombine.low %v2804, %v2820
    %v2870 = vcombine.high %v2804, %v2820
    %v2872 = vunpack.c.l.s4 1934713408
    %v2873 = vunpack.c.0.s8 %v2872
    %v2874 = vlaneseq
    %v2875 = vshrl.u32 %v2874, 7
    %v2876 = vsub.s32 %v2873, %v2875
    %v2877 = vrot.slane %v2869, %v2876
    %v2879 = vunpack.c.l.s4 1934713408
    %v2880 = vunpack.c.0.s8 %v2879
    %v2881 = vlaneseq
    %v2882 = vshrl.u32 %v2881, 7
    %v2883 = vsub.s32 %v2880, %v2882
    %v2884 = vrot.slane %v2870, %v2883
    %v2885 = vcombine.low %v2829, %v2845
    %v2886 = vcombine.high %v2829, %v2845
    %v2888 = vunpack.c.l.s4 1934713408
    %v2889 = vunpack.c.0.s8 %v2888
    %v2890 = vlaneseq
    %v2891 = vshrl.u32 %v2890, 7
    %v2892 = vsub.s32 %v2889, %v2891
    %v2893 = vrot.slane %v2885, %v2892
    %v2895 = vunpack.c.l.s4 1934713408
    %v2896 = vunpack.c.0.s8 %v2895
    %v2897 = vlaneseq
    %v2898 = vshrl.u32 %v2897, 7
    %v2899 = vsub.s32 %v2896, %v2898
    %v2900 = vrot.slane %v2886, %v2899
    %v2901 = vcombine.low %v2836, %v2852
    %v2902 = vcombine.high %v2836, %v2852
    %v2904 = vunpack.c.l.s4 1934713408
    %v2905 = vunpack.c.0.s8 %v2904
    %v2906 = vlaneseq
    %v2907 = vshrl.u32 %v2906, 7
    %v2908 = vsub.s32 %v2905, %v2907
    %v2909 = vrot.slane %v2901, %v2908
    %v2911 = vunpack.c.l.s4 1934713408
    %v2912 = vunpack.c.0.s8 %v2911
    %v2913 = vlaneseq
    %v2914 = vshrl.u32 %v2913, 7
    %v2915 = vsub.s32 %v2912, %v2914
    %v2916 = vrot.slane %v2902, %v2915
    %v2917 = vcombine.low %v2861, %v2893
    %v2918 = vcombine.high %v2861, %v2893
    %v2919 = vcombine.low %v2868, %v2900
    %v2920 = vcombine.high %v2868, %v2900
    %v2921 = vcombine.low %v2877, %v2909
    %v2922 = vcombine.high %v2877, %v2909
    %v2923 = vcombine.low %v2884, %v2916
    %v2924 = vcombine.high %v2884, %v2916
    %v2925 = vcombine.low %v2766, %v2778
    %v2926 = vcombine.high %v2766, %v2778
    %v2928 = vunpack.c.l.s4 1983009808
    %v2929 = vunpack.c.0.s8 %v2928
    %v2930 = vlaneseq
    %v2931 = vshrl.u32 %v2930, 7
    %v2932 = vsub.s32 %v2929, %v2931
    %v2933 = vrot.slane %v2925, %v2932
    %v2935 = vunpack.c.l.s4 1983009808
    %v2936 = vunpack.c.0.s8 %v2935
    %v2937 = vlaneseq
    %v2938 = vshrl.u32 %v2937, 7
    %v2939 = vsub.s32 %v2936, %v2938
    %v2940 = vrot.slane %v2926, %v2939
    %v2941 = vcombine.low %v2772, %v2784
    %v2942 = vcombine.high %v2772, %v2784
    %v2944 = vunpack.c.l.s4 1983009808
    %v2945 = vunpack.c.0.s8 %v2944
    %v2946 = vlaneseq
    %v2947 = vshrl.u32 %v2946, 7
    %v2948 = vsub.s32 %v2945, %v2947
    %v2949 = vrot.slane %v2941, %v2948
    %v2951 = vunpack.c.l.s4 1983009808
    %v2952 = vunpack.c.0.s8 %v2951
    %v2953 = vlaneseq
    %v2954 = vshrl.u32 %v2953, 7
    %v2955 = vsub.s32 %v2952, %v2954
    %v2956 = vrot.slane %v2942, %v2955
    %v2957 = vcombine.low %v2933, %v2949
    %v2958 = vcombine.high %v2933, %v2949
    %v2960 = vunpack.c.l.s4 1934713408
    %v2961 = vunpack.c.0.s8 %v2960
    %v2962 = vlaneseq
    %v2963 = vshrl.u32 %v2962, 7
    %v2964 = vsub.s32 %v2961, %v2963
    %v2965 = vrot.slane %v2957, %v2964
    %v2967 = vunpack.c.l.s4 1934713408
    %v2968 = vunpack.c.0.s8 %v2967
    %v2969 = vlaneseq
    %v2970 = vshrl.u32 %v2969, 7
    %v2971 = vsub.s32 %v2968, %v2970
    %v2972 = vrot.slane %v2958, %v2971
    %v2973 = vcombine.low %v2940, %v2956
    %v2974 = vcombine.high %v2940, %v2956
    %v2976 = vunpack.c.l.s4 1934713408
    %v2977 = vunpack.c.0.s8 %v2976
    %v2978 = vlaneseq
    %v2979 = vshrl.u32 %v2978, 7
    %v2980 = vsub.s32 %v2977, %v2979
    %v2981 = vrot.slane %v2973, %v2980
    %v2983 = vunpack.c.l.s4 1934713408
    %v2984 = vunpack.c.0.s8 %v2983
    %v2985 = vlaneseq
    %v2986 = vshrl.u32 %v2985, 7
    %v2987 = vsub.s32 %v2984, %v2986
    %v2988 = vrot.slane %v2974, %v2987
    %v2989 = vcombine.high %v2965, 0.0
    %v2990 = vcombine.high %v2972, 0.0
    %v2991 = vcombine.high %v2981, 0.0
    %v2992 = vcombine.high %v2988, 0.0
    %v2993 = vcombine.low %v2718, %v2732
    %v2994 = vcombine.high %v2718, %v2732
    %v2996 = vunpack.c.l.s4 1983009808
    %v2997 = vunpack.c.0.s8 %v2996
    %v2998 = vlaneseq
    %v2999 = vshrl.u32 %v2998, 7
    %v3000 = vsub.s32 %v2997, %v2999
    %v3001 = vrot.slane %v2993, %v3000
    %v3003 = vunpack.c.l.s4 1983009808
    %v3004 = vunpack.c.0.s8 %v3003
    %v3005 = vlaneseq
    %v3006 = vshrl.u32 %v3005, 7
    %v3007 = vsub.s32 %v3004, %v3006
    %v3008 = vrot.slane %v2994, %v3007
    %v3009 = vcombine.low %v2726, %v2738
    %v3010 = vcombine.high %v2726, %v2738
    %v3012 = vunpack.c.l.s4 1983009808
    %v3013 = vunpack.c.0.s8 %v3012
    %v3014 = vlaneseq
    %v3015 = vshrl.u32 %v3014, 7
    %v3016 = vsub.s32 %v3013, %v3015
    %v3017 = vrot.slane %v3009, %v3016
    %v3019 = vunpack.c.l.s4 1983009808
    %v3020 = vunpack.c.0.s8 %v3019
    %v3021 = vlaneseq
    %v3022 = vshrl.u32 %v3021, 7
    %v3023 = vsub.s32 %v3020, %v3022
    %v3024 = vrot.slane %v3010, %v3023
    %v3025 = vcombine.low %v2744, %v2756
    %v3026 = vcombine.high %v2744, %v2756
    %v3028 = vunpack.c.l.s4 1983009808
    %v3029 = vunpack.c.0.s8 %v3028
    %v3030 = vlaneseq
    %v3031 = vshrl.u32 %v3030, 7
    %v3032 = vsub.s32 %v3029, %v3031
    %v3033 = vrot.slane %v3025, %v3032
    %v3035 = vunpack.c.l.s4 1983009808
    %v3036 = vunpack.c.0.s8 %v3035
    %v3037 = vlaneseq
    %v3038 = vshrl.u32 %v3037, 7
    %v3039 = vsub.s32 %v3036, %v3038
    %v3040 = vrot.slane %v3026, %v3039
    %v3041 = vcombine.low %v2750, %v2762
    %v3042 = vcombine.high %v2750, %v2762
    %v3044 = vunpack.c.l.s4 1983009808
    %v3045 = vunpack.c.0.s8 %v3044
    %v3046 = vlaneseq
    %v3047 = vshrl.u32 %v3046, 7
    %v3048 = vsub.s32 %v3045, %v3047
    %v3049 = vrot.slane %v3041, %v3048
    %v3051 = vunpack.c.l.s4 1983009808
    %v3052 = vunpack.c.0.s8 %v3051
    %v3053 = vlaneseq
    %v3054 = vshrl.u32 %v3053, 7
    %v3055 = vsub.s32 %v3052, %v3054
    %v3056 = vrot.slane %v3042, %v3055
    %v3057 = vcombine.low %v3001, %v3017
    %v3058 = vcombine.high %v3001, %v3017
    %v3060 = vunpack.c.l.s4 1934713408
    %v3061 = vunpack.c.0.s8 %v3060
    %v3062 = vlaneseq
    %v3063 = vshrl.u32 %v3062, 7
    %v3064 = vsub.s32 %v3061, %v3063
    %v3065 = vrot.slane %v3057, %v3064
    %v3067 = vunpack.c.l.s4 1934713408
    %v3068 = vunpack.c.0.s8 %v3067
    %v3069 = vlaneseq
    %v3070 = vshrl.u32 %v3069, 7
    %v3071 = vsub.s32 %v3068, %v3070
    %v3072 = vrot.slane %v3058, %v3071
    %v3073 = vcombine.low %v3008, %v3024
    %v3074 = vcombine.high %v3008, %v3024
    %v3076 = vunpack.c.l.s4 1934713408
    %v3077 = vunpack.c.0.s8 %v3076
    %v3078 = vlaneseq
    %v3079 = vshrl.u32 %v3078, 7
    %v3080 = vsub.s32 %v3077, %v3079
    %v3081 = vrot.slane %v3073, %v3080
    %v3083 = vunpack.c.l.s4 1934713408
    %v3084 = vunpack.c.0.s8 %v3083
    %v3085 = vlaneseq
    %v3086 = vshrl.u32 %v3085, 7
    %v3087 = vsub.s32 %v3084, %v3086
    %v3088 = vrot.slane %v3074, %v3087
    %v3089 = vcombine.low %v3033, %v3049
    %v3090 = vcombine.high %v3033, %v3049
    %v3092 = vunpack.c.l.s4 1934713408
    %v3093 = vunpack.c.0.s8 %v3092
    %v3094 = vlaneseq
    %v3095 = vshrl.u32 %v3094, 7
    %v3096 = vsub.s32 %v3093, %v3095
    %v3097 = vrot.slane %v3089, %v3096
    %v3099 = vunpack.c.l.s4 1934713408
    %v3100 = vunpack.c.0.s8 %v3099
    %v3101 = vlaneseq
    %v3102 = vshrl.u32 %v3101, 7
    %v3103 = vsub.s32 %v3100, %v3102
    %v3104 = vrot.slane %v3090, %v3103
    %v3105 = vcombine.low %v3040, %v3056
    %v3106 = vcombine.high %v3040, %v3056
    %v3108 = vunpack.c.l.s4 1934713408
    %v3109 = vunpack.c.0.s8 %v3108
    %v3110 = vlaneseq
    %v3111 = vshrl.u32 %v3110, 7
    %v3112 = vsub.s32 %v3109, %v3111
    %v3113 = vrot.slane %v3105, %v3112
    %v3115 = vunpack.c.l.s4 1934713408
    %v3116 = vunpack.c.0.s8 %v3115
    %v3117 = vlaneseq
    %v3118 = vshrl.u32 %v3117, 7
    %v3119 = vsub.s32 %v3116, %v3118
    %v3120 = vrot.slane %v3106, %v3119
    %v3121 = vcombine.low %v3065, %v3097
    %v3122 = vcombine.high %v3065, %v3097
    %v3123 = vcombine.low %v3072, %v3104
    %v3124 = vcombine.high %v3072, %v3104
    %v3125 = vcombine.low %v3081, %v3113
    %v3126 = vcombine.high %v3081, %v3113
    %v3127 = vcombine.low %v3088, %v3120
    %v3128 = vcombine.high %v3088, %v3120
    %v3129 = vcombine.low %v2768, %v2780
    %v3130 = vcombine.high %v2768, %v2780
    %v3132 = vunpack.c.l.s4 1983009808
    %v3133 = vunpack.c.0.s8 %v3132
    %v3134 = vlaneseq
    %v3135 = vshrl.u32 %v3134, 7
    %v3136 = vsub.s32 %v3133, %v3135
    %v3137 = vrot.slane %v3129, %v3136
    %v3139 = vunpack.c.l.s4 1983009808
    %v3140 = vunpack.c.0.s8 %v3139
    %v3141 = vlaneseq
    %v3142 = vshrl.u32 %v3141, 7
    %v3143 = vsub.s32 %v3140, %v3142
    %v3144 = vrot.slane %v3130, %v3143
    %v3145 = vcombine.low %v2774, %v2786
    %v3146 = vcombine.high %v2774, %v2786
    %v3148 = vunpack.c.l.s4 1983009808
    %v3149 = vunpack.c.0.s8 %v3148
    %v3150 = vlaneseq
    %v3151 = vshrl.u32 %v3150, 7
    %v3152 = vsub.s32 %v3149, %v3151
    %v3153 = vrot.slane %v3145, %v3152
    %v3155 = vunpack.c.l.s4 1983009808
    %v3156 = vunpack.c.0.s8 %v3155
    %v3157 = vlaneseq
    %v3158 = vshrl.u32 %v3157, 7
    %v3159 = vsub.s32 %v3156, %v3158
    %v3160 = vrot.slane %v3146, %v3159
    %v3161 = vcombine.low %v3137, %v3153
    %v3162 = vcombine.high %v3137, %v3153
    %v3164 = vunpack.c.l.s4 1934713408
    %v3165 = vunpack.c.0.s8 %v3164
    %v3166 = vlaneseq
    %v3167 = vshrl.u32 %v3166, 7
    %v3168 = vsub.s32 %v3165, %v3167
    %v3169 = vrot.slane %v3161, %v3168
    %v3171 = vunpack.c.l.s4 1934713408
    %v3172 = vunpack.c.0.s8 %v3171
    %v3173 = vlaneseq
    %v3174 = vshrl.u32 %v3173, 7
    %v3175 = vsub.s32 %v3172, %v3174
    %v3176 = vrot.slane %v3162, %v3175
    %v3177 = vcombine.low %v3144, %v3160
    %v3178 = vcombine.high %v3144, %v3160
    %v3180 = vunpack.c.l.s4 1934713408
    %v3181 = vunpack.c.0.s8 %v3180
    %v3182 = vlaneseq
    %v3183 = vshrl.u32 %v3182, 7
    %v3184 = vsub.s32 %v3181, %v3183
    %v3185 = vrot.slane %v3177, %v3184
    %v3187 = vunpack.c.l.s4 1934713408
    %v3188 = vunpack.c.0.s8 %v3187
    %v3189 = vlaneseq
    %v3190 = vshrl.u32 %v3189, 7
    %v3191 = vsub.s32 %v3188, %v3190
    %v3192 = vrot.slane %v3178, %v3191
    %v3193 = vcombine.high %v3169, 0.0
    %v3194 = vcombine.high %v3176, 0.0
    %v3195 = vcombine.high %v3185, 0.0
    %v3196 = vcombine.high %v3192, 0.0
    %v3197 = vcombine.low %v2917, %v2919
    %v3198 = vcombine.high %v2917, %v2919
    %v3200 = vunpack.c.l.s4 1983009808
    %v3201 = vunpack.c.0.s8 %v3200
    %v3202 = vlaneseq
    %v3203 = vshrl.u32 %v3202, 7
    %v3204 = vsub.s32 %v3201, %v3203
    %v3205 = vrot.slane %v3197, %v3204
    %v3207 = vunpack.c.l.s4 1983009808
    %v3208 = vunpack.c.0.s8 %v3207
    %v3209 = vlaneseq
    %v3210 = vshrl.u32 %v3209, 7
    %v3211 = vsub.s32 %v3208, %v3210
    %v3212 = vrot.slane %v3198, %v3211
    %v3213 = vcombine.low %v2918, %v2920
    %v3214 = vcombine.high %v2918, %v2920
    %v3216 = vunpack.c.l.s4 1983009808
    %v3217 = vunpack.c.0.s8 %v3216
    %v3218 = vlaneseq
    %v3219 = vshrl.u32 %v3218, 7
    %v3220 = vsub.s32 %v3217, %v3219
    %v3221 = vrot.slane %v3213, %v3220
    %v3223 = vunpack.c.l.s4 1983009808
    %v3224 = vunpack.c.0.s8 %v3223
    %v3225 = vlaneseq
    %v3226 = vshrl.u32 %v3225, 7
    %v3227 = vsub.s32 %v3224, %v3226
    %v3228 = vrot.slane %v3214, %v3227
    %v3229 = vcombine.low %v2921, %v2923
    %v3230 = vcombine.high %v2921, %v2923
    %v3232 = vunpack.c.l.s4 1983009808
    %v3233 = vunpack.c.0.s8 %v3232
    %v3234 = vlaneseq
    %v3235 = vshrl.u32 %v3234, 7
    %v3236 = vsub.s32 %v3233, %v3235
    %v3237 = vrot.slane %v3229, %v3236
    %v3239 = vunpack.c.l.s4 1983009808
    %v3240 = vunpack.c.0.s8 %v3239
    %v3241 = vlaneseq
    %v3242 = vshrl.u32 %v3241, 7
    %v3243 = vsub.s32 %v3240, %v3242
    %v3244 = vrot.slane %v3230, %v3243
    %v3245 = vcombine.low %v2922, %v2924
    %v3246 = vcombine.high %v2922, %v2924
    %v3248 = vunpack.c.l.s4 1983009808
    %v3249 = vunpack.c.0.s8 %v3248
    %v3250 = vlaneseq
    %v3251 = vshrl.u32 %v3250, 7
    %v3252 = vsub.s32 %v3249, %v3251
    %v3253 = vrot.slane %v3245, %v3252
    %v3255 = vunpack.c.l.s4 1983009808
    %v3256 = vunpack.c.0.s8 %v3255
    %v3257 = vlaneseq
    %v3258 = vshrl.u32 %v3257, 7
    %v3259 = vsub.s32 %v3256, %v3258
    %v3260 = vrot.slane %v3246, %v3259
    %v3261 = vcombine.low %v3205, %v3221
    %v3262 = vcombine.high %v3205, %v3221
    %v3264 = vunpack.c.l.s4 1934713408
    %v3265 = vunpack.c.0.s8 %v3264
    %v3266 = vlaneseq
    %v3267 = vshrl.u32 %v3266, 7
    %v3268 = vsub.s32 %v3265, %v3267
    %v3269 = vrot.slane %v3261, %v3268
    %v3271 = vunpack.c.l.s4 1934713408
    %v3272 = vunpack.c.0.s8 %v3271
    %v3273 = vlaneseq
    %v3274 = vshrl.u32 %v3273, 7
    %v3275 = vsub.s32 %v3272, %v3274
    %v3276 = vrot.slane %v3262, %v3275
    %v3277 = vcombine.low %v3212, %v3228
    %v3278 = vcombine.high %v3212, %v3228
    %v3280 = vunpack.c.l.s4 1934713408
    %v3281 = vunpack.c.0.s8 %v3280
    %v3282 = vlaneseq
    %v3283 = vshrl.u32 %v3282, 7
    %v3284 = vsub.s32 %v3281, %v3283
    %v3285 = vrot.slane %v3277, %v3284
    %v3287 = vunpack.c.l.s4 1934713408
    %v3288 = vunpack.c.0.s8 %v3287
    %v3289 = vlaneseq
    %v3290 = vshrl.u32 %v3289, 7
    %v3291 = vsub.s32 %v3288, %v3290
    %v3292 = vrot.slane %v3278, %v3291
    %v3293 = vcombine.low %v3237, %v3253
    %v3294 = vcombine.high %v3237, %v3253
    %v3296 = vunpack.c.l.s4 1934713408
    %v3297 = vunpack.c.0.s8 %v3296
    %v3298 = vlaneseq
    %v3299 = vshrl.u32 %v3298, 7
    %v3300 = vsub.s32 %v3297, %v3299
    %v3301 = vrot.slane %v3293, %v3300
    %v3303 = vunpack.c.l.s4 1934713408
    %v3304 = vunpack.c.0.s8 %v3303
    %v3305 = vlaneseq
    %v3306 = vshrl.u32 %v3305, 7
    %v3307 = vsub.s32 %v3304, %v3306
    %v3308 = vrot.slane %v3294, %v3307
    %v3309 = vcombine.low %v3244, %v3260
    %v3310 = vcombine.high %v3244, %v3260
    %v3312 = vunpack.c.l.s4 1934713408
    %v3313 = vunpack.c.0.s8 %v3312
    %v3314 = vlaneseq
    %v3315 = vshrl.u32 %v3314, 7
    %v3316 = vsub.s32 %v3313, %v3315
    %v3317 = vrot.slane %v3309, %v3316
    %v3319 = vunpack.c.l.s4 1934713408
    %v3320 = vunpack.c.0.s8 %v3319
    %v3321 = vlaneseq
    %v3322 = vshrl.u32 %v3321, 7
    %v3323 = vsub.s32 %v3320, %v3322
    %v3324 = vrot.slane %v3310, %v3323
    %v3325 = vcombine.low %v3269, %v3301
    %v3326 = vcombine.high %v3269, %v3301
    %v3327 = vcombine.low %v3276, %v3308
    %v3328 = vcombine.high %v3276, %v3308
    %v3329 = vcombine.low %v3285, %v3317
    %v3330 = vcombine.high %v3285, %v3317
    %v3331 = vcombine.low %v3292, %v3324
    %v3332 = vcombine.high %v3292, %v3324
    %v3333 = vcombine.low %v3121, %v3123
    %v3334 = vcombine.high %v3121, %v3123
    %v3336 = vunpack.c.l.s4 1983009808
    %v3337 = vunpack.c.0.s8 %v3336
    %v3338 = vlaneseq
    %v3339 = vshrl.u32 %v3338, 7
    %v3340 = vsub.s32 %v3337, %v3339
    %v3341 = vrot.slane %v3333, %v3340
    %v3343 = vunpack.c.l.s4 1983009808
    %v3344 = vunpack.c.0.s8 %v3343
    %v3345 = vlaneseq
    %v3346 = vshrl.u32 %v3345, 7
    %v3347 = vsub.s32 %v3344, %v3346
    %v3348 = vrot.slane %v3334, %v3347
    %v3349 = vcombine.low %v3122, %v3124
    %v3350 = vcombine.high %v3122, %v3124
    %v3352 = vunpack.c.l.s4 1983009808
    %v3353 = vunpack.c.0.s8 %v3352
    %v3354 = vlaneseq
    %v3355 = vshrl.u32 %v3354, 7
    %v3356 = vsub.s32 %v3353, %v3355
    %v3357 = vrot.slane %v3349, %v3356
    %v3359 = vunpack.c.l.s4 1983009808
    %v3360 = vunpack.c.0.s8 %v3359
    %v3361 = vlaneseq
    %v3362 = vshrl.u32 %v3361, 7
    %v3363 = vsub.s32 %v3360, %v3362
    %v3364 = vrot.slane %v3350, %v3363
    %v3365 = vcombine.low %v3125, %v3127
    %v3366 = vcombine.high %v3125, %v3127
    %v3368 = vunpack.c.l.s4 1983009808
    %v3369 = vunpack.c.0.s8 %v3368
    %v3370 = vlaneseq
    %v3371 = vshrl.u32 %v3370, 7
    %v3372 = vsub.s32 %v3369, %v3371
    %v3373 = vrot.slane %v3365, %v3372
    %v3375 = vunpack.c.l.s4 1983009808
    %v3376 = vunpack.c.0.s8 %v3375
    %v3377 = vlaneseq
    %v3378 = vshrl.u32 %v3377, 7
    %v3379 = vsub.s32 %v3376, %v3378
    %v3380 = vrot.slane %v3366, %v3379
    %v3381 = vcombine.low %v3126, %v3128
    %v3382 = vcombine.high %v3126, %v3128
    %v3384 = vunpack.c.l.s4 1983009808
    %v3385 = vunpack.c.0.s8 %v3384
    %v3386 = vlaneseq
    %v3387 = vshrl.u32 %v3386, 7
    %v3388 = vsub.s32 %v3385, %v3387
    %v3389 = vrot.slane %v3381, %v3388
    %v3391 = vunpack.c.l.s4 1983009808
    %v3392 = vunpack.c.0.s8 %v3391
    %v3393 = vlaneseq
    %v3394 = vshrl.u32 %v3393, 7
    %v3395 = vsub.s32 %v3392, %v3394
    %v3396 = vrot.slane %v3382, %v3395
    %v3397 = vcombine.low %v3341, %v3357
    %v3398 = vcombine.high %v3341, %v3357
    %v3400 = vunpack.c.l.s4 1934713408
    %v3401 = vunpack.c.0.s8 %v3400
    %v3402 = vlaneseq
    %v3403 = vshrl.u32 %v3402, 7
    %v3404 = vsub.s32 %v3401, %v3403
    %v3405 = vrot.slane %v3397, %v3404
    %v3407 = vunpack.c.l.s4 1934713408
    %v3408 = vunpack.c.0.s8 %v3407
    %v3409 = vlaneseq
    %v3410 = vshrl.u32 %v3409, 7
    %v3411 = vsub.s32 %v3408, %v3410
    %v3412 = vrot.slane %v3398, %v3411
    %v3413 = vcombine.low %v3348, %v3364
    %v3414 = vcombine.high %v3348, %v3364
    %v3416 = vunpack.c.l.s4 1934713408
    %v3417 = vunpack.c.0.s8 %v3416
    %v3418 = vlaneseq
    %v3419 = vshrl.u32 %v3418, 7
    %v3420 = vsub.s32 %v3417, %v3419
    %v3421 = vrot.slane %v3413, %v3420
    %v3423 = vunpack.c.l.s4 1934713408
    %v3424 = vunpack.c.0.s8 %v3423
    %v3425 = vlaneseq
    %v3426 = vshrl.u32 %v3425, 7
    %v3427 = vsub.s32 %v3424, %v3426
    %v3428 = vrot.slane %v3414, %v3427
    %v3429 = vcombine.low %v3373, %v3389
    %v3430 = vcombine.high %v3373, %v3389
    %v3432 = vunpack.c.l.s4 1934713408
    %v3433 = vunpack.c.0.s8 %v3432
    %v3434 = vlaneseq
    %v3435 = vshrl.u32 %v3434, 7
    %v3436 = vsub.s32 %v3433, %v3435
    %v3437 = vrot.slane %v3429, %v3436
    %v3439 = vunpack.c.l.s4 1934713408
    %v3440 = vunpack.c.0.s8 %v3439
    %v3441 = vlaneseq
    %v3442 = vshrl.u32 %v3441, 7
    %v3443 = vsub.s32 %v3440, %v3442
    %v3444 = vrot.slane %v3430, %v3443
    %v3445 = vcombine.low %v3380, %v3396
    %v3446 = vcombine.high %v3380, %v3396
    %v3448 = vunpack.c.l.s4 1934713408
    %v3449 = vunpack.c.0.s8 %v3448
    %v3450 = vlaneseq
    %v3451 = vshrl.u32 %v3450, 7
    %v3452 = vsub.s32 %v3449, %v3451
    %v3453 = vrot.slane %v3445, %v3452
    %v3455 = vunpack.c.l.s4 1934713408
    %v3456 = vunpack.c.0.s8 %v3455
    %v3457 = vlaneseq
    %v3458 = vshrl.u32 %v3457, 7
    %v3459 = vsub.s32 %v3456, %v3458
    %v3460 = vrot.slane %v3446, %v3459
    %v3461 = vcombine.low %v3405, %v3437
    %v3462 = vcombine.high %v3405, %v3437
    %v3463 = vcombine.low %v3412, %v3444
    %v3464 = vcombine.high %v3412, %v3444
    %v3465 = vcombine.low %v3421, %v3453
    %v3466 = vcombine.high %v3421, %v3453
    %v3467 = vcombine.low %v3428, %v3460
    %v3468 = vcombine.high %v3428, %v3460
    %v3469 = vcombine.low %v2965, %v2972
    %v3471 = vunpack.c.l.s4 1983009808
    %v3472 = vunpack.c.0.s8 %v3471
    %v3473 = vlaneseq
    %v3474 = vshrl.u32 %v3473, 7
    %v3475 = vsub.s32 %v3472, %v3474
    %v3476 = vrot.slane %v3469, %v3475
    %v3477 = vcombine.low %v2989, %v2990
    %v3479 = vunpack.c.l.s4 1983009808
    %v3480 = vunpack.c.0.s8 %v3479
    %v3481 = vlaneseq
    %v3482 = vshrl.u32 %v3481, 7
    %v3483 = vsub.s32 %v3480, %v3482
    %v3484 = vrot.slane %v3477, %v3483
    %v3485 = vcombine.low %v2981, %v2988
    %v3487 = vunpack.c.l.s4 1983009808
    %v3488 = vunpack.c.0.s8 %v3487
    %v3489 = vlaneseq
    %v3490 = vshrl.u32 %v3489, 7
    %v3491 = vsub.s32 %v3488, %v3490
    %v3492 = vrot.slane %v3485, %v3491
    %v3493 = vcombine.low %v2991, %v2992
    %v3495 = vunpack.c.l.s4 1983009808
    %v3496 = vunpack.c.0.s8 %v3495
    %v3497 = vlaneseq
    %v3498 = vshrl.u32 %v3497, 7
    %v3499 = vsub.s32 %v3496, %v3498
    %v3500 = vrot.slane %v3493, %v3499
    %v3501 = vcombine.low %v3476, %v3484
    %v3502 = vcombine.high %v3476, %v3484
    %v3504 = vunpack.c.l.s4 1934713408
    %v3505 = vunpack.c.0.s8 %v3504
    %v3506 = vlaneseq
    %v3507 = vshrl.u32 %v3506, 7
    %v3508 = vsub.s32 %v3505, %v3507
    %v3509 = vrot.slane %v3501, %v3508
    %v3511 = vunpack.c.l.s4 1934713408
    %v3512 = vunpack.c.0.s8 %v3511
    %v3513 = vlaneseq
    %v3514 = vshrl.u32 %v3513, 7
    %v3515 = vsub.s32 %v3512, %v3514
    %v3516 = vrot.slane %v3502, %v3515
    %v3517 = vcombine.low %v3492, %v3500
    %v3518 = vcombine.high %v3492, %v3500
    %v3520 = vunpack.c.l.s4 1934713408
    %v3521 = vunpack.c.0.s8 %v3520
    %v3522 = vlaneseq
    %v3523 = vshrl.u32 %v3522, 7
    %v3524 = vsub.s32 %v3521, %v3523
    %v3525 = vrot.slane %v3517, %v3524
    %v3527 = vunpack.c.l.s4 1934713408
    %v3528 = vunpack.c.0.s8 %v3527
    %v3529 = vlaneseq
    %v3530 = vshrl.u32 %v3529, 7
    %v3531 = vsub.s32 %v3528, %v3530
    %v3532 = vrot.slane %v3518, %v3531
    %v3533 = vcombine.low %v3509, %v3525
    %v3534 = vcombine.high %v3509, %v3525
    %v3535 = vcombine.low %v3516, %v3532
    %v3536 = vcombine.high %v3516, %v3532
    %v3537 = vcombine.low %v3169, %v3176
    %v3539 = vunpack.c.l.s4 1983009808
    %v3540 = vunpack.c.0.s8 %v3539
    %v3541 = vlaneseq
    %v3542 = vshrl.u32 %v3541, 7
    %v3543 = vsub.s32 %v3540, %v3542
    %v3544 = vrot.slane %v3537, %v3543
    %v3545 = vcombine.low %v3193, %v3194
    %v3547 = vunpack.c.l.s4 1983009808
    %v3548 = vunpack.c.0.s8 %v3547
    %v3549 = vlaneseq
    %v3550 = vshrl.u32 %v3549, 7
    %v3551 = vsub.s32 %v3548, %v3550
    %v3552 = vrot.slane %v3545, %v3551
    %v3553 = vcombine.low %v3185, %v3192
    %v3555 = vunpack.c.l.s4 1983009808
    %v3556 = vunpack.c.0.s8 %v3555
    %v3557 = vlaneseq
    %v3558 = vshrl.u32 %v3557, 7
    %v3559 = vsub.s32 %v3556, %v3558
    %v3560 = vrot.slane %v3553, %v3559
    %v3561 = vcombine.low %v3195, %v3196
    %v3563 = vunpack.c.l.s4 1983009808
    %v3564 = vunpack.c.0.s8 %v3563
    %v3565 = vlaneseq
    %v3566 = vshrl.u32 %v3565, 7
    %v3567 = vsub.s32 %v3564, %v3566
    %v3568 = vrot.slane %v3561, %v3567
    %v3569 = vcombine.low %v3544, %v3552
    %v3570 = vcombine.high %v3544, %v3552
    %v3572 = vunpack.c.l.s4 1934713408
    %v3573 = vunpack.c.0.s8 %v3572
    %v3574 = vlaneseq
    %v3575 = vshrl.u32 %v3574, 7
    %v3576 = vsub.s32 %v3573, %v3575
    %v3577 = vrot.slane %v3569, %v3576
    %v3579 = vunpack.c.l.s4 1934713408
    %v3580 = vunpack.c.0.s8 %v3579
    %v3581 = vlaneseq
    %v3582 = vshrl.u32 %v3581, 7
    %v3583 = vsub.s32 %v3580, %v3582
    %v3584 = vrot.slane %v3570, %v3583
    %v3585 = vcombine.low %v3560, %v3568
    %v3586 = vcombine.high %v3560, %v3568
    %v3588 = vunpack.c.l.s4 1934713408
    %v3589 = vunpack.c.0.s8 %v3588
    %v3590 = vlaneseq
    %v3591 = vshrl.u32 %v3590, 7
    %v3592 = vsub.s32 %v3589, %v3591
    %v3593 = vrot.slane %v3585, %v3592
    %v3595 = vunpack.c.l.s4 1934713408
    %v3596 = vunpack.c.0.s8 %v3595
    %v3597 = vlaneseq
    %v3598 = vshrl.u32 %v3597, 7
    %v3599 = vsub.s32 %v3596, %v3598
    %v3600 = vrot.slane %v3586, %v3599
    %v3601 = vcombine.low %v3577, %v3593
    %v3602 = vcombine.high %v3577, %v3593
    %v3603 = vcombine.low %v3584, %v3600
    %v3604 = vcombine.high %v3584, %v3600
    %v3605 = vpack.c.bf16 %v3325, %v3325
    %v3606 = vpack.c.bf16 %v3461, %v3461
    %v3607 = vpack.c.bf16 %v3326, %v3326
    %v3608 = vpack.c.bf16 %v3462, %v3462
    %v3609 = vpack.c.bf16 %v3327, %v3327
    %v3610 = vpack.c.bf16 %v3463, %v3463
    %v3611 = vpack.c.bf16 %v3328, %v3328
    %v3612 = vpack.c.bf16 %v3464, %v3464
    %v3613 = vpack.c.bf16 %v3329, %v3329
    %v3614 = vpack.c.bf16 %v3465, %v3465
    %v3615 = vpack.c.bf16 %v3330, %v3330
    %v3616 = vpack.c.bf16 %v3466, %v3466
    %v3617 = vpack.c.bf16 %v3331, %v3331
    %v3618 = vpack.c.bf16 %v3467, %v3467
    %v3619 = vpack.c.bf16 %v3332, %v3332
    %v3620 = vpack.c.bf16 %v3468, %v3468
    %v3621 = vpack.c.bf16 %v3533, %v3533
    %v3622 = vpack.c.bf16 %v3601, %v3601
    %v3623 = vpack.c.bf16 %v3534, %v3534
    %v3624 = vpack.c.bf16 %v3602, %v3602
    %v3625 = vpack.c.bf16 %v3535, %v3535
    %v3626 = vpack.c.bf16 %v3603, %v3603
    %v3627 = vpack.c.bf16 %v3536, %v3536
    %v3628 = vpack.c.bf16 %v3604, %v3604
    %v3630 = vsel %vm1186, %v3605, 0
    %v3633 = vsel %vm1186, %v3613, 0
    %3635 = vmatprep.subr.bf16.mxu0 0
    %3636 = vmatpush1.bf16.xpose.msra.mxu0 0
    %3637 = vmatprep.subr.bf16.mxu0 0
    %3638 = vmatpush1.bf16.xpose.msra.mxu0 0
    %3639 = vmatprep.subr.bf16.mxu0 0
    %3640 = vmatpush1.bf16.xpose.msra.mxu0 0
    %3641 = vmatprep.subr.bf16.mxu0 0
    %3642 = vmatpush1.bf16.xpose.msra.mxu0 0
    %3643 = vmatprep.subr.bf16.mxu0 0
    %3644 = vmatpush1.bf16.xpose.msra.mxu0 0
    %3645 = vmatprep.subr.bf16.mxu0 0
    %3646 = vmatpush1.bf16.xpose.msra.mxu0 0
    %3647 = vmatprep.subr.bf16.mxu0 0
    %3648 = vmatpush1.bf16.xpose.msra.mxu0 0
    %3649 = vmatprep.subr.bf16.mxu0 0
    %3650 = vmatpush1.bf16.xpose.msra.mxu0 %v3633
    %3651 = vmatprep.subr.bf16.mxu0 0
    %3652 = vmatpush2.bf16.xpose.msra.mxu0 0
    %3653 = vmatprep.subr.bf16.mxu0 0
    %3654 = vmatpush2.bf16.xpose.msra.mxu0 0
    %3655 = vmatprep.subr.bf16.mxu0 0
    %3656 = vmatpush2.bf16.xpose.msra.mxu0 0
    %3657 = vmatprep.subr.bf16.mxu0 0
    %3658 = vmatpush2.bf16.xpose.msra.mxu0 0
    %3659 = vmatprep.subr.bf16.mxu0 0
    %3660 = vmatpush2.bf16.xpose.msra.mxu0 0
    %3661 = vmatprep.subr.bf16.mxu0 0
    %3662 = vmatpush2.bf16.xpose.msra.mxu0 0
    %3663 = vmatprep.subr.bf16.mxu0 0
    %3664 = vmatpush2.bf16.xpose.msra.mxu0 0
    %3665 = vmatprep.subr.bf16.mxu0 0
    %3666 = vmatpush2.bf16.xpose.msra.mxu0 0
    %3667 = vmatprep.mubr.bf16.mxu0 0
    %3668 = vmatmul.mubr.bf16.gmra.mxu0 %v3630
    %v3669 = vpop.f32.mrf.mxu0
    %v3670 = vadd.f32 %v103, %v3669
    %v3671 = vpop.f32.mrf.mxu0
    %v3672 = vpop.f32.mrf.mxu0
    %v3673 = vpop.f32.mrf.mxu0
    %3674 = vdwg.mxu0
    %v3676 = vsel %vm1186, %v3606, 0
    %v3679 = vsel %vm1186, %v3614, 0
    %3681 = vmatprep.subr.bf16.mxu0 0
    %3682 = vmatpush1.bf16.xpose.msra.mxu0 0
    %3683 = vmatprep.subr.bf16.mxu0 0
    %3684 = vmatpush1.bf16.xpose.msra.mxu0 0
    %3685 = vmatprep.subr.bf16.mxu0 0
    %3686 = vmatpush1.bf16.xpose.msra.mxu0 0
    %3687 = vmatprep.subr.bf16.mxu0 0
    %3688 = vmatpush1.bf16.xpose.msra.mxu0 0
    %3689 = vmatprep.subr.bf16.mxu0 0
    %3690 = vmatpush1.bf16.xpose.msra.mxu0 0
    %3691 = vmatprep.subr.bf16.mxu0 0
    %3692 = vmatpush1.bf16.xpose.msra.mxu0 0
    %3693 = vmatprep.subr.bf16.mxu0 0
    %3694 = vmatpush1.bf16.xpose.msra.mxu0 0
    %3695 = vmatprep.subr.bf16.mxu0 0
    %3696 = vmatpush1.bf16.xpose.msra.mxu0 %v3679
    %3697 = vmatprep.subr.bf16.mxu0 0
    %3698 = vmatpush2.bf16.xpose.msra.mxu0 0
    %3699 = vmatprep.subr.bf16.mxu0 0
    %3700 = vmatpush2.bf16.xpose.msra.mxu0 0
    %3701 = vmatprep.subr.bf16.mxu0 0
    %3702 = vmatpush2.bf16.xpose.msra.mxu0 0
    %3703 = vmatprep.subr.bf16.mxu0 0
    %3704 = vmatpush2.bf16.xpose.msra.mxu0 0
    %3705 = vmatprep.subr.bf16.mxu0 0
    %3706 = vmatpush2.bf16.xpose.msra.mxu0 0
    %3707 = vmatprep.subr.bf16.mxu0 0
    %3708 = vmatpush2.bf16.xpose.msra.mxu0 0
    %3709 = vmatprep.subr.bf16.mxu0 0
    %3710 = vmatpush2.bf16.xpose.msra.mxu0 0
    %3711 = vmatprep.subr.bf16.mxu0 0
    %3712 = vmatpush2.bf16.xpose.msra.mxu0 0
    %3713 = vmatprep.mubr.bf16.mxu0 0
    %3714 = vmatmul.mubr.bf16.gmra.mxu0 %v3676
    %v3715 = vpop.f32.mrf.mxu0
    %v3716 = vadd.f32 %v107, %v3715
    %v3717 = vpop.f32.mrf.mxu0
    %v3718 = vpop.f32.mrf.mxu0
    %v3719 = vpop.f32.mrf.mxu0
    %3720 = vdwg.mxu0
    %v3722 = vsel %vm1186, %v3607, 0
    %v3725 = vsel %vm1186, %v3615, 0
    %3727 = vmatprep.subr.bf16.mxu0 0
    %3728 = vmatpush1.bf16.xpose.msra.mxu0 0
    %3729 = vmatprep.subr.bf16.mxu0 0
    %3730 = vmatpush1.bf16.xpose.msra.mxu0 0
    %3731 = vmatprep.subr.bf16.mxu0 0
    %3732 = vmatpush1.bf16.xpose.msra.mxu0 0
    %3733 = vmatprep.subr.bf16.mxu0 0
    %3734 = vmatpush1.bf16.xpose.msra.mxu0 0
    %3735 = vmatprep.subr.bf16.mxu0 0
    %3736 = vmatpush1.bf16.xpose.msra.mxu0 0
    %3737 = vmatprep.subr.bf16.mxu0 0
    %3738 = vmatpush1.bf16.xpose.msra.mxu0 0
    %3739 = vmatprep.subr.bf16.mxu0 0
    %3740 = vmatpush1.bf16.xpose.msra.mxu0 0
    %3741 = vmatprep.subr.bf16.mxu0 0
    %3742 = vmatpush1.bf16.xpose.msra.mxu0 %v3725
    %3743 = vmatprep.subr.bf16.mxu0 0
    %3744 = vmatpush2.bf16.xpose.msra.mxu0 0
    %3745 = vmatprep.subr.bf16.mxu0 0
    %3746 = vmatpush2.bf16.xpose.msra.mxu0 0
    %3747 = vmatprep.subr.bf16.mxu0 0
    %3748 = vmatpush2.bf16.xpose.msra.mxu0 0
    %3749 = vmatprep.subr.bf16.mxu0 0
    %3750 = vmatpush2.bf16.xpose.msra.mxu0 0
    %3751 = vmatprep.subr.bf16.mxu0 0
    %3752 = vmatpush2.bf16.xpose.msra.mxu0 0
    %3753 = vmatprep.subr.bf16.mxu0 0
    %3754 = vmatpush2.bf16.xpose.msra.mxu0 0
    %3755 = vmatprep.subr.bf16.mxu0 0
    %3756 = vmatpush2.bf16.xpose.msra.mxu0 0
    %3757 = vmatprep.subr.bf16.mxu0 0
    %3758 = vmatpush2.bf16.xpose.msra.mxu0 0
    %3759 = vmatprep.mubr.bf16.mxu0 0
    %3760 = vmatmul.mubr.bf16.gmra.mxu0 %v3722
    %v3761 = vpop.f32.mrf.mxu0
    %v3762 = vadd.f32 %v111, %v3761
    %v3763 = vpop.f32.mrf.mxu0
    %v3764 = vpop.f32.mrf.mxu0
    %v3765 = vpop.f32.mrf.mxu0
    %3766 = vdwg.mxu0
    %v3768 = vsel %vm1186, %v3608, 0
    %v3771 = vsel %vm1186, %v3616, 0
    %3773 = vmatprep.subr.bf16.mxu0 0
    %3774 = vmatpush1.bf16.xpose.msra.mxu0 0
    %3775 = vmatprep.subr.bf16.mxu0 0
    %3776 = vmatpush1.bf16.xpose.msra.mxu0 0
    %3777 = vmatprep.subr.bf16.mxu0 0
    %3778 = vmatpush1.bf16.xpose.msra.mxu0 0
    %3779 = vmatprep.subr.bf16.mxu0 0
    %3780 = vmatpush1.bf16.xpose.msra.mxu0 0
    %3781 = vmatprep.subr.bf16.mxu0 0
    %3782 = vmatpush1.bf16.xpose.msra.mxu0 0
    %3783 = vmatprep.subr.bf16.mxu0 0
    %3784 = vmatpush1.bf16.xpose.msra.mxu0 0
    %3785 = vmatprep.subr.bf16.mxu0 0
    %3786 = vmatpush1.bf16.xpose.msra.mxu0 0
    %3787 = vmatprep.subr.bf16.mxu0 0
    %3788 = vmatpush1.bf16.xpose.msra.mxu0 %v3771
    %3789 = vmatprep.subr.bf16.mxu0 0
    %3790 = vmatpush2.bf16.xpose.msra.mxu0 0
    %3791 = vmatprep.subr.bf16.mxu0 0
    %3792 = vmatpush2.bf16.xpose.msra.mxu0 0
    %3793 = vmatprep.subr.bf16.mxu0 0
    %3794 = vmatpush2.bf16.xpose.msra.mxu0 0
    %3795 = vmatprep.subr.bf16.mxu0 0
    %3796 = vmatpush2.bf16.xpose.msra.mxu0 0
    %3797 = vmatprep.subr.bf16.mxu0 0
    %3798 = vmatpush2.bf16.xpose.msra.mxu0 0
    %3799 = vmatprep.subr.bf16.mxu0 0
    %3800 = vmatpush2.bf16.xpose.msra.mxu0 0
    %3801 = vmatprep.subr.bf16.mxu0 0
    %3802 = vmatpush2.bf16.xpose.msra.mxu0 0
    %3803 = vmatprep.subr.bf16.mxu0 0
    %3804 = vmatpush2.bf16.xpose.msra.mxu0 0
    %3805 = vmatprep.mubr.bf16.mxu0 0
    %3806 = vmatmul.mubr.bf16.gmra.mxu0 %v3768
    %v3807 = vpop.f32.mrf.mxu0
    %v3808 = vadd.f32 %v115, %v3807
    %v3809 = vpop.f32.mrf.mxu0
    %v3810 = vpop.f32.mrf.mxu0
    %v3811 = vpop.f32.mrf.mxu0
    %3812 = vdwg.mxu0
    %v3814 = vsel %vm1186, %v3609, 0
    %v3817 = vsel %vm1186, %v3617, 0
    %3819 = vmatprep.subr.bf16.mxu0 0
    %3820 = vmatpush1.bf16.xpose.msra.mxu0 0
    %3821 = vmatprep.subr.bf16.mxu0 0
    %3822 = vmatpush1.bf16.xpose.msra.mxu0 0
    %3823 = vmatprep.subr.bf16.mxu0 0
    %3824 = vmatpush1.bf16.xpose.msra.mxu0 0
    %3825 = vmatprep.subr.bf16.mxu0 0
    %3826 = vmatpush1.bf16.xpose.msra.mxu0 0
    %3827 = vmatprep.subr.bf16.mxu0 0
    %3828 = vmatpush1.bf16.xpose.msra.mxu0 0
    %3829 = vmatprep.subr.bf16.mxu0 0
    %3830 = vmatpush1.bf16.xpose.msra.mxu0 0
    %3831 = vmatprep.subr.bf16.mxu0 0
    %3832 = vmatpush1.bf16.xpose.msra.mxu0 0
    %3833 = vmatprep.subr.bf16.mxu0 0
    %3834 = vmatpush1.bf16.xpose.msra.mxu0 %v3817
    %3835 = vmatprep.subr.bf16.mxu0 0
    %3836 = vmatpush2.bf16.xpose.msra.mxu0 0
    %3837 = vmatprep.subr.bf16.mxu0 0
    %3838 = vmatpush2.bf16.xpose.msra.mxu0 0
    %3839 = vmatprep.subr.bf16.mxu0 0
    %3840 = vmatpush2.bf16.xpose.msra.mxu0 0
    %3841 = vmatprep.subr.bf16.mxu0 0
    %3842 = vmatpush2.bf16.xpose.msra.mxu0 0
    %3843 = vmatprep.subr.bf16.mxu0 0
    %3844 = vmatpush2.bf16.xpose.msra.mxu0 0
    %3845 = vmatprep.subr.bf16.mxu0 0
    %3846 = vmatpush2.bf16.xpose.msra.mxu0 0
    %3847 = vmatprep.subr.bf16.mxu0 0
    %3848 = vmatpush2.bf16.xpose.msra.mxu0 0
    %3849 = vmatprep.subr.bf16.mxu0 0
    %3850 = vmatpush2.bf16.xpose.msra.mxu0 0
    %3851 = vmatprep.mubr.bf16.mxu0 0
    %3852 = vmatmul.mubr.bf16.gmra.mxu0 %v3814
    %v3853 = vpop.f32.mrf.mxu0
    %v3854 = vadd.f32 %v119, %v3853
    %v3855 = vpop.f32.mrf.mxu0
    %v3856 = vpop.f32.mrf.mxu0
    %v3857 = vpop.f32.mrf.mxu0
    %3858 = vdwg.mxu0
    %v3860 = vsel %vm1186, %v3610, 0
    %v3863 = vsel %vm1186, %v3618, 0
    %3865 = vmatprep.subr.bf16.mxu0 0
    %3866 = vmatpush1.bf16.xpose.msra.mxu0 0
    %3867 = vmatprep.subr.bf16.mxu0 0
    %3868 = vmatpush1.bf16.xpose.msra.mxu0 0
    %3869 = vmatprep.subr.bf16.mxu0 0
    %3870 = vmatpush1.bf16.xpose.msra.mxu0 0
    %3871 = vmatprep.subr.bf16.mxu0 0
    %3872 = vmatpush1.bf16.xpose.msra.mxu0 0
    %3873 = vmatprep.subr.bf16.mxu0 0
    %3874 = vmatpush1.bf16.xpose.msra.mxu0 0
    %3875 = vmatprep.subr.bf16.mxu0 0
    %3876 = vmatpush1.bf16.xpose.msra.mxu0 0
    %3877 = vmatprep.subr.bf16.mxu0 0
    %3878 = vmatpush1.bf16.xpose.msra.mxu0 0
    %3879 = vmatprep.subr.bf16.mxu0 0
    %3880 = vmatpush1.bf16.xpose.msra.mxu0 %v3863
    %3881 = vmatprep.subr.bf16.mxu0 0
    %3882 = vmatpush2.bf16.xpose.msra.mxu0 0
    %3883 = vmatprep.subr.bf16.mxu0 0
    %3884 = vmatpush2.bf16.xpose.msra.mxu0 0
    %3885 = vmatprep.subr.bf16.mxu0 0
    %3886 = vmatpush2.bf16.xpose.msra.mxu0 0
    %3887 = vmatprep.subr.bf16.mxu0 0
    %3888 = vmatpush2.bf16.xpose.msra.mxu0 0
    %3889 = vmatprep.subr.bf16.mxu0 0
    %3890 = vmatpush2.bf16.xpose.msra.mxu0 0
    %3891 = vmatprep.subr.bf16.mxu0 0
    %3892 = vmatpush2.bf16.xpose.msra.mxu0 0
    %3893 = vmatprep.subr.bf16.mxu0 0
    %3894 = vmatpush2.bf16.xpose.msra.mxu0 0
    %3895 = vmatprep.subr.bf16.mxu0 0
    %3896 = vmatpush2.bf16.xpose.msra.mxu0 0
    %3897 = vmatprep.mubr.bf16.mxu0 0
    %3898 = vmatmul.mubr.bf16.gmra.mxu0 %v3860
    %v3899 = vpop.f32.mrf.mxu0
    %v3900 = vadd.f32 %v123, %v3899
    %v3901 = vpop.f32.mrf.mxu0
    %v3902 = vpop.f32.mrf.mxu0
    %v3903 = vpop.f32.mrf.mxu0
    %3904 = vdwg.mxu0
    %v3906 = vsel %vm1186, %v3611, 0
    %v3909 = vsel %vm1186, %v3619, 0
    %3911 = vmatprep.subr.bf16.mxu0 0
    %3912 = vmatpush1.bf16.xpose.msra.mxu0 0
    %3913 = vmatprep.subr.bf16.mxu0 0
    %3914 = vmatpush1.bf16.xpose.msra.mxu0 0
    %3915 = vmatprep.subr.bf16.mxu0 0
    %3916 = vmatpush1.bf16.xpose.msra.mxu0 0
    %3917 = vmatprep.subr.bf16.mxu0 0
    %3918 = vmatpush1.bf16.xpose.msra.mxu0 0
    %3919 = vmatprep.subr.bf16.mxu0 0
    %3920 = vmatpush1.bf16.xpose.msra.mxu0 0
    %3921 = vmatprep.subr.bf16.mxu0 0
    %3922 = vmatpush1.bf16.xpose.msra.mxu0 0
    %3923 = vmatprep.subr.bf16.mxu0 0
    %3924 = vmatpush1.bf16.xpose.msra.mxu0 0
    %3925 = vmatprep.subr.bf16.mxu0 0
    %3926 = vmatpush1.bf16.xpose.msra.mxu0 %v3909
    %3927 = vmatprep.subr.bf16.mxu0 0
    %3928 = vmatpush2.bf16.xpose.msra.mxu0 0
    %3929 = vmatprep.subr.bf16.mxu0 0
    %3930 = vmatpush2.bf16.xpose.msra.mxu0 0
    %3931 = vmatprep.subr.bf16.mxu0 0
    %3932 = vmatpush2.bf16.xpose.msra.mxu0 0
    %3933 = vmatprep.subr.bf16.mxu0 0
    %3934 = vmatpush2.bf16.xpose.msra.mxu0 0
    %3935 = vmatprep.subr.bf16.mxu0 0
    %3936 = vmatpush2.bf16.xpose.msra.mxu0 0
    %3937 = vmatprep.subr.bf16.mxu0 0
    %3938 = vmatpush2.bf16.xpose.msra.mxu0 0
    %3939 = vmatprep.subr.bf16.mxu0 0
    %3940 = vmatpush2.bf16.xpose.msra.mxu0 0
    %3941 = vmatprep.subr.bf16.mxu0 0
    %3942 = vmatpush2.bf16.xpose.msra.mxu0 0
    %3943 = vmatprep.mubr.bf16.mxu0 0
    %3944 = vmatmul.mubr.bf16.gmra.mxu0 %v3906
    %v3945 = vpop.f32.mrf.mxu0
    %v3946 = vadd.f32 %v127, %v3945
    %v3947 = vpop.f32.mrf.mxu0
    %v3948 = vpop.f32.mrf.mxu0
    %v3949 = vpop.f32.mrf.mxu0
    %3950 = vdwg.mxu0
    %v3952 = vsel %vm1186, %v3612, 0
    %v3955 = vsel %vm1186, %v3620, 0
    %3957 = vmatprep.subr.bf16.mxu0 0
    %3958 = vmatpush1.bf16.xpose.msra.mxu0 0
    %3959 = vmatprep.subr.bf16.mxu0 0
    %3960 = vmatpush1.bf16.xpose.msra.mxu0 0
    %3961 = vmatprep.subr.bf16.mxu0 0
    %3962 = vmatpush1.bf16.xpose.msra.mxu0 0
    %3963 = vmatprep.subr.bf16.mxu0 0
    %3964 = vmatpush1.bf16.xpose.msra.mxu0 0
    %3965 = vmatprep.subr.bf16.mxu0 0
    %3966 = vmatpush1.bf16.xpose.msra.mxu0 0
    %3967 = vmatprep.subr.bf16.mxu0 0
    %3968 = vmatpush1.bf16.xpose.msra.mxu0 0
    %3969 = vmatprep.subr.bf16.mxu0 0
    %3970 = vmatpush1.bf16.xpose.msra.mxu0 0
    %3971 = vmatprep.subr.bf16.mxu0 0
    %3972 = vmatpush1.bf16.xpose.msra.mxu0 %v3955
    %3973 = vmatprep.subr.bf16.mxu0 0
    %3974 = vmatpush2.bf16.xpose.msra.mxu0 0
    %3975 = vmatprep.subr.bf16.mxu0 0
    %3976 = vmatpush2.bf16.xpose.msra.mxu0 0
    %3977 = vmatprep.subr.bf16.mxu0 0
    %3978 = vmatpush2.bf16.xpose.msra.mxu0 0
    %3979 = vmatprep.subr.bf16.mxu0 0
    %3980 = vmatpush2.bf16.xpose.msra.mxu0 0
    %3981 = vmatprep.subr.bf16.mxu0 0
    %3982 = vmatpush2.bf16.xpose.msra.mxu0 0
    %3983 = vmatprep.subr.bf16.mxu0 0
    %3984 = vmatpush2.bf16.xpose.msra.mxu0 0
    %3985 = vmatprep.subr.bf16.mxu0 0
    %3986 = vmatpush2.bf16.xpose.msra.mxu0 0
    %3987 = vmatprep.subr.bf16.mxu0 0
    %3988 = vmatpush2.bf16.xpose.msra.mxu0 0
    %3989 = vmatprep.mubr.bf16.mxu0 0
    %3990 = vmatmul.mubr.bf16.gmra.mxu0 %v3952
    %v3991 = vpop.f32.mrf.mxu0
    %v3992 = vadd.f32 %v131, %v3991
    %v3993 = vpop.f32.mrf.mxu0
    %v3994 = vpop.f32.mrf.mxu0
    %v3995 = vpop.f32.mrf.mxu0
    %3996 = vdwg.mxu0
    %v3997 = vsel %vm1186, %v3670, -inf
    %3998 = vmax.xlane.f32.xlu0 %v3997
    %v3999 = vpop.xlane.xlu0 %3998
    %v4000 = vsel %vm1186, %v3716, -inf
    %4001 = vmax.xlane.f32.xlu0 %v4000
    %v4002 = vpop.xlane.xlu0 %4001
    %v4003 = vsel %vm1186, %v3762, -inf
    %4004 = vmax.xlane.f32.xlu0 %v4003
    %v4005 = vpop.xlane.xlu0 %4004
    %v4006 = vsel %vm1186, %v3808, -inf
    %4007 = vmax.xlane.f32.xlu0 %v4006
    %v4008 = vpop.xlane.xlu0 %4007
    %v4009 = vsel %vm1186, %v3854, -inf
    %4010 = vmax.xlane.f32.xlu0 %v4009
    %v4011 = vpop.xlane.xlu0 %4010
    %v4012 = vsel %vm1186, %v3900, -inf
    %4013 = vmax.xlane.f32.xlu0 %v4012
    %v4014 = vpop.xlane.xlu0 %4013
    %v4015 = vsel %vm1186, %v3946, -inf
    %4016 = vmax.xlane.f32.xlu0 %v4015
    %v4017 = vpop.xlane.xlu0 %4016
    %v4018 = vsel %vm1186, %v3992, -inf
    %4019 = vmax.xlane.f32.xlu0 %v4018
    %v4020 = vpop.xlane.xlu0 %4019
    %v4021 = vsub.f32 %v3670, %v3999
    %v4022 = vsub.f32 %v3716, %v4002
    %v4023 = vsub.f32 %v3762, %v4005
    %v4024 = vsub.f32 %v3808, %v4008
    %v4025 = vsub.f32 %v3854, %v4011
    %v4026 = vsub.f32 %v3900, %v4014
    %v4027 = vsub.f32 %v3946, %v4017
    %v4028 = vsub.f32 %v3992, %v4020
    %v4029 = vmul.f32 %v4021, 1.442695
    %v4030 = vpow.pop %v4029
    %v4031 = vmul.f32 %v4022, 1.442695
    %v4032 = vpow.pop %v4031
    %v4033 = vmul.f32 %v4023, 1.442695
    %v4034 = vpow.pop %v4033
    %v4035 = vmul.f32 %v4024, 1.442695
    %v4036 = vpow.pop %v4035
    %v4037 = vmul.f32 %v4025, 1.442695
    %v4038 = vpow.pop %v4037
    %v4039 = vmul.f32 %v4026, 1.442695
    %v4040 = vpow.pop %v4039
    %v4041 = vmul.f32 %v4027, 1.442695
    %v4042 = vpow.pop %v4041
    %v4043 = vmul.f32 %v4028, 1.442695
    %v4044 = vpow.pop %v4043
    %v4045 = vsel %vm1186, %v4030, 0.0
    %4046 = vadd.xlane.f32.xlu0 %v4045
    %v4047 = vpop.xlane.xlu0 %4046
    %v4048 = vsel %vm1186, %v4032, 0.0
    %4049 = vadd.xlane.f32.xlu0 %v4048
    %v4050 = vpop.xlane.xlu0 %4049
    %v4051 = vsel %vm1186, %v4034, 0.0
    %4052 = vadd.xlane.f32.xlu0 %v4051
    %v4053 = vpop.xlane.xlu0 %4052
    %v4054 = vsel %vm1186, %v4036, 0.0
    %4055 = vadd.xlane.f32.xlu0 %v4054
    %v4056 = vpop.xlane.xlu0 %4055
    %v4057 = vsel %vm1186, %v4038, 0.0
    %4058 = vadd.xlane.f32.xlu0 %v4057
    %v4059 = vpop.xlane.xlu0 %4058
    %v4060 = vsel %vm1186, %v4040, 0.0
    %4061 = vadd.xlane.f32.xlu0 %v4060
    %v4062 = vpop.xlane.xlu0 %4061
    %v4063 = vsel %vm1186, %v4042, 0.0
    %4064 = vadd.xlane.f32.xlu0 %v4063
    %v4065 = vpop.xlane.xlu0 %4064
    %v4066 = vsel %vm1186, %v4044, 0.0
    %4067 = vadd.xlane.f32.xlu0 %v4066
    %v4068 = vpop.xlane.xlu0 %4067
    %v4069 = vrcp.pop %v4047
    %v4070 = vrcp.pop %v4050
    %v4071 = vrcp.pop %v4053
    %v4072 = vrcp.pop %v4056
    %v4073 = vrcp.pop %v4059
    %v4074 = vrcp.pop %v4062
    %v4075 = vrcp.pop %v4065
    %v4076 = vrcp.pop %v4068
    %v4077 = vmul.f32 %v4030, %v4069
    %v4078 = vmul.f32 %v4032, %v4070
    %v4079 = vmul.f32 %v4034, %v4071
    %v4080 = vmul.f32 %v4036, %v4072
    %v4081 = vmul.f32 %v4038, %v4073
    %v4082 = vmul.f32 %v4040, %v4074
    %v4083 = vmul.f32 %v4042, %v4075
    %v4084 = vmul.f32 %v4044, %v4076
    %v4085 = vpack.c.bf16 %v4077, %v4077
    %v4086 = vpack.c.bf16 %v4078, %v4078
    %v4087 = vpack.c.bf16 %v4079, %v4079
    %v4088 = vpack.c.bf16 %v4080, %v4080
    %v4089 = vpack.c.bf16 %v4081, %v4081
    %v4090 = vpack.c.bf16 %v4082, %v4082
    %v4091 = vpack.c.bf16 %v4083, %v4083
    %v4092 = vpack.c.bf16 %v4084, %v4084
    %v4094 = vsel %vm1186, %v4085, 0
    %v4097 = vsel %vm1654, %v3621, 0
    %4099 = vmatprep.subr.bf16.mxu0 0
    %4100 = vmatpush1.bf16.msra.mxu0 0
    %4101 = vmatprep.subr.bf16.mxu0 0
    %4102 = vmatpush1.bf16.msra.mxu0 0
    %4103 = vmatprep.subr.bf16.mxu0 0
    %4104 = vmatpush1.bf16.msra.mxu0 0
    %4105 = vmatprep.subr.bf16.mxu0 0
    %4106 = vmatpush1.bf16.msra.mxu0 0
    %4107 = vmatprep.subr.bf16.mxu0 0
    %4108 = vmatpush1.bf16.msra.mxu0 0
    %4109 = vmatprep.subr.bf16.mxu0 0
    %4110 = vmatpush1.bf16.msra.mxu0 0
    %4111 = vmatprep.subr.bf16.mxu0 0
    %4112 = vmatpush1.bf16.msra.mxu0 0
    %4113 = vmatprep.subr.bf16.mxu0 0
    %4114 = vmatpush1.bf16.msra.mxu0 %v4097
    %4115 = vmatprep.subr.bf16.mxu0 0
    %4116 = vmatpush2.bf16.msra.mxu0 0
    %4117 = vmatprep.subr.bf16.mxu0 0
    %4118 = vmatpush2.bf16.msra.mxu0 0
    %4119 = vmatprep.subr.bf16.mxu0 0
    %4120 = vmatpush2.bf16.msra.mxu0 0
    %4121 = vmatprep.subr.bf16.mxu0 0
    %4122 = vmatpush2.bf16.msra.mxu0 0
    %4123 = vmatprep.subr.bf16.mxu0 0
    %4124 = vmatpush2.bf16.msra.mxu0 0
    %4125 = vmatprep.subr.bf16.mxu0 0
    %4126 = vmatpush2.bf16.msra.mxu0 0
    %4127 = vmatprep.subr.bf16.mxu0 0
    %4128 = vmatpush2.bf16.msra.mxu0 0
    %4129 = vmatprep.subr.bf16.mxu0 0
    %4130 = vmatpush2.bf16.msra.mxu0 0
    %4131 = vmatprep.mubr.bf16.mxu0 0
    %4132 = vmatmul.mubr.bf16.gmra.mxu0 %v4094
    %v4133 = vpop.f32.mrf.mxu0
    %v4134 = vadd.f32 0.0, %v4133
    %v4135 = vpop.f32.mrf.mxu0
    %v4136 = vpop.f32.mrf.mxu0
    %v4137 = vpop.f32.mrf.mxu0
    %4138 = vdwg.mxu0
    %v4140 = vsel %vm1186, %v4086, 0
    %v4143 = vsel %vm1654, %v3622, 0
    %4145 = vmatprep.subr.bf16.mxu0 0
    %4146 = vmatpush1.bf16.msra.mxu0 0
    %4147 = vmatprep.subr.bf16.mxu0 0
    %4148 = vmatpush1.bf16.msra.mxu0 0
    %4149 = vmatprep.subr.bf16.mxu0 0
    %4150 = vmatpush1.bf16.msra.mxu0 0
    %4151 = vmatprep.subr.bf16.mxu0 0
    %4152 = vmatpush1.bf16.msra.mxu0 0
    %4153 = vmatprep.subr.bf16.mxu0 0
    %4154 = vmatpush1.bf16.msra.mxu0 0
    %4155 = vmatprep.subr.bf16.mxu0 0
    %4156 = vmatpush1.bf16.msra.mxu0 0
    %4157 = vmatprep.subr.bf16.mxu0 0
    %4158 = vmatpush1.bf16.msra.mxu0 0
    %4159 = vmatprep.subr.bf16.mxu0 0
    %4160 = vmatpush1.bf16.msra.mxu0 %v4143
    %4161 = vmatprep.subr.bf16.mxu0 0
    %4162 = vmatpush2.bf16.msra.mxu0 0
    %4163 = vmatprep.subr.bf16.mxu0 0
    %4164 = vmatpush2.bf16.msra.mxu0 0
    %4165 = vmatprep.subr.bf16.mxu0 0
    %4166 = vmatpush2.bf16.msra.mxu0 0
    %4167 = vmatprep.subr.bf16.mxu0 0
    %4168 = vmatpush2.bf16.msra.mxu0 0
    %4169 = vmatprep.subr.bf16.mxu0 0
    %4170 = vmatpush2.bf16.msra.mxu0 0
    %4171 = vmatprep.subr.bf16.mxu0 0
    %4172 = vmatpush2.bf16.msra.mxu0 0
    %4173 = vmatprep.subr.bf16.mxu0 0
    %4174 = vmatpush2.bf16.msra.mxu0 0
    %4175 = vmatprep.subr.bf16.mxu0 0
    %4176 = vmatpush2.bf16.msra.mxu0 0
    %4177 = vmatprep.mubr.bf16.mxu0 0
    %4178 = vmatmul.mubr.bf16.gmra.mxu0 %v4140
    %v4179 = vpop.f32.mrf.mxu0
    %v4180 = vadd.f32 0.0, %v4179
    %v4181 = vpop.f32.mrf.mxu0
    %v4182 = vpop.f32.mrf.mxu0
    %v4183 = vpop.f32.mrf.mxu0
    %4184 = vdwg.mxu0
    %v4186 = vsel %vm1186, %v4087, 0
    %v4189 = vsel %vm1654, %v3623, 0
    %4191 = vmatprep.subr.bf16.mxu0 0
    %4192 = vmatpush1.bf16.msra.mxu0 0
    %4193 = vmatprep.subr.bf16.mxu0 0
    %4194 = vmatpush1.bf16.msra.mxu0 0
    %4195 = vmatprep.subr.bf16.mxu0 0
    %4196 = vmatpush1.bf16.msra.mxu0 0
    %4197 = vmatprep.subr.bf16.mxu0 0
    %4198 = vmatpush1.bf16.msra.mxu0 0
    %4199 = vmatprep.subr.bf16.mxu0 0
    %4200 = vmatpush1.bf16.msra.mxu0 0
    %4201 = vmatprep.subr.bf16.mxu0 0
    %4202 = vmatpush1.bf16.msra.mxu0 0
    %4203 = vmatprep.subr.bf16.mxu0 0
    %4204 = vmatpush1.bf16.msra.mxu0 0
    %4205 = vmatprep.subr.bf16.mxu0 0
    %4206 = vmatpush1.bf16.msra.mxu0 %v4189
    %4207 = vmatprep.subr.bf16.mxu0 0
    %4208 = vmatpush2.bf16.msra.mxu0 0
    %4209 = vmatprep.subr.bf16.mxu0 0
    %4210 = vmatpush2.bf16.msra.mxu0 0
    %4211 = vmatprep.subr.bf16.mxu0 0
    %4212 = vmatpush2.bf16.msra.mxu0 0
    %4213 = vmatprep.subr.bf16.mxu0 0
    %4214 = vmatpush2.bf16.msra.mxu0 0
    %4215 = vmatprep.subr.bf16.mxu0 0
    %4216 = vmatpush2.bf16.msra.mxu0 0
    %4217 = vmatprep.subr.bf16.mxu0 0
    %4218 = vmatpush2.bf16.msra.mxu0 0
    %4219 = vmatprep.subr.bf16.mxu0 0
    %4220 = vmatpush2.bf16.msra.mxu0 0
    %4221 = vmatprep.subr.bf16.mxu0 0
    %4222 = vmatpush2.bf16.msra.mxu0 0
    %4223 = vmatprep.mubr.bf16.mxu0 0
    %4224 = vmatmul.mubr.bf16.gmra.mxu0 %v4186
    %v4225 = vpop.f32.mrf.mxu0
    %v4226 = vadd.f32 0.0, %v4225
    %v4227 = vpop.f32.mrf.mxu0
    %v4228 = vpop.f32.mrf.mxu0
    %v4229 = vpop.f32.mrf.mxu0
    %4230 = vdwg.mxu0
    %v4232 = vsel %vm1186, %v4088, 0
    %v4235 = vsel %vm1654, %v3624, 0
    %4237 = vmatprep.subr.bf16.mxu0 0
    %4238 = vmatpush1.bf16.msra.mxu0 0
    %4239 = vmatprep.subr.bf16.mxu0 0
    %4240 = vmatpush1.bf16.msra.mxu0 0
    %4241 = vmatprep.subr.bf16.mxu0 0
    %4242 = vmatpush1.bf16.msra.mxu0 0
    %4243 = vmatprep.subr.bf16.mxu0 0
    %4244 = vmatpush1.bf16.msra.mxu0 0
    %4245 = vmatprep.subr.bf16.mxu0 0
    %4246 = vmatpush1.bf16.msra.mxu0 0
    %4247 = vmatprep.subr.bf16.mxu0 0
    %4248 = vmatpush1.bf16.msra.mxu0 0
    %4249 = vmatprep.subr.bf16.mxu0 0
    %4250 = vmatpush1.bf16.msra.mxu0 0
    %4251 = vmatprep.subr.bf16.mxu0 0
    %4252 = vmatpush1.bf16.msra.mxu0 %v4235
    %4253 = vmatprep.subr.bf16.mxu0 0
    %4254 = vmatpush2.bf16.msra.mxu0 0
    %4255 = vmatprep.subr.bf16.mxu0 0
    %4256 = vmatpush2.bf16.msra.mxu0 0
    %4257 = vmatprep.subr.bf16.mxu0 0
    %4258 = vmatpush2.bf16.msra.mxu0 0
    %4259 = vmatprep.subr.bf16.mxu0 0
    %4260 = vmatpush2.bf16.msra.mxu0 0
    %4261 = vmatprep.subr.bf16.mxu0 0
    %4262 = vmatpush2.bf16.msra.mxu0 0
    %4263 = vmatprep.subr.bf16.mxu0 0
    %4264 = vmatpush2.bf16.msra.mxu0 0
    %4265 = vmatprep.subr.bf16.mxu0 0
    %4266 = vmatpush2.bf16.msra.mxu0 0
    %4267 = vmatprep.subr.bf16.mxu0 0
    %4268 = vmatpush2.bf16.msra.mxu0 0
    %4269 = vmatprep.mubr.bf16.mxu0 0
    %4270 = vmatmul.mubr.bf16.gmra.mxu0 %v4232
    %v4271 = vpop.f32.mrf.mxu0
    %v4272 = vadd.f32 0.0, %v4271
    %v4273 = vpop.f32.mrf.mxu0
    %v4274 = vpop.f32.mrf.mxu0
    %v4275 = vpop.f32.mrf.mxu0
    %4276 = vdwg.mxu0
    %v4278 = vsel %vm1186, %v4089, 0
    %v4281 = vsel %vm1654, %v3625, 0
    %4283 = vmatprep.subr.bf16.mxu0 0
    %4284 = vmatpush1.bf16.msra.mxu0 0
    %4285 = vmatprep.subr.bf16.mxu0 0
    %4286 = vmatpush1.bf16.msra.mxu0 0
    %4287 = vmatprep.subr.bf16.mxu0 0
    %4288 = vmatpush1.bf16.msra.mxu0 0
    %4289 = vmatprep.subr.bf16.mxu0 0
    %4290 = vmatpush1.bf16.msra.mxu0 0
    %4291 = vmatprep.subr.bf16.mxu0 0
    %4292 = vmatpush1.bf16.msra.mxu0 0
    %4293 = vmatprep.subr.bf16.mxu0 0
    %4294 = vmatpush1.bf16.msra.mxu0 0
    %4295 = vmatprep.subr.bf16.mxu0 0
    %4296 = vmatpush1.bf16.msra.mxu0 0
    %4297 = vmatprep.subr.bf16.mxu0 0
    %4298 = vmatpush1.bf16.msra.mxu0 %v4281
    %4299 = vmatprep.subr.bf16.mxu0 0
    %4300 = vmatpush2.bf16.msra.mxu0 0
    %4301 = vmatprep.subr.bf16.mxu0 0
    %4302 = vmatpush2.bf16.msra.mxu0 0
    %4303 = vmatprep.subr.bf16.mxu0 0
    %4304 = vmatpush2.bf16.msra.mxu0 0
    %4305 = vmatprep.subr.bf16.mxu0 0
    %4306 = vmatpush2.bf16.msra.mxu0 0
    %4307 = vmatprep.subr.bf16.mxu0 0
    %4308 = vmatpush2.bf16.msra.mxu0 0
    %4309 = vmatprep.subr.bf16.mxu0 0
    %4310 = vmatpush2.bf16.msra.mxu0 0
    %4311 = vmatprep.subr.bf16.mxu0 0
    %4312 = vmatpush2.bf16.msra.mxu0 0
    %4313 = vmatprep.subr.bf16.mxu0 0
    %4314 = vmatpush2.bf16.msra.mxu0 0
    %4315 = vmatprep.mubr.bf16.mxu0 0
    %4316 = vmatmul.mubr.bf16.gmra.mxu0 %v4278
    %v4317 = vpop.f32.mrf.mxu0
    %v4318 = vadd.f32 0.0, %v4317
    %v4319 = vpop.f32.mrf.mxu0
    %v4320 = vpop.f32.mrf.mxu0
    %v4321 = vpop.f32.mrf.mxu0
    %4322 = vdwg.mxu0
    %v4324 = vsel %vm1186, %v4090, 0
    %v4327 = vsel %vm1654, %v3626, 0
    %4329 = vmatprep.subr.bf16.mxu0 0
    %4330 = vmatpush1.bf16.msra.mxu0 0
    %4331 = vmatprep.subr.bf16.mxu0 0
    %4332 = vmatpush1.bf16.msra.mxu0 0
    %4333 = vmatprep.subr.bf16.mxu0 0
    %4334 = vmatpush1.bf16.msra.mxu0 0
    %4335 = vmatprep.subr.bf16.mxu0 0
    %4336 = vmatpush1.bf16.msra.mxu0 0
    %4337 = vmatprep.subr.bf16.mxu0 0
    %4338 = vmatpush1.bf16.msra.mxu0 0
    %4339 = vmatprep.subr.bf16.mxu0 0
    %4340 = vmatpush1.bf16.msra.mxu0 0
    %4341 = vmatprep.subr.bf16.mxu0 0
    %4342 = vmatpush1.bf16.msra.mxu0 0
    %4343 = vmatprep.subr.bf16.mxu0 0
    %4344 = vmatpush1.bf16.msra.mxu0 %v4327
    %4345 = vmatprep.subr.bf16.mxu0 0
    %4346 = vmatpush2.bf16.msra.mxu0 0
    %4347 = vmatprep.subr.bf16.mxu0 0
    %4348 = vmatpush2.bf16.msra.mxu0 0
    %4349 = vmatprep.subr.bf16.mxu0 0
    %4350 = vmatpush2.bf16.msra.mxu0 0
    %4351 = vmatprep.subr.bf16.mxu0 0
    %4352 = vmatpush2.bf16.msra.mxu0 0
    %4353 = vmatprep.subr.bf16.mxu0 0
    %4354 = vmatpush2.bf16.msra.mxu0 0
    %4355 = vmatprep.subr.bf16.mxu0 0
    %4356 = vmatpush2.bf16.msra.mxu0 0
    %4357 = vmatprep.subr.bf16.mxu0 0
    %4358 = vmatpush2.bf16.msra.mxu0 0
    %4359 = vmatprep.subr.bf16.mxu0 0
    %4360 = vmatpush2.bf16.msra.mxu0 0
    %4361 = vmatprep.mubr.bf16.mxu0 0
    %4362 = vmatmul.mubr.bf16.gmra.mxu0 %v4324
    %v4363 = vpop.f32.mrf.mxu0
    %v4364 = vadd.f32 0.0, %v4363
    %v4365 = vpop.f32.mrf.mxu0
    %v4366 = vpop.f32.mrf.mxu0
    %v4367 = vpop.f32.mrf.mxu0
    %4368 = vdwg.mxu0
    %v4370 = vsel %vm1186, %v4091, 0
    %v4373 = vsel %vm1654, %v3627, 0
    %4375 = vmatprep.subr.bf16.mxu0 0
    %4376 = vmatpush1.bf16.msra.mxu0 0
    %4377 = vmatprep.subr.bf16.mxu0 0
    %4378 = vmatpush1.bf16.msra.mxu0 0
    %4379 = vmatprep.subr.bf16.mxu0 0
    %4380 = vmatpush1.bf16.msra.mxu0 0
    %4381 = vmatprep.subr.bf16.mxu0 0
    %4382 = vmatpush1.bf16.msra.mxu0 0
    %4383 = vmatprep.subr.bf16.mxu0 0
    %4384 = vmatpush1.bf16.msra.mxu0 0
    %4385 = vmatprep.subr.bf16.mxu0 0
    %4386 = vmatpush1.bf16.msra.mxu0 0
    %4387 = vmatprep.subr.bf16.mxu0 0
    %4388 = vmatpush1.bf16.msra.mxu0 0
    %4389 = vmatprep.subr.bf16.mxu0 0
    %4390 = vmatpush1.bf16.msra.mxu0 %v4373
    %4391 = vmatprep.subr.bf16.mxu0 0
    %4392 = vmatpush2.bf16.msra.mxu0 0
    %4393 = vmatprep.subr.bf16.mxu0 0
    %4394 = vmatpush2.bf16.msra.mxu0 0
    %4395 = vmatprep.subr.bf16.mxu0 0
    %4396 = vmatpush2.bf16.msra.mxu0 0
    %4397 = vmatprep.subr.bf16.mxu0 0
    %4398 = vmatpush2.bf16.msra.mxu0 0
    %4399 = vmatprep.subr.bf16.mxu0 0
    %4400 = vmatpush2.bf16.msra.mxu0 0
    %4401 = vmatprep.subr.bf16.mxu0 0
    %4402 = vmatpush2.bf16.msra.mxu0 0
    %4403 = vmatprep.subr.bf16.mxu0 0
    %4404 = vmatpush2.bf16.msra.mxu0 0
    %4405 = vmatprep.subr.bf16.mxu0 0
    %4406 = vmatpush2.bf16.msra.mxu0 0
    %4407 = vmatprep.mubr.bf16.mxu0 0
    %4408 = vmatmul.mubr.bf16.gmra.mxu0 %v4370
    %v4409 = vpop.f32.mrf.mxu0
    %v4410 = vadd.f32 0.0, %v4409
    %v4411 = vpop.f32.mrf.mxu0
    %v4412 = vpop.f32.mrf.mxu0
    %v4413 = vpop.f32.mrf.mxu0
    %4414 = vdwg.mxu0
    %v4416 = vsel %vm1186, %v4092, 0
    %v4419 = vsel %vm1654, %v3628, 0
    %4421 = vmatprep.subr.bf16.mxu0 0
    %4422 = vmatpush1.bf16.msra.mxu0 0
    %4423 = vmatprep.subr.bf16.mxu0 0
    %4424 = vmatpush1.bf16.msra.mxu0 0
    %4425 = vmatprep.subr.bf16.mxu0 0
    %4426 = vmatpush1.bf16.msra.mxu0 0
    %4427 = vmatprep.subr.bf16.mxu0 0
    %4428 = vmatpush1.bf16.msra.mxu0 0
    %4429 = vmatprep.subr.bf16.mxu0 0
    %4430 = vmatpush1.bf16.msra.mxu0 0
    %4431 = vmatprep.subr.bf16.mxu0 0
    %4432 = vmatpush1.bf16.msra.mxu0 0
    %4433 = vmatprep.subr.bf16.mxu0 0
    %4434 = vmatpush1.bf16.msra.mxu0 0
    %4435 = vmatprep.subr.bf16.mxu0 0
    %4436 = vmatpush1.bf16.msra.mxu0 %v4419
    %4437 = vmatprep.subr.bf16.mxu0 0
    %4438 = vmatpush2.bf16.msra.mxu0 0
    %4439 = vmatprep.subr.bf16.mxu0 0
    %4440 = vmatpush2.bf16.msra.mxu0 0
    %4441 = vmatprep.subr.bf16.mxu0 0
    %4442 = vmatpush2.bf16.msra.mxu0 0
    %4443 = vmatprep.subr.bf16.mxu0 0
    %4444 = vmatpush2.bf16.msra.mxu0 0
    %4445 = vmatprep.subr.bf16.mxu0 0
    %4446 = vmatpush2.bf16.msra.mxu0 0
    %4447 = vmatprep.subr.bf16.mxu0 0
    %4448 = vmatpush2.bf16.msra.mxu0 0
    %4449 = vmatprep.subr.bf16.mxu0 0
    %4450 = vmatpush2.bf16.msra.mxu0 0
    %4451 = vmatprep.subr.bf16.mxu0 0
    %4452 = vmatpush2.bf16.msra.mxu0 0
    %4453 = vmatprep.mubr.bf16.mxu0 0
    %4454 = vmatmul.mubr.bf16.gmra.mxu0 %v4416
    %v4455 = vpop.f32.mrf.mxu0
    %v4456 = vadd.f32 0.0, %v4455
    %v4457 = vpop.f32.mrf.mxu0
    %v4458 = vpop.f32.mrf.mxu0
    %v4459 = vpop.f32.mrf.mxu0
    %4460 = vdwg.mxu0
    %v4461 = vcombine.low %v4134, %v4318
    %v4462 = vcombine.high %v4134, %v4318
    %v4464 = vunpack.c.l.s4 1983009808
    %v4465 = vunpack.c.0.s8 %v4464
    %v4466 = vlaneseq
    %v4467 = vshrl.u32 %v4466, 7
    %v4468 = vsub.s32 %v4465, %v4467
    %v4469 = vrot.slane %v4461, %v4468
    %v4471 = vunpack.c.l.s4 1983009808
    %v4472 = vunpack.c.0.s8 %v4471
    %v4473 = vlaneseq
    %v4474 = vshrl.u32 %v4473, 7
    %v4475 = vsub.s32 %v4472, %v4474
    %v4476 = vrot.slane %v4462, %v4475
    %v4477 = vcombine.low %v4226, %v4410
    %v4478 = vcombine.high %v4226, %v4410
    %v4480 = vunpack.c.l.s4 1983009808
    %v4481 = vunpack.c.0.s8 %v4480
    %v4482 = vlaneseq
    %v4483 = vshrl.u32 %v4482, 7
    %v4484 = vsub.s32 %v4481, %v4483
    %v4485 = vrot.slane %v4477, %v4484
    %v4487 = vunpack.c.l.s4 1983009808
    %v4488 = vunpack.c.0.s8 %v4487
    %v4489 = vlaneseq
    %v4490 = vshrl.u32 %v4489, 7
    %v4491 = vsub.s32 %v4488, %v4490
    %v4492 = vrot.slane %v4478, %v4491
    %v4493 = vcombine.low %v4469, %v4485
    %v4494 = vcombine.high %v4469, %v4485
    %v4496 = vunpack.c.l.s4 1934713408
    %v4497 = vunpack.c.0.s8 %v4496
    %v4498 = vlaneseq
    %v4499 = vshrl.u32 %v4498, 7
    %v4500 = vsub.s32 %v4497, %v4499
    %v4501 = vrot.slane %v4493, %v4500
    %v4503 = vunpack.c.l.s4 1934713408
    %v4504 = vunpack.c.0.s8 %v4503
    %v4505 = vlaneseq
    %v4506 = vshrl.u32 %v4505, 7
    %v4507 = vsub.s32 %v4504, %v4506
    %v4508 = vrot.slane %v4494, %v4507
    %v4509 = vcombine.low %v4476, %v4492
    %v4510 = vcombine.high %v4476, %v4492
    %v4512 = vunpack.c.l.s4 1934713408
    %v4513 = vunpack.c.0.s8 %v4512
    %v4514 = vlaneseq
    %v4515 = vshrl.u32 %v4514, 7
    %v4516 = vsub.s32 %v4513, %v4515
    %v4517 = vrot.slane %v4509, %v4516
    %v4519 = vunpack.c.l.s4 1934713408
    %v4520 = vunpack.c.0.s8 %v4519
    %v4521 = vlaneseq
    %v4522 = vshrl.u32 %v4521, 7
    %v4523 = vsub.s32 %v4520, %v4522
    %v4524 = vrot.slane %v4510, %v4523
    %v4525 = vcombine.high %v4501, 0.0
    %v4526 = vcombine.high %v4508, 0.0
    %v4527 = vcombine.high %v4517, 0.0
    %v4528 = vcombine.high %v4524, 0.0
    %v4529 = vcombine.low %v4180, %v4364
    %v4530 = vcombine.high %v4180, %v4364
    %v4532 = vunpack.c.l.s4 1983009808
    %v4533 = vunpack.c.0.s8 %v4532
    %v4534 = vlaneseq
    %v4535 = vshrl.u32 %v4534, 7
    %v4536 = vsub.s32 %v4533, %v4535
    %v4537 = vrot.slane %v4529, %v4536
    %v4539 = vunpack.c.l.s4 1983009808
    %v4540 = vunpack.c.0.s8 %v4539
    %v4541 = vlaneseq
    %v4542 = vshrl.u32 %v4541, 7
    %v4543 = vsub.s32 %v4540, %v4542
    %v4544 = vrot.slane %v4530, %v4543
    %v4545 = vcombine.low %v4272, %v4456
    %v4546 = vcombine.high %v4272, %v4456
    %v4548 = vunpack.c.l.s4 1983009808
    %v4549 = vunpack.c.0.s8 %v4548
    %v4550 = vlaneseq
    %v4551 = vshrl.u32 %v4550, 7
    %v4552 = vsub.s32 %v4549, %v4551
    %v4553 = vrot.slane %v4545, %v4552
    %v4555 = vunpack.c.l.s4 1983009808
    %v4556 = vunpack.c.0.s8 %v4555
    %v4557 = vlaneseq
    %v4558 = vshrl.u32 %v4557, 7
    %v4559 = vsub.s32 %v4556, %v4558
    %v4560 = vrot.slane %v4546, %v4559
    %v4561 = vcombine.low %v4537, %v4553
    %v4562 = vcombine.high %v4537, %v4553
    %v4564 = vunpack.c.l.s4 1934713408
    %v4565 = vunpack.c.0.s8 %v4564
    %v4566 = vlaneseq
    %v4567 = vshrl.u32 %v4566, 7
    %v4568 = vsub.s32 %v4565, %v4567
    %v4569 = vrot.slane %v4561, %v4568
    %v4571 = vunpack.c.l.s4 1934713408
    %v4572 = vunpack.c.0.s8 %v4571
    %v4573 = vlaneseq
    %v4574 = vshrl.u32 %v4573, 7
    %v4575 = vsub.s32 %v4572, %v4574
    %v4576 = vrot.slane %v4562, %v4575
    %v4577 = vcombine.low %v4544, %v4560
    %v4578 = vcombine.high %v4544, %v4560
    %v4580 = vunpack.c.l.s4 1934713408
    %v4581 = vunpack.c.0.s8 %v4580
    %v4582 = vlaneseq
    %v4583 = vshrl.u32 %v4582, 7
    %v4584 = vsub.s32 %v4581, %v4583
    %v4585 = vrot.slane %v4577, %v4584
    %v4587 = vunpack.c.l.s4 1934713408
    %v4588 = vunpack.c.0.s8 %v4587
    %v4589 = vlaneseq
    %v4590 = vshrl.u32 %v4589, 7
    %v4591 = vsub.s32 %v4588, %v4590
    %v4592 = vrot.slane %v4578, %v4591
    %v4593 = vcombine.high %v4569, 0.0
    %v4594 = vcombine.high %v4576, 0.0
    %v4595 = vcombine.high %v4585, 0.0
    %v4596 = vcombine.high %v4592, 0.0
    %v4597 = vcombine.low %v4501, %v4508
    %v4599 = vunpack.c.l.s4 1983009808
    %v4600 = vunpack.c.0.s8 %v4599
    %v4601 = vlaneseq
    %v4602 = vshrl.u32 %v4601, 7
    %v4603 = vsub.s32 %v4600, %v4602
    %v4604 = vrot.slane %v4597, %v4603
    %v4605 = vcombine.low %v4525, %v4526
    %v4607 = vunpack.c.l.s4 1983009808
    %v4608 = vunpack.c.0.s8 %v4607
    %v4609 = vlaneseq
    %v4610 = vshrl.u32 %v4609, 7
    %v4611 = vsub.s32 %v4608, %v4610
    %v4612 = vrot.slane %v4605, %v4611
    %v4613 = vcombine.low %v4517, %v4524
    %v4615 = vunpack.c.l.s4 1983009808
    %v4616 = vunpack.c.0.s8 %v4615
    %v4617 = vlaneseq
    %v4618 = vshrl.u32 %v4617, 7
    %v4619 = vsub.s32 %v4616, %v4618
    %v4620 = vrot.slane %v4613, %v4619
    %v4621 = vcombine.low %v4527, %v4528
    %v4623 = vunpack.c.l.s4 1983009808
    %v4624 = vunpack.c.0.s8 %v4623
    %v4625 = vlaneseq
    %v4626 = vshrl.u32 %v4625, 7
    %v4627 = vsub.s32 %v4624, %v4626
    %v4628 = vrot.slane %v4621, %v4627
    %v4629 = vcombine.low %v4604, %v4612
    %v4630 = vcombine.high %v4604, %v4612
    %v4632 = vunpack.c.l.s4 1934713408
    %v4633 = vunpack.c.0.s8 %v4632
    %v4634 = vlaneseq
    %v4635 = vshrl.u32 %v4634, 7
    %v4636 = vsub.s32 %v4633, %v4635
    %v4637 = vrot.slane %v4629, %v4636
    %v4639 = vunpack.c.l.s4 1934713408
    %v4640 = vunpack.c.0.s8 %v4639
    %v4641 = vlaneseq
    %v4642 = vshrl.u32 %v4641, 7
    %v4643 = vsub.s32 %v4640, %v4642
    %v4644 = vrot.slane %v4630, %v4643
    %v4645 = vcombine.low %v4620, %v4628
    %v4646 = vcombine.high %v4620, %v4628
    %v4648 = vunpack.c.l.s4 1934713408
    %v4649 = vunpack.c.0.s8 %v4648
    %v4650 = vlaneseq
    %v4651 = vshrl.u32 %v4650, 7
    %v4652 = vsub.s32 %v4649, %v4651
    %v4653 = vrot.slane %v4645, %v4652
    %v4655 = vunpack.c.l.s4 1934713408
    %v4656 = vunpack.c.0.s8 %v4655
    %v4657 = vlaneseq
    %v4658 = vshrl.u32 %v4657, 7
    %v4659 = vsub.s32 %v4656, %v4658
    %v4660 = vrot.slane %v4646, %v4659
    %v4661 = vcombine.low %v4637, %v4653
    %v4662 = vcombine.high %v4637, %v4653
    %v4663 = vcombine.low %v4644, %v4660
    %v4664 = vcombine.high %v4644, %v4660
    %v4665 = vcombine.low %v4569, %v4576
    %v4667 = vunpack.c.l.s4 1983009808
    %v4668 = vunpack.c.0.s8 %v4667
    %v4669 = vlaneseq
    %v4670 = vshrl.u32 %v4669, 7
    %v4671 = vsub.s32 %v4668, %v4670
    %v4672 = vrot.slane %v4665, %v4671
    %v4673 = vcombine.low %v4593, %v4594
    %v4675 = vunpack.c.l.s4 1983009808
    %v4676 = vunpack.c.0.s8 %v4675
    %v4677 = vlaneseq
    %v4678 = vshrl.u32 %v4677, 7
    %v4679 = vsub.s32 %v4676, %v4678
    %v4680 = vrot.slane %v4673, %v4679
    %v4681 = vcombine.low %v4585, %v4592
    %v4683 = vunpack.c.l.s4 1983009808
    %v4684 = vunpack.c.0.s8 %v4683
    %v4685 = vlaneseq
    %v4686 = vshrl.u32 %v4685, 7
    %v4687 = vsub.s32 %v4684, %v4686
    %v4688 = vrot.slane %v4681, %v4687
    %v4689 = vcombine.low %v4595, %v4596
    %v4691 = vunpack.c.l.s4 1983009808
    %v4692 = vunpack.c.0.s8 %v4691
    %v4693 = vlaneseq
    %v4694 = vshrl.u32 %v4693, 7
    %v4695 = vsub.s32 %v4692, %v4694
    %v4696 = vrot.slane %v4689, %v4695
    %v4697 = vcombine.low %v4672, %v4680
    %v4698 = vcombine.high %v4672, %v4680
    %v4700 = vunpack.c.l.s4 1934713408
    %v4701 = vunpack.c.0.s8 %v4700
    %v4702 = vlaneseq
    %v4703 = vshrl.u32 %v4702, 7
    %v4704 = vsub.s32 %v4701, %v4703
    %v4705 = vrot.slane %v4697, %v4704
    %v4707 = vunpack.c.l.s4 1934713408
    %v4708 = vunpack.c.0.s8 %v4707
    %v4709 = vlaneseq
    %v4710 = vshrl.u32 %v4709, 7
    %v4711 = vsub.s32 %v4708, %v4710
    %v4712 = vrot.slane %v4698, %v4711
    %v4713 = vcombine.low %v4688, %v4696
    %v4714 = vcombine.high %v4688, %v4696
    %v4716 = vunpack.c.l.s4 1934713408
    %v4717 = vunpack.c.0.s8 %v4716
    %v4718 = vlaneseq
    %v4719 = vshrl.u32 %v4718, 7
    %v4720 = vsub.s32 %v4717, %v4719
    %v4721 = vrot.slane %v4713, %v4720
    %v4723 = vunpack.c.l.s4 1934713408
    %v4724 = vunpack.c.0.s8 %v4723
    %v4725 = vlaneseq
    %v4726 = vshrl.u32 %v4725, 7
    %v4727 = vsub.s32 %v4724, %v4726
    %v4728 = vrot.slane %v4714, %v4727
    %v4729 = vcombine.low %v4705, %v4721
    %v4730 = vcombine.high %v4705, %v4721
    %v4731 = vcombine.low %v4712, %v4728
    %v4732 = vcombine.high %v4712, %v4728
    %4735 = vrot.lane.b32.xlu0 %v4662, 8
    %v4736 = vpop.permute.xlu0 %4735
    %4737 = vrot.lane.b32.xlu0 %v4730, 8
    %v4738 = vpop.permute.xlu0 %4737
    %4743 = vrot.lane.b32.xlu0 %v4663, 16
    %v4744 = vpop.permute.xlu0 %4743
    %4745 = vrot.lane.b32.xlu0 %v4731, 16
    %v4746 = vpop.permute.xlu0 %4745
    %4751 = vrot.lane.b32.xlu0 %v4664, 24
    %v4752 = vpop.permute.xlu0 %4751
    %4753 = vrot.lane.b32.xlu0 %v4732, 24
    %v4754 = vpop.permute.xlu0 %4753
    %v4757 = vsel %vm1186, %v4661, %v4736
    %v4758 = vsel %vm1186, %v4729, %v4738
    %v4759 = vsel %vm2318, %v4757, %v4744
    %v4760 = vsel %vm2318, %v4758, %v4746
    %v4761 = vsel %vm2321, %v4759, %v4752
    %v4762 = vsel %vm2321, %v4760, %v4754
    %v4763 = vpack.c.bf16 %v4762, %v4761
    %v4764 = vld [vmem:[#allocation5 + $0x9] sm:$0x1]
    %v4765 = vlaneseq
    %v4766 = vshrl.u32 %v4765, 7
    %v4767 = vsub.s32 0, %v4766
    %v4768 = vrot.slane %v4764, %v4767
    %v4773 = vunpack.c.l.b16 %v2588
    %v4774 = vunpack.c.l.b16 %v2589
    %v4775 = vunpack.c.l.b16 %v2590
    %v4776 = vunpack.c.l.b16 %v2591
    %v4777 = vpack.c.b16 %v4774, %v4773
    %v4778 = vpack.c.b16 %v4776, %v4775
    %v4782 = vsel %vm162, %v4763, 0
    %4784 = vmatprep.subr.bf16.mxu0 0
    %4785 = vmatpush1.bf16.msra.mxu0 0
    %4786 = vmatprep.subr.bf16.mxu0 0
    %4787 = vmatpush1.bf16.msra.mxu0 0
    %4788 = vmatprep.subr.bf16.mxu0 0
    %4789 = vmatpush1.bf16.msra.mxu0 0
    %4790 = vmatprep.subr.bf16.mxu0 0
    %4791 = vmatpush1.bf16.msra.mxu0 0
    %4792 = vmatprep.subr.bf16.mxu0 0
    %4793 = vmatpush1.bf16.msra.mxu0 0
    %4794 = vmatprep.subr.bf16.mxu0 0
    %4795 = vmatpush1.bf16.msra.mxu0 0
    %4796 = vmatprep.subr.bf16.mxu0 0
    %4797 = vmatpush1.bf16.msra.mxu0 %v4778
    %4798 = vmatprep.subr.bf16.mxu0 0
    %4799 = vmatpush1.bf16.msra.mxu0 %v4777
    %4800 = vmatprep.subr.bf16.mxu0 0
    %4801 = vmatpush2.bf16.msra.mxu0 0
    %4802 = vmatprep.subr.bf16.mxu0 0
    %4803 = vmatpush2.bf16.msra.mxu0 0
    %4804 = vmatprep.subr.bf16.mxu0 0
    %4805 = vmatpush2.bf16.msra.mxu0 0
    %4806 = vmatprep.subr.bf16.mxu0 0
    %4807 = vmatpush2.bf16.msra.mxu0 0
    %4808 = vmatprep.subr.bf16.mxu0 0
    %4809 = vmatpush2.bf16.msra.mxu0 0
    %4810 = vmatprep.subr.bf16.mxu0 0
    %4811 = vmatpush2.bf16.msra.mxu0 0
    %4812 = vmatprep.subr.bf16.mxu0 0
    %4813 = vmatpush2.bf16.msra.mxu0 0
    %4814 = vmatprep.subr.bf16.mxu0 0
    %4815 = vmatpush2.bf16.msra.mxu0 0
    %4816 = vmatprep.mubr.bf16.mxu0 0
    %4817 = vmatmul.mubr.bf16.gmra.mxu0 %v4782
    %v4818 = vpop.f32.mrf.mxu0
    %v4819 = vadd.f32 %v4768, %v4818
    %v4820 = vpop.f32.mrf.mxu0
    %v4821 = vpop.f32.mrf.mxu0
    %v4822 = vadd.f32 %v4768, %v4821
    %v4823 = vpop.f32.mrf.mxu0
    %4824 = vdwg.mxu0
    %v4825 = vadd.f32 %v2581, %v4819
    %v4826 = vadd.f32 %v2582, %v4822
    %v4827 = vld [vmem:[#allocation5 + $0xc] sm:$0x1]
    %v4828 = vld [vmem:[#allocation5 + $0xd] sm:$0x1]
    %v4829 = vsel %vm162, %v4825, 0.0
    %4830 = vadd.xlane.f32.xlu0 %v4829
    %v4831 = vpop.xlane.xlu0 %4830
    %v4832 = vsel %vm162, %v4826, 0.0
    %4833 = vadd.xlane.f32.xlu0 %v4832
    %v4834 = vpop.xlane.xlu0 %4833
    %v4835 = vmul.f32 %v4831, %v169
    %v4836 = vmul.f32 %v4834, %v169
    %v4837 = vsub.f32 %v4825, %v4835
    %v4838 = vsub.f32 %v4826, %v4836
    %v4839 = vmul.f32 %v4837, %v4837
    %v4840 = vmul.f32 %v4838, %v4838
    %v4841 = vsel %vm162, %v4839, 0.0
    %4842 = vadd.xlane.f32.xlu0 %v4841
    %v4843 = vpop.xlane.xlu0 %4842
    %v4844 = vsel %vm162, %v4840, 0.0
    %4845 = vadd.xlane.f32.xlu0 %v4844
    %v4846 = vpop.xlane.xlu0 %4845
    %v4847 = vmul.f32 %v4843, 0.032258064
    %v4848 = vmul.f32 %v4846, 0.032258064
    %v4849 = vrsqrt.pop %v4847
    %v4850 = vmul.f32 %v4847, %v4849
    %vm4851 = vcmp.eq.f32.partialorder %v4847, inf
    %v4852 = vsel %vm4851, %v4847, %v4850
    %vm4853 = vcmp.eq.f32.partialorder %v4847, 0.0
    %v4854 = vand.u32 %v4847, 2147483648
    %v4855 = vsel %vm4853, %v4854, %v4852
    %v4856 = vrsqrt.pop %v4848
    %v4857 = vmul.f32 %v4848, %v4856
    %vm4858 = vcmp.eq.f32.partialorder %v4848, inf
    %v4859 = vsel %vm4858, %v4848, %v4857
    %vm4860 = vcmp.eq.f32.partialorder %v4848, 0.0
    %v4861 = vand.u32 %v4848, 2147483648
    %v4862 = vsel %vm4860, %v4861, %v4859
    %v4863 = vadd.f32 %v4855, 1e-06
    %v4864 = vadd.f32 %v4862, 1e-06
    %v4865 = vrcp.pop %v4863
    %v4866 = vrcp.pop %v4864
    %v4867 = vlaneseq
    %v4868 = vshrl.u32 %v4867, 7
    %v4869 = vsub.s32 0, %v4868
    %v4870 = vrot.slane %v4827, %v4869
    %v4871 = vmul.f32 %v4870, %v4837
    %v4872 = vmul.f32 %v4870, %v4838
    %v4873 = vmul.f32 %v4871, %v4865
    %v4874 = vmul.f32 %v4872, %v4866
    %v4875 = vlaneseq
    %v4876 = vshrl.u32 %v4875, 7
    %v4877 = vsub.s32 0, %v4876
    %v4878 = vrot.slane %v4828, %v4877
    %v4879 = vadd.f32 %v4873, %v4878
    %v4880 = vadd.f32 %v4874, %v4878
    %v4881 = vpack.c.bf16 %v4880, %v4879
    %v4882 = vld [vmem:[#allocation5 + $0xe] sm:$0x1]
    %v4883 = vlaneseq
    %v4884 = vshrl.u32 %v4883, 7
    %v4885 = vsub.s32 0, %v4884
    %v4886 = vrot.slane %v4882, %v4885
    %v4891 = vunpack.c.l.b16 %v2592
    %v4892 = vunpack.c.l.b16 %v2593
    %v4893 = vunpack.c.l.b16 %v2594
    %v4894 = vunpack.c.l.b16 %v2595
    %v4895 = vpack.c.b16 %v4892, %v4891
    %v4896 = vpack.c.b16 %v4894, %v4893
    %v4900 = vsel %vm162, %v4881, 0
    %4902 = vmatprep.subr.bf16.mxu0 0
    %4903 = vmatpush1.bf16.msra.mxu0 0
    %4904 = vmatprep.subr.bf16.mxu0 0
    %4905 = vmatpush1.bf16.msra.mxu0 0
    %4906 = vmatprep.subr.bf16.mxu0 0
    %4907 = vmatpush1.bf16.msra.mxu0 0
    %4908 = vmatprep.subr.bf16.mxu0 0
    %4909 = vmatpush1.bf16.msra.mxu0 0
    %4910 = vmatprep.subr.bf16.mxu0 0
    %4911 = vmatpush1.bf16.msra.mxu0 0
    %4912 = vmatprep.subr.bf16.mxu0 0
    %4913 = vmatpush1.bf16.msra.mxu0 0
    %4914 = vmatprep.subr.bf16.mxu0 0
    %4915 = vmatpush1.bf16.msra.mxu0 %v4896
    %4916 = vmatprep.subr.bf16.mxu0 0
    %4917 = vmatpush1.bf16.msra.mxu0 %v4895
    %4918 = vmatprep.subr.bf16.mxu0 0
    %4919 = vmatpush2.bf16.msra.mxu0 0
    %4920 = vmatprep.subr.bf16.mxu0 0
    %4921 = vmatpush2.bf16.msra.mxu0 0
    %4922 = vmatprep.subr.bf16.mxu0 0
    %4923 = vmatpush2.bf16.msra.mxu0 0
    %4924 = vmatprep.subr.bf16.mxu0 0
    %4925 = vmatpush2.bf16.msra.mxu0 0
    %4926 = vmatprep.subr.bf16.mxu0 0
    %4927 = vmatpush2.bf16.msra.mxu0 0
    %4928 = vmatprep.subr.bf16.mxu0 0
    %4929 = vmatpush2.bf16.msra.mxu0 0
    %4930 = vmatprep.subr.bf16.mxu0 0
    %4931 = vmatpush2.bf16.msra.mxu0 0
    %4932 = vmatprep.subr.bf16.mxu0 0
    %4933 = vmatpush2.bf16.msra.mxu0 0
    %4934 = vmatprep.mubr.bf16.mxu0 0
    %4935 = vmatmul.mubr.bf16.gmra.mxu0 %v4900
    %v4936 = vpop.f32.mrf.mxu0
    %v4937 = vadd.f32 %v4886, %v4936
    %v4938 = vpop.f32.mrf.mxu0
    %v4939 = vpop.f32.mrf.mxu0
    %v4940 = vadd.f32 %v4886, %v4939
    %v4941 = vpop.f32.mrf.mxu0
    %4942 = vdwg.mxu0
    %v4943 = vmax.f32 %v4937, 0.0
    %v4944 = vmax.f32 %v4940, 0.0
    %v4945 = vpack.c.bf16 %v4944, %v4943
    %v4946 = vld [vmem:[#allocation5 + $0xf] sm:$0x1]
    %v4947 = vlaneseq
    %v4948 = vshrl.u32 %v4947, 7
    %v4949 = vsub.s32 0, %v4948
    %v4950 = vrot.slane %v4946, %v4949
    %v4959 = vunpack.c.l.b16 %v2597
    %v4960 = vunpack.c.l.b16 %v2598
    %v4961 = vunpack.c.l.b16 %v2599
    %v4962 = vunpack.c.l.b16 %v2600
    %v4963 = vunpack.c.l.b16 %v2601
    %v4964 = vunpack.c.l.b16 %v2602
    %v4965 = vunpack.c.l.b16 %v2603
    %v4966 = vunpack.c.l.b16 %v2604
    %v4967 = vpack.c.b16 %v4960, %v4959
    %v4968 = vpack.c.b16 %v4962, %v4961
    %v4969 = vpack.c.b16 %v4964, %v4963
    %v4970 = vpack.c.b16 %v4966, %v4965
    %v4976 = vsel %vm2536, %v4945, 0
    %4978 = vmatprep.subr.bf16.mxu0 0
    %4979 = vmatpush1.bf16.msra.mxu0 0
    %4980 = vmatprep.subr.bf16.mxu0 0
    %4981 = vmatpush1.bf16.msra.mxu0 0
    %4982 = vmatprep.subr.bf16.mxu0 0
    %4983 = vmatpush1.bf16.msra.mxu0 0
    %4984 = vmatprep.subr.bf16.mxu0 0
    %4985 = vmatpush1.bf16.msra.mxu0 0
    %4986 = vmatprep.subr.bf16.mxu0 0
    %4987 = vmatpush1.bf16.msra.mxu0 %v4970
    %4988 = vmatprep.subr.bf16.mxu0 0
    %4989 = vmatpush1.bf16.msra.mxu0 %v4969
    %4990 = vmatprep.subr.bf16.mxu0 0
    %4991 = vmatpush1.bf16.msra.mxu0 %v4968
    %4992 = vmatprep.subr.bf16.mxu0 0
    %4993 = vmatpush1.bf16.msra.mxu0 %v4967
    %4994 = vmatprep.subr.bf16.mxu0 0
    %4995 = vmatpush2.bf16.msra.mxu0 0
    %4996 = vmatprep.subr.bf16.mxu0 0
    %4997 = vmatpush2.bf16.msra.mxu0 0
    %4998 = vmatprep.subr.bf16.mxu0 0
    %4999 = vmatpush2.bf16.msra.mxu0 0
    %5000 = vmatprep.subr.bf16.mxu0 0
    %5001 = vmatpush2.bf16.msra.mxu0 0
    %5002 = vmatprep.subr.bf16.mxu0 0
    %5003 = vmatpush2.bf16.msra.mxu0 0
    %5004 = vmatprep.subr.bf16.mxu0 0
    %5005 = vmatpush2.bf16.msra.mxu0 0
    %5006 = vmatprep.subr.bf16.mxu0 0
    %5007 = vmatpush2.bf16.msra.mxu0 0
    %5008 = vmatprep.subr.bf16.mxu0 0
    %5009 = vmatpush2.bf16.msra.mxu0 0
    %5010 = vmatprep.mubr.bf16.mxu0 0
    %5011 = vmatmul.mubr.bf16.gmra.mxu0 %v4976
    %v5012 = vpop.f32.mrf.mxu0
    %v5013 = vadd.f32 %v4950, %v5012
    %v5014 = vpop.f32.mrf.mxu0
    %v5015 = vpop.f32.mrf.mxu0
    %v5016 = vadd.f32 %v4950, %v5015
    %v5017 = vpop.f32.mrf.mxu0
    %5018 = vdwg.mxu0
    %v5019 = vadd.f32 %v4825, %v5013
    %v5020 = vadd.f32 %v4826, %v5016
    %v5021 = vld [vmem:[#allocation5 + $0x10] sm:$0x1]
    %v5022 = vld [vmem:[#allocation5 + $0x11] sm:$0x1]
    %v5023 = vsel %vm162, %v5019, 0.0
    %5024 = vadd.xlane.f32.xlu0 %v5023
    %v5025 = vpop.xlane.xlu0 %5024
    %v5026 = vsel %vm162, %v5020, 0.0
    %5027 = vadd.xlane.f32.xlu0 %v5026
    %v5028 = vpop.xlane.xlu0 %5027
    %v5029 = vmul.f32 %v5025, %v169
    %v5030 = vmul.f32 %v5028, %v169
    %v5031 = vsub.f32 %v5019, %v5029
    %v5032 = vsub.f32 %v5020, %v5030
    %v5033 = vmul.f32 %v5031, %v5031
    %v5034 = vmul.f32 %v5032, %v5032
    %v5035 = vsel %vm162, %v5033, 0.0
    %5036 = vadd.xlane.f32.xlu0 %v5035
    %v5037 = vpop.xlane.xlu0 %5036
    %v5038 = vsel %vm162, %v5034, 0.0
    %5039 = vadd.xlane.f32.xlu0 %v5038
    %v5040 = vpop.xlane.xlu0 %5039
    %v5041 = vmul.f32 %v5037, 0.032258064
    %v5042 = vmul.f32 %v5040, 0.032258064
    %v5043 = vrsqrt.pop %v5041
    %v5044 = vmul.f32 %v5041, %v5043
    %vm5045 = vcmp.eq.f32.partialorder %v5041, inf
    %v5046 = vsel %vm5045, %v5041, %v5044
    %vm5047 = vcmp.eq.f32.partialorder %v5041, 0.0
    %v5048 = vand.u32 %v5041, 2147483648
    %v5049 = vsel %vm5047, %v5048, %v5046
    %v5050 = vrsqrt.pop %v5042
    %v5051 = vmul.f32 %v5042, %v5050
    %vm5052 = vcmp.eq.f32.partialorder %v5042, inf
    %v5053 = vsel %vm5052, %v5042, %v5051
    %vm5054 = vcmp.eq.f32.partialorder %v5042, 0.0
    %v5055 = vand.u32 %v5042, 2147483648
    %v5056 = vsel %vm5054, %v5055, %v5053
    %v5057 = vadd.f32 %v5049, 1e-06
    %v5058 = vadd.f32 %v5056, 1e-06
    %v5059 = vrcp.pop %v5057
    %v5060 = vrcp.pop %v5058
    %v5061 = vlaneseq
    %v5062 = vshrl.u32 %v5061, 7
    %v5063 = vsub.s32 0, %v5062
    %v5064 = vrot.slane %v5021, %v5063
    %v5065 = vmul.f32 %v5064, %v5031
    %v5066 = vmul.f32 %v5064, %v5032
    %v5067 = vmul.f32 %v5065, %v5059
    %v5068 = vmul.f32 %v5066, %v5060
    %v5069 = vlaneseq
    %v5070 = vshrl.u32 %v5069, 7
    %v5071 = vsub.s32 0, %v5070
    %v5072 = vrot.slane %v5022, %v5071
    %v5073 = vadd.f32 %v5067, %v5072
    %v5074 = vadd.f32 %v5068, %v5072
    %5075 = vst.msk [vmem:[#allocation7] sm:$0xff] %vm162, %v5073
    %5076 = vst.msk [vmem:[#allocation7 + $0x8] sm:$0xff] %vm162, %v5074
    // Predicated region
    $region26: #{tpu_custom_call.1} parent=1 // pred_check
      _
    $region27: #{tpu_custom_call.1} parent=1 // pred_check_branch
      %5078 = sbr.rel (0) target = $region29
    $region28: #{tpu_custom_call.1} parent=1 // pred_region
      %s5080 = ssub.s32 256, 256
      %5081 = vsyncadd [#allocation4], %s5080
      %s5082 = sshll.u32 [#allocation7], 4
      %s5083 = int_to_ptr.vmem [resolvable:$true] %s5082
      %5088 = dma.vmem_to_hbm [thread:$0]  %s5083, 256, %s4, [#allocation4], 128, 128, 8
    $region29: #{tpu_custom_call.1} parent=1 // pred_fallthru
      _
    // Predicated region
    $region30: #{tpu_custom_call.1} parent=1 // pred_check
      _
    $region31: #{tpu_custom_call.1} parent=1 // pred_check_branch
      %5090 = sbr.rel (0) target = $region33
    $region32: #{tpu_custom_call.1} parent=1 // pred_region
      %5091 = dma.done [#allocation4], 256
    $region33: #{tpu_custom_call.1} parent=1 // pred_fallthru
      _
    %5092 = vsyncpa [#allocation3], 1
    %5093 = vsyncpa [#allocation6], 1
    %5094 = vsyncpa [#allocation4], 1

</llo_original>
